<compile_context>
chip_gen: v7x
topology: tpu7x:2x2x1
jax: 0.10.0
libtpu: 0.0.40
codegen_flags: <defaults>
</compile_context>

<pallas_src>
import functools
import math

import jax
import jax.numpy as jnp
from jax.experimental import pallas as pl
from jax.experimental.pallas import tpu as pltpu


# -----------------------------------------------------------------------------
# Kernel
# -----------------------------------------------------------------------------
def veprnn_kernel(x_ref, wih0_ref, whh0_ref, wih1_ref, whh1_ref, consts_ref,
                  fc1w_ref, fc2w_ref, out_ref, pre_ref, h0_ref, *, T, Bp, H):
    H2 = 2 * H
    H8 = 8 * H

    # One small constants tile -> one DMA; unpack with static slices.
    consts = consts_ref[...]                                    # (8, 8H)
    b0 = consts[0:1, :]                                         # layer-0 gate bias
    b1 = consts[1:2, :]                                         # layer-1 gate bias
    # Hoisted broadcasts (JAX does not CSE broadcast_in_dim inside the unrolled loops).
    gscale = jnp.broadcast_to(consts[2:3, :], (Bp, H8))
    gbeta = jnp.broadcast_to(consts[3:4, :], (Bp, H8))
    is_fwd = jnp.broadcast_to(consts[4:5, :], (Bp, H8)) > 0.5   # fwd-direction lanes
    fc1b = consts[5:6, 0:128]
    fc2b = consts[5:6, 128:192]
    fc3w = consts[5:6, 192:256]
    fc3b = consts[6:7, 0:1]

    def bi_lstm(whh, write_h0):
        """One bidirectional LSTM layer; both directions share every op.

        State layout (Bp, 2H): lanes [:H] = forward direction, lanes [H:] = backward.
        whh: (2H, 8H) block-diagonal recurrent weight, gate groups [i|f|g|o], 2H each.
        Per-step input projections are read from pre_ref (row block t = time t; fwd
        columns are valid for the fwd direction, bwd columns for the bwd direction).
        Returns (fwd hidden at t=T-1, bwd hidden at time index T-1).
        """
        h = jnp.zeros((Bp, H2), jnp.float32)
        c = jnp.zeros((Bp, H2), jnp.float32)
        hb_at_last_time = None
        # T is small & static -> full unroll.  TODO(synk): switch to
        # lax.fori_loop(..., unroll=2) with an (h, c) carry if T grows beyond ~8.
        for s in range(T):
            tf = s              # forward direction consumes time tf
            tb = T - 1 - s      # backward direction consumes time tb
            pre_f = pre_ref[tf * Bp:(tf + 1) * Bp, :]           # (Bp, 8H)
            pre_b = pre_ref[tb * Bp:(tb + 1) * Bp, :]           # (Bp, 8H)
            gin = jnp.where(is_fwd, pre_f, pre_b)               # single lane-select
            rec = jnp.dot(h, whh, preferred_element_type=jnp.float32)   # (Bp, 8H)
            gates = gin + rec
            # Single fused EUP pass: sigmoid(z)=0.5*tanh(0.5z)+0.5 (i/f/o), tanh (g).
            acts = gscale * jnp.tanh(gscale * gates) + gbeta
            i_g = acts[:, 0 * H2:1 * H2]
            f_g = acts[:, 1 * H2:2 * H2]
            g_g = acts[:, 2 * H2:3 * H2]
            o_g = acts[:, 3 * H2:4 * H2]
            c = f_g * c + i_g * g_g
            h = o_g * jnp.tanh(c)
            if write_h0:
                # Merged layer-0 output scratch: lanes [:H] fwd(t), lanes [H:] bwd(t).
                h0_ref[tf * Bp:(tf + 1) * Bp, :H] = h[:, :H]
                h0_ref[tb * Bp:(tb + 1) * Bp, H:] = h[:, H:]
            if s == 0:
                hb_at_last_time = h[:, H:]      # bwd output at time index T-1
        return h[:, :H], hb_at_last_time

    # ---- layer 0: one hoisted input projection for both directions ------------------
    pre_ref[...] = jnp.dot(x_ref[...], wih0_ref[...],
                           preferred_element_type=jnp.float32) + b0
    bi_lstm(whh0_ref[...], True)

    # ---- layer 1: one hoisted projection of the merged layer-0 outputs --------------
    pre_ref[...] = jnp.dot(h0_ref[...], wih1_ref[...],
                           preferred_element_type=jnp.float32) + b1
    hf_last, hb_last = bi_lstm(whh1_ref[...], False)

    # ---- head: fc1 -> relu -> fc2 -> relu -> fc3 -> sigmoid (dropout = identity) ----
    last = jnp.concatenate([hf_last, hb_last], axis=-1)         # (Bp, 2H) = [fwd|bwd]
    h1 = jnp.maximum(
        jnp.dot(last, fc1w_ref[...], preferred_element_type=jnp.float32) + fc1b, 0.0)
    h2 = jnp.maximum(
        jnp.dot(h1, fc2w_ref[...], preferred_element_type=jnp.float32) + fc2b, 0.0)
    # fc3 has out_features=1: VPU multiply + lane reduction (no N=1 MXU matmul).
    logits = jnp.sum(h2 * fc3w, axis=-1, keepdims=True) + fc3b
    out_ref[...] = 0.5 * (jnp.tanh(0.5 * logits) + 1.0)         # sigmoid(z)


# -----------------------------------------------------------------------------
# Wrapper
# -----------------------------------------------------------------------------
def veprnn_forward(x, packed):
    """x: (B, T, input_size) f32.  packed: tuple from pack_params()."""
    B, T, I = x.shape
    H = packed[1].shape[0] // 2                # whh0 is (2H, 8H)
    Bp = ((B + 7) // 8) * 8                    # pad batch to the f32 sublane multiple

    xp = jnp.zeros((Bp, T, I), x.dtype).at[:B].set(x)
    # Time-major flatten: row block t is the contiguous (Bp, I) slab for time t.
    x_flat = jnp.transpose(xp, (1, 0, 2)).reshape(T * Bp, I)

    vmem = pl.BlockSpec(memory_space=pltpu.MemorySpace.VMEM)
    out = pl.pallas_call(
        functools.partial(veprnn_kernel, T=T, Bp=Bp, H=H),
        out_shape=jax.ShapeDtypeStruct((Bp, 1), jnp.float32),
        in_specs=[vmem] * (1 + len(packed)),
        out_specs=vmem,
        scratch_shapes=[
            pltpu.VMEM((T * Bp, 8 * H), jnp.float32),   # staged pre0 / pre1 (reused)
            pltpu.VMEM((T * Bp, 2 * H), jnp.float32),   # merged layer-0 outputs [fwd|bwd]
        ],
    )(x_flat, *packed)
    return out[:B]


# -----------------------------------------------------------------------------
# Parameters (PyTorch-layout init) + kernel-side packing
# -----------------------------------------------------------------------------
def init_params(key, input_size, hidden_size):
    """Raw params mirroring PyTorch's default uniform init & layouts."""
    H = hidden_size
    ks = iter(jax.random.split(key, 32))

    def U(shape, bound):
        return jax.random.uniform(next(ks), shape, jnp.float32, -bound, bound)

    rb = 1.0 / math.sqrt(H)
    lstm = []   # (layer0-fwd, layer0-bwd, layer1-fwd, layer1-bwd): (w_ih, w_hh, b_ih, b_hh)
    for layer_in in (input_size, 2 * H):
        for _direction in range(2):
            lstm.append((U((4 * H, layer_in), rb), U((4 * H, H), rb),
                         U((4 * H,), rb), U((4 * H,), rb)))

    def linear(fan_in, fan_out):
        b = 1.0 / math.sqrt(fan_in)
        return U((fan_out, fan_in), b), U((fan_out,), b)

    return dict(lstm=lstm, fc1=linear(2 * H, 128), fc2=linear(128, 64),
                fc3=linear(64, 1))


def pack_params(raw):
    """Pre-transpose / reorder weights so the kernel only does aligned, dense matmuls."""
    ((w0f, wh0f, bi0f, bh0f), (w0b, wh0b, bi0b, bh0b),
     (w1f, wh1f, bi1f, bh1f), (w1b, wh1b, bi1b, bh1b)) = raw['lstm']
    H = wh0f.shape[1]
    H8 = 8 * H
    assert H8 >= 128 + 64 + 64, "constants packing needs 8H >= 256 (H >= 32)"

    def gate_interleave(cf, cb):
        # (..., 4H) fwd / bwd (PyTorch gate order i,f,g,o, each H wide)
        #   -> (..., 8H) with per-gate adjacent fwd/bwd lanes:
        #   [i_f|i_b|f_f|f_b|g_f|g_b|o_f|o_b]
        parts = []
        for k in range(4):
            parts.append(cf[..., k * H:(k + 1) * H])
            parts.append(cb[..., k * H:(k + 1) * H])
        return jnp.concatenate(parts, axis=-1)

    def gate_blockdiag(wf_t, wb_t):
        # (H, 4H) fwd / bwd W_hh^T -> (2H, 8H) block-diagonal per gate:
        # rows [:H] drive the fwd lanes of each gate, rows [H:] the bwd lanes.
        z = jnp.zeros((H, H), jnp.float32)
        blocks = []
        for k in range(4):
            top = jnp.concatenate([wf_t[:, k * H:(k + 1) * H], z], axis=1)
            bot = jnp.concatenate([z, wb_t[:, k * H:(k + 1) * H]], axis=1)
            blocks.append(jnp.concatenate([top, bot], axis=0))
        return jnp.concatenate(blocks, axis=1)

    wih0 = gate_interleave(w0f.T, w0b.T)                          # (I, 8H)
    whh0 = gate_blockdiag(wh0f.T, wh0b.T)                         # (2H, 8H)
    b0 = gate_interleave(bi0f + bh0f, bi0b + bh0b)                # (8H,)
    wih1 = gate_interleave(w1f.T, w1b.T)                          # (2H, 8H)
    whh1 = gate_blockdiag(wh1f.T, wh1b.T)                         # (2H, 8H)
    b1 = gate_interleave(bi1f + bh1f, bi1b + bh1b)                # (8H,)

    # Per-lane gate activation constants:
    #   sigmoid lanes (i,f,o): 0.5*tanh(0.5 z)+0.5 ; tanh lanes (g): 1.0*tanh(z)+0.0
    gscale = jnp.repeat(jnp.array([0.5, 0.5, 1.0, 0.5], jnp.float32), 2 * H)
    gbeta = jnp.repeat(jnp.array([0.5, 0.5, 0.0, 0.5], jnp.float32), 2 * H)
    # Forward-direction lane mask: 1.0 on the fwd half of each 2H gate group.
    fmask = jnp.tile(jnp.concatenate([jnp.ones((H,), jnp.float32),
                                      jnp.zeros((H,), jnp.float32)]), 4)

    fc1w, fc1b = raw['fc1']     # (128, 2H), (128,)
    fc2w, fc2b = raw['fc2']     # (64, 128), (64,)
    fc3w, fc3b = raw['fc3']     # (1, 64),   (1,)

    # One flat constants tile -> a single prologue DMA for all the tiny (1,N) vectors.
    consts = jnp.zeros((8, H8), jnp.float32)
    consts = consts.at[0, :].set(b0)
    consts = consts.at[1, :].set(b1)
    consts = consts.at[2, :].set(gscale)
    consts = consts.at[3, :].set(gbeta)
    consts = consts.at[4, :].set(fmask)
    consts = consts.at[5, 0:128].set(fc1b)
    consts = consts.at[5, 128:192].set(fc2b)
    consts = consts.at[5, 192:256].set(fc3w[0])
    consts = consts.at[6, 0:1].set(fc3b)

    return (wih0, whh0, wih1, whh1, consts, fc1w.T, fc2w.T)


# -----------------------------------------------------------------------------
# Pure-JAX reference (PyTorch eval semantics) for correctness checking
# -----------------------------------------------------------------------------
def ref_forward(x, raw):
    B, T, _ = x.shape
    H = raw['lstm'][0][1].shape[1]
    hp = jax.lax.Precision.HIGHEST

    def run_dir(seq, w_ih, w_hh, b_ih, b_hh, reverse):
        h = jnp.zeros((B, H), jnp.float32)
        c = jnp.zeros((B, H), jnp.float32)
        order = range(T - 1, -1, -1) if reverse else range(T)
        outs = [None] * T
        for t in order:
            g = (jnp.dot(seq[:, t, :], w_ih.T, precision=hp)
                 + jnp.dot(h, w_hh.T, precision=hp) + b_ih + b_hh)
            i = jax.nn.sigmoid(g[:, :H])
            f = jax.nn.sigmoid(g[:, H:2 * H])
            gg = jnp.tanh(g[:, 2 * H:3 * H])
            o = jax.nn.sigmoid(g[:, 3 * H:])
            c = f * c + i * gg
            h = o * jnp.tanh(c)
            outs[t] = h
        return jnp.stack(outs, axis=1)

    p0f, p0b, p1f, p1b = raw['lstm']
    o0 = jnp.concatenate([run_dir(x, *p0f, False), run_dir(x, *p0b, True)], axis=-1)
    o1 = jnp.concatenate([run_dir(o0, *p1f, False), run_dir(o0, *p1b, True)], axis=-1)
    last = o1[:, -1, :]
    fc1w, fc1b = raw['fc1']
    fc2w, fc2b = raw['fc2']
    fc3w, fc3b = raw['fc3']
    h1 = jax.nn.relu(jnp.dot(last, fc1w.T, precision=hp) + fc1b)
    h2 = jax.nn.relu(jnp.dot(h1, fc2w.T, precision=hp) + fc2b)
    return jax.nn.sigmoid(jnp.dot(h2, fc3w.T, precision=hp) + fc3b)


if __name__ == "__main__":
    # Small shapes consistent with forward(): batch=2, seq=8, input_size=16, hidden=32.
    B, T, I, H = 2, 8, 16, 32
    key = jax.random.PRNGKey(0)
    kx, kp = jax.random.split(key)
    x = jax.random.normal(kx, (B, T, I), dtype=jnp.float32)
    raw = init_params(kp, I, H)
    packed = pack_params(raw)

    out = jax.block_until_ready(veprnn_forward(x, packed))
    ref = jax.block_until_ready(ref_forward(x, raw))

    assert out.shape == (B, 1), out.shape
    assert bool(jnp.all(jnp.isfinite(out)))
    assert bool(jnp.allclose(out, ref, atol=2e-4, rtol=2e-4)), (out, ref)
    print("KERNEL_OK")
</pallas_src>

<mosaic_0001>
module attributes {stable_mosaic.version = 11 : i64} {
  func.func @veprnn_kernel(%arg0: memref<64x16xf32, #tpu.memory_space<vmem>>, %arg1: memref<16x256xf32, #tpu.memory_space<vmem>>, %arg2: memref<64x256xf32, #tpu.memory_space<vmem>>, %arg3: memref<64x256xf32, #tpu.memory_space<vmem>>, %arg4: memref<64x256xf32, #tpu.memory_space<vmem>>, %arg5: memref<8x256xf32, #tpu.memory_space<vmem>>, %arg6: memref<64x128xf32, #tpu.memory_space<vmem>>, %arg7: memref<128x64xf32, #tpu.memory_space<vmem>>, %arg8: memref<8x1xf32, #tpu.memory_space<vmem>>, %arg9: memref<64x256xf32, #tpu.memory_space<vmem>>, %arg10: memref<64x64xf32, #tpu.memory_space<vmem>>) attributes {dimension_semantics = [], scalar_prefetch = 0 : i64, scratch_operands = 2 : i64, tpu.core_type = #tpu.core_type<tc>} {
    %c0 = arith.constant 0 : index
    %c0_0 = arith.constant 0 : index
    %0 = vector.load %arg5[%c0, %c0_0] : memref<8x256xf32, #tpu.memory_space<vmem>>, vector<8x256xf32>
    %1 = vector.extract_strided_slice %0 {offsets = [0, 0], sizes = [1, 256], strides = [1, 1]} : vector<8x256xf32> to vector<1x256xf32>
    %2 = vector.extract_strided_slice %0 {offsets = [1, 0], sizes = [1, 256], strides = [1, 1]} : vector<8x256xf32> to vector<1x256xf32>
    %3 = vector.extract_strided_slice %0 {offsets = [2, 0], sizes = [1, 256], strides = [1, 1]} : vector<8x256xf32> to vector<1x256xf32>
    %4 = vector.shape_cast %3 : vector<1x256xf32> to vector<1x256xf32>
    %5 = vector.broadcast %4 : vector<1x256xf32> to vector<8x256xf32>
    %6 = vector.extract_strided_slice %0 {offsets = [3, 0], sizes = [1, 256], strides = [1, 1]} : vector<8x256xf32> to vector<1x256xf32>
    %7 = vector.shape_cast %6 : vector<1x256xf32> to vector<1x256xf32>
    %8 = vector.broadcast %7 : vector<1x256xf32> to vector<8x256xf32>
    %9 = vector.extract_strided_slice %0 {offsets = [4, 0], sizes = [1, 256], strides = [1, 1]} : vector<8x256xf32> to vector<1x256xf32>
    %10 = vector.shape_cast %9 : vector<1x256xf32> to vector<1x256xf32>
    %11 = vector.broadcast %10 : vector<1x256xf32> to vector<8x256xf32>
    %cst = arith.constant 5.000000e-01 : f32
    %12 = vector.broadcast %cst : f32 to vector<8x256xf32>
    %13 = arith.cmpf ogt, %11, %12 : vector<8x256xf32>
    %14 = vector.extract_strided_slice %0 {offsets = [5, 0], sizes = [1, 128], strides = [1, 1]} : vector<8x256xf32> to vector<1x128xf32>
    %15 = vector.extract_strided_slice %0 {offsets = [5, 128], sizes = [1, 64], strides = [1, 1]} : vector<8x256xf32> to vector<1x64xf32>
    %16 = vector.extract_strided_slice %0 {offsets = [5, 192], sizes = [1, 64], strides = [1, 1]} : vector<8x256xf32> to vector<1x64xf32>
    %17 = vector.extract_strided_slice %0 {offsets = [6, 0], sizes = [1, 1], strides = [1, 1]} : vector<8x256xf32> to vector<1x1xf32>
    %c0_1 = arith.constant 0 : index
    %c0_2 = arith.constant 0 : index
    %18 = vector.load %arg0[%c0_1, %c0_2] : memref<64x16xf32, #tpu.memory_space<vmem>>, vector<64x16xf32>
    %c0_3 = arith.constant 0 : index
    %c0_4 = arith.constant 0 : index
    %19 = vector.load %arg1[%c0_3, %c0_4] : memref<16x256xf32, #tpu.memory_space<vmem>>, vector<16x256xf32>
    %cst_5 = arith.constant dense<0.000000e+00> : vector<64x256xf32>
    %20 = tpu.matmul %18, %19, %cst_5 {dimension_numbers = #tpu.dot_dimension_numbers<[1], [0], [0], [1], [0, 0, 1, 1], [], []>} : vector<64x16xf32>, vector<16x256xf32>, vector<64x256xf32> -> vector<64x256xf32>
    %21 = vector.broadcast %1 : vector<1x256xf32> to vector<64x256xf32>
    %22 = arith.addf %20, %21 : vector<64x256xf32>
    %c0_6 = arith.constant 0 : index
    %c0_7 = arith.constant 0 : index
    %23 = vector.load %arg9[%c0_6, %c0_7] : memref<64x256xf32, #tpu.memory_space<vmem>>, vector<64x256xf32>
    tpu.vector_store %arg9[%c0_6, %c0_7], %22 {strides = array<i32>} : memref<64x256xf32, #tpu.memory_space<vmem>>, vector<64x256xf32>,
    %c0_8 = arith.constant 0 : index
    %c0_9 = arith.constant 0 : index
    %24 = vector.load %arg2[%c0_8, %c0_9] : memref<64x256xf32, #tpu.memory_space<vmem>>, vector<64x256xf32>
    %cst_10 = arith.constant 0.000000e+00 : f32
    %25 = vector.broadcast %cst_10 : f32 to vector<8x64xf32>
    %cst_11 = arith.constant 0.000000e+00 : f32
    %26 = vector.broadcast %cst_11 : f32 to vector<8x64xf32>
    %c0_12 = arith.constant 0 : index
    %c0_13 = arith.constant 0 : index
    %27 = vector.load %arg9[%c0_12, %c0_13] : memref<64x256xf32, #tpu.memory_space<vmem>>, vector<8x256xf32>
    %c56 = arith.constant 56 : index
    %c0_14 = arith.constant 0 : index
    %28 = vector.load %arg9[%c56, %c0_14] : memref<64x256xf32, #tpu.memory_space<vmem>>, vector<8x256xf32>
    %29 = arith.select %13, %27, %28 : vector<8x256xi1>, vector<8x256xf32>
    %cst_15 = arith.constant dense<0.000000e+00> : vector<8x256xf32>
    %30 = tpu.matmul %25, %24, %cst_15 {dimension_numbers = #tpu.dot_dimension_numbers<[1], [0], [0], [1], [0, 0, 1, 1], [], []>} : vector<8x64xf32>, vector<64x256xf32>, vector<8x256xf32> -> vector<8x256xf32>
    %31 = arith.addf %29, %30 : vector<8x256xf32>
    %32 = arith.mulf %5, %31 : vector<8x256xf32>
    %33 = math.tanh %32 : vector<8x256xf32>
    %34 = arith.mulf %5, %33 : vector<8x256xf32>
    %35 = arith.addf %34, %8 : vector<8x256xf32>
    %36 = vector.extract_strided_slice %35 {offsets = [0, 0], sizes = [8, 64], strides = [1, 1]} : vector<8x256xf32> to vector<8x64xf32>
    %37 = vector.extract_strided_slice %35 {offsets = [0, 64], sizes = [8, 64], strides = [1, 1]} : vector<8x256xf32> to vector<8x64xf32>
    %38 = vector.extract_strided_slice %35 {offsets = [0, 128], sizes = [8, 64], strides = [1, 1]} : vector<8x256xf32> to vector<8x64xf32>
    %39 = vector.extract_strided_slice %35 {offsets = [0, 192], sizes = [8, 64], strides = [1, 1]} : vector<8x256xf32> to vector<8x64xf32>
    %40 = arith.mulf %37, %26 : vector<8x64xf32>
    %41 = arith.mulf %36, %38 : vector<8x64xf32>
    %42 = arith.addf %40, %41 : vector<8x64xf32>
    %43 = math.tanh %42 : vector<8x64xf32>
    %44 = arith.mulf %39, %43 : vector<8x64xf32>
    %45 = vector.extract_strided_slice %44 {offsets = [0, 0], sizes = [8, 32], strides = [1, 1]} : vector<8x64xf32> to vector<8x32xf32>
    %c0_16 = arith.constant 0 : index
    %c0_17 = arith.constant 0 : index
    %46 = vector.load %arg10[%c0_16, %c0_17] : memref<64x64xf32, #tpu.memory_space<vmem>>, vector<8x32xf32>
    tpu.vector_store %arg10[%c0_16, %c0_17], %45 {strides = array<i32>} : memref<64x64xf32, #tpu.memory_space<vmem>>, vector<8x32xf32>,
    %47 = vector.extract_strided_slice %44 {offsets = [0, 32], sizes = [8, 32], strides = [1, 1]} : vector<8x64xf32> to vector<8x32xf32>
    %c56_18 = arith.constant 56 : index
    %c32 = arith.constant 32 : index
    %48 = vector.load %arg10[%c56_18, %c32] : memref<64x64xf32, #tpu.memory_space<vmem>>, vector<8x32xf32>
    tpu.vector_store %arg10[%c56_18, %c32], %47 {strides = array<i32>} : memref<64x64xf32, #tpu.memory_space<vmem>>, vector<8x32xf32>,
    %c8 = arith.constant 8 : index
    %c0_19 = arith.constant 0 : index
    %49 = vector.load %arg9[%c8, %c0_19] : memref<64x256xf32, #tpu.memory_space<vmem>>, vector<8x256xf32>
    %c48 = arith.constant 48 : index
    %c0_20 = arith.constant 0 : index
    %50 = vector.load %arg9[%c48, %c0_20] : memref<64x256xf32, #tpu.memory_space<vmem>>, vector<8x256xf32>
    %51 = arith.select %13, %49, %50 : vector<8x256xi1>, vector<8x256xf32>
    %cst_21 = arith.constant dense<0.000000e+00> : vector<8x256xf32>
    %52 = tpu.matmul %44, %24, %cst_21 {dimension_numbers = #tpu.dot_dimension_numbers<[1], [0], [0], [1], [0, 0, 1, 1], [], []>} : vector<8x64xf32>, vector<64x256xf32>, vector<8x256xf32> -> vector<8x256xf32>
    %53 = arith.addf %51, %52 : vector<8x256xf32>
    %54 = arith.mulf %5, %53 : vector<8x256xf32>
    %55 = math.tanh %54 : vector<8x256xf32>
    %56 = arith.mulf %5, %55 : vector<8x256xf32>
    %57 = arith.addf %56, %8 : vector<8x256xf32>
    %58 = vector.extract_strided_slice %57 {offsets = [0, 0], sizes = [8, 64], strides = [1, 1]} : vector<8x256xf32> to vector<8x64xf32>
    %59 = vector.extract_strided_slice %57 {offsets = [0, 64], sizes = [8, 64], strides = [1, 1]} : vector<8x256xf32> to vector<8x64xf32>
    %60 = vector.extract_strided_slice %57 {offsets = [0, 128], sizes = [8, 64], strides = [1, 1]} : vector<8x256xf32> to vector<8x64xf32>
    %61 = vector.extract_strided_slice %57 {offsets = [0, 192], sizes = [8, 64], strides = [1, 1]} : vector<8x256xf32> to vector<8x64xf32>
    %62 = arith.mulf %59, %42 : vector<8x64xf32>
    %63 = arith.mulf %58, %60 : vector<8x64xf32>
    %64 = arith.addf %62, %63 : vector<8x64xf32>
    %65 = math.tanh %64 : vector<8x64xf32>
    %66 = arith.mulf %61, %65 : vector<8x64xf32>
    %67 = vector.extract_strided_slice %66 {offsets = [0, 0], sizes = [8, 32], strides = [1, 1]} : vector<8x64xf32> to vector<8x32xf32>
    %c8_22 = arith.constant 8 : index
    %c0_23 = arith.constant 0 : index
    %68 = vector.load %arg10[%c8_22, %c0_23] : memref<64x64xf32, #tpu.memory_space<vmem>>, vector<8x32xf32>
    tpu.vector_store %arg10[%c8_22, %c0_23], %67 {strides = array<i32>} : memref<64x64xf32, #tpu.memory_space<vmem>>, vector<8x32xf32>,
    %69 = vector.extract_strided_slice %66 {offsets = [0, 32], sizes = [8, 32], strides = [1, 1]} : vector<8x64xf32> to vector<8x32xf32>
    %c48_24 = arith.constant 48 : index
    %c32_25 = arith.constant 32 : index
    %70 = vector.load %arg10[%c48_24, %c32_25] : memref<64x64xf32, #tpu.memory_space<vmem>>, vector<8x32xf32>
    tpu.vector_store %arg10[%c48_24, %c32_25], %69 {strides = array<i32>} : memref<64x64xf32, #tpu.memory_space<vmem>>, vector<8x32xf32>,
    %c16 = arith.constant 16 : index
    %c0_26 = arith.constant 0 : index
    %71 = vector.load %arg9[%c16, %c0_26] : memref<64x256xf32, #tpu.memory_space<vmem>>, vector<8x256xf32>
    %c40 = arith.constant 40 : index
    %c0_27 = arith.constant 0 : index
    %72 = vector.load %arg9[%c40, %c0_27] : memref<64x256xf32, #tpu.memory_space<vmem>>, vector<8x256xf32>
    %73 = arith.select %13, %71, %72 : vector<8x256xi1>, vector<8x256xf32>
    %cst_28 = arith.constant dense<0.000000e+00> : vector<8x256xf32>
    %74 = tpu.matmul %66, %24, %cst_28 {dimension_numbers = #tpu.dot_dimension_numbers<[1], [0], [0], [1], [0, 0, 1, 1], [], []>} : vector<8x64xf32>, vector<64x256xf32>, vector<8x256xf32> -> vector<8x256xf32>
    %75 = arith.addf %73, %74 : vector<8x256xf32>
    %76 = arith.mulf %5, %75 : vector<8x256xf32>
    %77 = math.tanh %76 : vector<8x256xf32>
    %78 = arith.mulf %5, %77 : vector<8x256xf32>
    %79 = arith.addf %78, %8 : vector<8x256xf32>
    %80 = vector.extract_strided_slice %79 {offsets = [0, 0], sizes = [8, 64], strides = [1, 1]} : vector<8x256xf32> to vector<8x64xf32>
    %81 = vector.extract_strided_slice %79 {offsets = [0, 64], sizes = [8, 64], strides = [1, 1]} : vector<8x256xf32> to vector<8x64xf32>
    %82 = vector.extract_strided_slice %79 {offsets = [0, 128], sizes = [8, 64], strides = [1, 1]} : vector<8x256xf32> to vector<8x64xf32>
    %83 = vector.extract_strided_slice %79 {offsets = [0, 192], sizes = [8, 64], strides = [1, 1]} : vector<8x256xf32> to vector<8x64xf32>
    %84 = arith.mulf %81, %64 : vector<8x64xf32>
    %85 = arith.mulf %80, %82 : vector<8x64xf32>
    %86 = arith.addf %84, %85 : vector<8x64xf32>
    %87 = math.tanh %86 : vector<8x64xf32>
    %88 = arith.mulf %83, %87 : vector<8x64xf32>
    %89 = vector.extract_strided_slice %88 {offsets = [0, 0], sizes = [8, 32], strides = [1, 1]} : vector<8x64xf32> to vector<8x32xf32>
    %c16_29 = arith.constant 16 : index
    %c0_30 = arith.constant 0 : index
    %90 = vector.load %arg10[%c16_29, %c0_30] : memref<64x64xf32, #tpu.memory_space<vmem>>, vector<8x32xf32>
    tpu.vector_store %arg10[%c16_29, %c0_30], %89 {strides = array<i32>} : memref<64x64xf32, #tpu.memory_space<vmem>>, vector<8x32xf32>,
    %91 = vector.extract_strided_slice %88 {offsets = [0, 32], sizes = [8, 32], strides = [1, 1]} : vector<8x64xf32> to vector<8x32xf32>
    %c40_31 = arith.constant 40 : index
    %c32_32 = arith.constant 32 : index
    %92 = vector.load %arg10[%c40_31, %c32_32] : memref<64x64xf32, #tpu.memory_space<vmem>>, vector<8x32xf32>
    tpu.vector_store %arg10[%c40_31, %c32_32], %91 {strides = array<i32>} : memref<64x64xf32, #tpu.memory_space<vmem>>, vector<8x32xf32>,
    %c24 = arith.constant 24 : index
    %c0_33 = arith.constant 0 : index
    %93 = vector.load %arg9[%c24, %c0_33] : memref<64x256xf32, #tpu.memory_space<vmem>>, vector<8x256xf32>
    %c32_34 = arith.constant 32 : index
    %c0_35 = arith.constant 0 : index
    %94 = vector.load %arg9[%c32_34, %c0_35] : memref<64x256xf32, #tpu.memory_space<vmem>>, vector<8x256xf32>
    %95 = arith.select %13, %93, %94 : vector<8x256xi1>, vector<8x256xf32>
    %cst_36 = arith.constant dense<0.000000e+00> : vector<8x256xf32>
    %96 = tpu.matmul %88, %24, %cst_36 {dimension_numbers = #tpu.dot_dimension_numbers<[1], [0], [0], [1], [0, 0, 1, 1], [], []>} : vector<8x64xf32>, vector<64x256xf32>, vector<8x256xf32> -> vector<8x256xf32>
    %97 = arith.addf %95, %96 : vector<8x256xf32>
    %98 = arith.mulf %5, %97 : vector<8x256xf32>
    %99 = math.tanh %98 : vector<8x256xf32>
    %100 = arith.mulf %5, %99 : vector<8x256xf32>
    %101 = arith.addf %100, %8 : vector<8x256xf32>
    %102 = vector.extract_strided_slice %101 {offsets = [0, 0], sizes = [8, 64], strides = [1, 1]} : vector<8x256xf32> to vector<8x64xf32>
    %103 = vector.extract_strided_slice %101 {offsets = [0, 64], sizes = [8, 64], strides = [1, 1]} : vector<8x256xf32> to vector<8x64xf32>
    %104 = vector.extract_strided_slice %101 {offsets = [0, 128], sizes = [8, 64], strides = [1, 1]} : vector<8x256xf32> to vector<8x64xf32>
    %105 = vector.extract_strided_slice %101 {offsets = [0, 192], sizes = [8, 64], strides = [1, 1]} : vector<8x256xf32> to vector<8x64xf32>
    %106 = arith.mulf %103, %86 : vector<8x64xf32>
    %107 = arith.mulf %102, %104 : vector<8x64xf32>
    %108 = arith.addf %106, %107 : vector<8x64xf32>
    %109 = math.tanh %108 : vector<8x64xf32>
    %110 = arith.mulf %105, %109 : vector<8x64xf32>
    %111 = vector.extract_strided_slice %110 {offsets = [0, 0], sizes = [8, 32], strides = [1, 1]} : vector<8x64xf32> to vector<8x32xf32>
    %c24_37 = arith.constant 24 : index
    %c0_38 = arith.constant 0 : index
    %112 = vector.load %arg10[%c24_37, %c0_38] : memref<64x64xf32, #tpu.memory_space<vmem>>, vector<8x32xf32>
    tpu.vector_store %arg10[%c24_37, %c0_38], %111 {strides = array<i32>} : memref<64x64xf32, #tpu.memory_space<vmem>>, vector<8x32xf32>,
    %113 = vector.extract_strided_slice %110 {offsets = [0, 32], sizes = [8, 32], strides = [1, 1]} : vector<8x64xf32> to vector<8x32xf32>
    %c32_39 = arith.constant 32 : index
    %c32_40 = arith.constant 32 : index
    %114 = vector.load %arg10[%c32_39, %c32_40] : memref<64x64xf32, #tpu.memory_space<vmem>>, vector<8x32xf32>
    tpu.vector_store %arg10[%c32_39, %c32_40], %113 {strides = array<i32>} : memref<64x64xf32, #tpu.memory_space<vmem>>, vector<8x32xf32>,
    %c32_41 = arith.constant 32 : index
    %c0_42 = arith.constant 0 : index
    %115 = vector.load %arg9[%c32_41, %c0_42] : memref<64x256xf32, #tpu.memory_space<vmem>>, vector<8x256xf32>
    %c24_43 = arith.constant 24 : index
    %c0_44 = arith.constant 0 : index
    %116 = vector.load %arg9[%c24_43, %c0_44] : memref<64x256xf32, #tpu.memory_space<vmem>>, vector<8x256xf32>
    %117 = arith.select %13, %115, %116 : vector<8x256xi1>, vector<8x256xf32>
    %cst_45 = arith.constant dense<0.000000e+00> : vector<8x256xf32>
    %118 = tpu.matmul %110, %24, %cst_45 {dimension_numbers = #tpu.dot_dimension_numbers<[1], [0], [0], [1], [0, 0, 1, 1], [], []>} : vector<8x64xf32>, vector<64x256xf32>, vector<8x256xf32> -> vector<8x256xf32>
    %119 = arith.addf %117, %118 : vector<8x256xf32>
    %120 = arith.mulf %5, %119 : vector<8x256xf32>
    %121 = math.tanh %120 : vector<8x256xf32>
    %122 = arith.mulf %5, %121 : vector<8x256xf32>
    %123 = arith.addf %122, %8 : vector<8x256xf32>
    %124 = vector.extract_strided_slice %123 {offsets = [0, 0], sizes = [8, 64], strides = [1, 1]} : vector<8x256xf32> to vector<8x64xf32>
    %125 = vector.extract_strided_slice %123 {offsets = [0, 64], sizes = [8, 64], strides = [1, 1]} : vector<8x256xf32> to vector<8x64xf32>
    %126 = vector.extract_strided_slice %123 {offsets = [0, 128], sizes = [8, 64], strides = [1, 1]} : vector<8x256xf32> to vector<8x64xf32>
    %127 = vector.extract_strided_slice %123 {offsets = [0, 192], sizes = [8, 64], strides = [1, 1]} : vector<8x256xf32> to vector<8x64xf32>
    %128 = arith.mulf %125, %108 : vector<8x64xf32>
    %129 = arith.mulf %124, %126 : vector<8x64xf32>
    %130 = arith.addf %128, %129 : vector<8x64xf32>
    %131 = math.tanh %130 : vector<8x64xf32>
    %132 = arith.mulf %127, %131 : vector<8x64xf32>
    %133 = vector.extract_strided_slice %132 {offsets = [0, 0], sizes = [8, 32], strides = [1, 1]} : vector<8x64xf32> to vector<8x32xf32>
    %c32_46 = arith.constant 32 : index
    %c0_47 = arith.constant 0 : index
    %134 = vector.load %arg10[%c32_46, %c0_47] : memref<64x64xf32, #tpu.memory_space<vmem>>, vector<8x32xf32>
    tpu.vector_store %arg10[%c32_46, %c0_47], %133 {strides = array<i32>} : memref<64x64xf32, #tpu.memory_space<vmem>>, vector<8x32xf32>,
    %135 = vector.extract_strided_slice %132 {offsets = [0, 32], sizes = [8, 32], strides = [1, 1]} : vector<8x64xf32> to vector<8x32xf32>
    %c24_48 = arith.constant 24 : index
    %c32_49 = arith.constant 32 : index
    %136 = vector.load %arg10[%c24_48, %c32_49] : memref<64x64xf32, #tpu.memory_space<vmem>>, vector<8x32xf32>
    tpu.vector_store %arg10[%c24_48, %c32_49], %135 {strides = array<i32>} : memref<64x64xf32, #tpu.memory_space<vmem>>, vector<8x32xf32>,
    %c40_50 = arith.constant 40 : index
    %c0_51 = arith.constant 0 : index
    %137 = vector.load %arg9[%c40_50, %c0_51] : memref<64x256xf32, #tpu.memory_space<vmem>>, vector<8x256xf32>
    %c16_52 = arith.constant 16 : index
    %c0_53 = arith.constant 0 : index
    %138 = vector.load %arg9[%c16_52, %c0_53] : memref<64x256xf32, #tpu.memory_space<vmem>>, vector<8x256xf32>
    %139 = arith.select %13, %137, %138 : vector<8x256xi1>, vector<8x256xf32>
    %cst_54 = arith.constant dense<0.000000e+00> : vector<8x256xf32>
    %140 = tpu.matmul %132, %24, %cst_54 {dimension_numbers = #tpu.dot_dimension_numbers<[1], [0], [0], [1], [0, 0, 1, 1], [], []>} : vector<8x64xf32>, vector<64x256xf32>, vector<8x256xf32> -> vector<8x256xf32>
    %141 = arith.addf %139, %140 : vector<8x256xf32>
    %142 = arith.mulf %5, %141 : vector<8x256xf32>
    %143 = math.tanh %142 : vector<8x256xf32>
    %144 = arith.mulf %5, %143 : vector<8x256xf32>
    %145 = arith.addf %144, %8 : vector<8x256xf32>
    %146 = vector.extract_strided_slice %145 {offsets = [0, 0], sizes = [8, 64], strides = [1, 1]} : vector<8x256xf32> to vector<8x64xf32>
    %147 = vector.extract_strided_slice %145 {offsets = [0, 64], sizes = [8, 64], strides = [1, 1]} : vector<8x256xf32> to vector<8x64xf32>
    %148 = vector.extract_strided_slice %145 {offsets = [0, 128], sizes = [8, 64], strides = [1, 1]} : vector<8x256xf32> to vector<8x64xf32>
    %149 = vector.extract_strided_slice %145 {offsets = [0, 192], sizes = [8, 64], strides = [1, 1]} : vector<8x256xf32> to vector<8x64xf32>
    %150 = arith.mulf %147, %130 : vector<8x64xf32>
    %151 = arith.mulf %146, %148 : vector<8x64xf32>
    %152 = arith.addf %150, %151 : vector<8x64xf32>
    %153 = math.tanh %152 : vector<8x64xf32>
    %154 = arith.mulf %149, %153 : vector<8x64xf32>
    %155 = vector.extract_strided_slice %154 {offsets = [0, 0], sizes = [8, 32], strides = [1, 1]} : vector<8x64xf32> to vector<8x32xf32>
    %c40_55 = arith.constant 40 : index
    %c0_56 = arith.constant 0 : index
    %156 = vector.load %arg10[%c40_55, %c0_56] : memref<64x64xf32, #tpu.memory_space<vmem>>, vector<8x32xf32>
    tpu.vector_store %arg10[%c40_55, %c0_56], %155 {strides = array<i32>} : memref<64x64xf32, #tpu.memory_space<vmem>>, vector<8x32xf32>,
    %157 = vector.extract_strided_slice %154 {offsets = [0, 32], sizes = [8, 32], strides = [1, 1]} : vector<8x64xf32> to vector<8x32xf32>
    %c16_57 = arith.constant 16 : index
    %c32_58 = arith.constant 32 : index
    %158 = vector.load %arg10[%c16_57, %c32_58] : memref<64x64xf32, #tpu.memory_space<vmem>>, vector<8x32xf32>
    tpu.vector_store %arg10[%c16_57, %c32_58], %157 {strides = array<i32>} : memref<64x64xf32, #tpu.memory_space<vmem>>, vector<8x32xf32>,
    %c48_59 = arith.constant 48 : index
    %c0_60 = arith.constant 0 : index
    %159 = vector.load %arg9[%c48_59, %c0_60] : memref<64x256xf32, #tpu.memory_space<vmem>>, vector<8x256xf32>
    %c8_61 = arith.constant 8 : index
    %c0_62 = arith.constant 0 : index
    %160 = vector.load %arg9[%c8_61, %c0_62] : memref<64x256xf32, #tpu.memory_space<vmem>>, vector<8x256xf32>
    %161 = arith.select %13, %159, %160 : vector<8x256xi1>, vector<8x256xf32>
    %cst_63 = arith.constant dense<0.000000e+00> : vector<8x256xf32>
    %162 = tpu.matmul %154, %24, %cst_63 {dimension_numbers = #tpu.dot_dimension_numbers<[1], [0], [0], [1], [0, 0, 1, 1], [], []>} : vector<8x64xf32>, vector<64x256xf32>, vector<8x256xf32> -> vector<8x256xf32>
    %163 = arith.addf %161, %162 : vector<8x256xf32>
    %164 = arith.mulf %5, %163 : vector<8x256xf32>
    %165 = math.tanh %164 : vector<8x256xf32>
    %166 = arith.mulf %5, %165 : vector<8x256xf32>
    %167 = arith.addf %166, %8 : vector<8x256xf32>
    %168 = vector.extract_strided_slice %167 {offsets = [0, 0], sizes = [8, 64], strides = [1, 1]} : vector<8x256xf32> to vector<8x64xf32>
    %169 = vector.extract_strided_slice %167 {offsets = [0, 64], sizes = [8, 64], strides = [1, 1]} : vector<8x256xf32> to vector<8x64xf32>
    %170 = vector.extract_strided_slice %167 {offsets = [0, 128], sizes = [8, 64], strides = [1, 1]} : vector<8x256xf32> to vector<8x64xf32>
    %171 = vector.extract_strided_slice %167 {offsets = [0, 192], sizes = [8, 64], strides = [1, 1]} : vector<8x256xf32> to vector<8x64xf32>
    %172 = arith.mulf %169, %152 : vector<8x64xf32>
    %173 = arith.mulf %168, %170 : vector<8x64xf32>
    %174 = arith.addf %172, %173 : vector<8x64xf32>
    %175 = math.tanh %174 : vector<8x64xf32>
    %176 = arith.mulf %171, %175 : vector<8x64xf32>
    %177 = vector.extract_strided_slice %176 {offsets = [0, 0], sizes = [8, 32], strides = [1, 1]} : vector<8x64xf32> to vector<8x32xf32>
    %c48_64 = arith.constant 48 : index
    %c0_65 = arith.constant 0 : index
    %178 = vector.load %arg10[%c48_64, %c0_65] : memref<64x64xf32, #tpu.memory_space<vmem>>, vector<8x32xf32>
    tpu.vector_store %arg10[%c48_64, %c0_65], %177 {strides = array<i32>} : memref<64x64xf32, #tpu.memory_space<vmem>>, vector<8x32xf32>,
    %179 = vector.extract_strided_slice %176 {offsets = [0, 32], sizes = [8, 32], strides = [1, 1]} : vector<8x64xf32> to vector<8x32xf32>
    %c8_66 = arith.constant 8 : index
    %c32_67 = arith.constant 32 : index
    %180 = vector.load %arg10[%c8_66, %c32_67] : memref<64x64xf32, #tpu.memory_space<vmem>>, vector<8x32xf32>
    tpu.vector_store %arg10[%c8_66, %c32_67], %179 {strides = array<i32>} : memref<64x64xf32, #tpu.memory_space<vmem>>, vector<8x32xf32>,
    %c56_68 = arith.constant 56 : index
    %c0_69 = arith.constant 0 : index
    %181 = vector.load %arg9[%c56_68, %c0_69] : memref<64x256xf32, #tpu.memory_space<vmem>>, vector<8x256xf32>
    %c0_70 = arith.constant 0 : index
    %c0_71 = arith.constant 0 : index
    %182 = vector.load %arg9[%c0_70, %c0_71] : memref<64x256xf32, #tpu.memory_space<vmem>>, vector<8x256xf32>
    %183 = arith.select %13, %181, %182 : vector<8x256xi1>, vector<8x256xf32>
    %cst_72 = arith.constant dense<0.000000e+00> : vector<8x256xf32>
    %184 = tpu.matmul %176, %24, %cst_72 {dimension_numbers = #tpu.dot_dimension_numbers<[1], [0], [0], [1], [0, 0, 1, 1], [], []>} : vector<8x64xf32>, vector<64x256xf32>, vector<8x256xf32> -> vector<8x256xf32>
    %185 = arith.addf %183, %184 : vector<8x256xf32>
    %186 = arith.mulf %5, %185 : vector<8x256xf32>
    %187 = math.tanh %186 : vector<8x256xf32>
    %188 = arith.mulf %5, %187 : vector<8x256xf32>
    %189 = arith.addf %188, %8 : vector<8x256xf32>
    %190 = vector.extract_strided_slice %189 {offsets = [0, 0], sizes = [8, 64], strides = [1, 1]} : vector<8x256xf32> to vector<8x64xf32>
    %191 = vector.extract_strided_slice %189 {offsets = [0, 64], sizes = [8, 64], strides = [1, 1]} : vector<8x256xf32> to vector<8x64xf32>
    %192 = vector.extract_strided_slice %189 {offsets = [0, 128], sizes = [8, 64], strides = [1, 1]} : vector<8x256xf32> to vector<8x64xf32>
    %193 = vector.extract_strided_slice %189 {offsets = [0, 192], sizes = [8, 64], strides = [1, 1]} : vector<8x256xf32> to vector<8x64xf32>
    %194 = arith.mulf %191, %174 : vector<8x64xf32>
    %195 = arith.mulf %190, %192 : vector<8x64xf32>
    %196 = arith.addf %194, %195 : vector<8x64xf32>
    %197 = math.tanh %196 : vector<8x64xf32>
    %198 = arith.mulf %193, %197 : vector<8x64xf32>
    %199 = vector.extract_strided_slice %198 {offsets = [0, 0], sizes = [8, 32], strides = [1, 1]} : vector<8x64xf32> to vector<8x32xf32>
    %c56_73 = arith.constant 56 : index
    %c0_74 = arith.constant 0 : index
    %200 = vector.load %arg10[%c56_73, %c0_74] : memref<64x64xf32, #tpu.memory_space<vmem>>, vector<8x32xf32>
    tpu.vector_store %arg10[%c56_73, %c0_74], %199 {strides = array<i32>} : memref<64x64xf32, #tpu.memory_space<vmem>>, vector<8x32xf32>,
    %201 = vector.extract_strided_slice %198 {offsets = [0, 32], sizes = [8, 32], strides = [1, 1]} : vector<8x64xf32> to vector<8x32xf32>
    %c0_75 = arith.constant 0 : index
    %c32_76 = arith.constant 32 : index
    %202 = vector.load %arg10[%c0_75, %c32_76] : memref<64x64xf32, #tpu.memory_space<vmem>>, vector<8x32xf32>
    tpu.vector_store %arg10[%c0_75, %c32_76], %201 {strides = array<i32>} : memref<64x64xf32, #tpu.memory_space<vmem>>, vector<8x32xf32>,
    %c0_77 = arith.constant 0 : index
    %c0_78 = arith.constant 0 : index
    %203 = vector.load %arg10[%c0_77, %c0_78] : memref<64x64xf32, #tpu.memory_space<vmem>>, vector<64x64xf32>
    %c0_79 = arith.constant 0 : index
    %c0_80 = arith.constant 0 : index
    %204 = vector.load %arg3[%c0_79, %c0_80] : memref<64x256xf32, #tpu.memory_space<vmem>>, vector<64x256xf32>
    %cst_81 = arith.constant dense<0.000000e+00> : vector<64x256xf32>
    %205 = tpu.matmul %203, %204, %cst_81 {dimension_numbers = #tpu.dot_dimension_numbers<[1], [0], [0], [1], [0, 0, 1, 1], [], []>} : vector<64x64xf32>, vector<64x256xf32>, vector<64x256xf32> -> vector<64x256xf32>
    %206 = vector.broadcast %2 : vector<1x256xf32> to vector<64x256xf32>
    %207 = arith.addf %205, %206 : vector<64x256xf32>
    %c0_82 = arith.constant 0 : index
    %c0_83 = arith.constant 0 : index
    %208 = vector.load %arg9[%c0_82, %c0_83] : memref<64x256xf32, #tpu.memory_space<vmem>>, vector<64x256xf32>
    tpu.vector_store %arg9[%c0_82, %c0_83], %207 {strides = array<i32>} : memref<64x256xf32, #tpu.memory_space<vmem>>, vector<64x256xf32>,
    %c0_84 = arith.constant 0 : index
    %c0_85 = arith.constant 0 : index
    %209 = vector.load %arg4[%c0_84, %c0_85] : memref<64x256xf32, #tpu.memory_space<vmem>>, vector<64x256xf32>
    %cst_86 = arith.constant 0.000000e+00 : f32
    %210 = vector.broadcast %cst_86 : f32 to vector<8x64xf32>
    %cst_87 = arith.constant 0.000000e+00 : f32
    %211 = vector.broadcast %cst_87 : f32 to vector<8x64xf32>
    %c0_88 = arith.constant 0 : index
    %c0_89 = arith.constant 0 : index
    %212 = vector.load %arg9[%c0_88, %c0_89] : memref<64x256xf32, #tpu.memory_space<vmem>>, vector<8x256xf32>
    %c56_90 = arith.constant 56 : index
    %c0_91 = arith.constant 0 : index
    %213 = vector.load %arg9[%c56_90, %c0_91] : memref<64x256xf32, #tpu.memory_space<vmem>>, vector<8x256xf32>
    %214 = arith.select %13, %212, %213 : vector<8x256xi1>, vector<8x256xf32>
    %cst_92 = arith.constant dense<0.000000e+00> : vector<8x256xf32>
    %215 = tpu.matmul %210, %209, %cst_92 {dimension_numbers = #tpu.dot_dimension_numbers<[1], [0], [0], [1], [0, 0, 1, 1], [], []>} : vector<8x64xf32>, vector<64x256xf32>, vector<8x256xf32> -> vector<8x256xf32>
    %216 = arith.addf %214, %215 : vector<8x256xf32>
    %217 = arith.mulf %5, %216 : vector<8x256xf32>
    %218 = math.tanh %217 : vector<8x256xf32>
    %219 = arith.mulf %5, %218 : vector<8x256xf32>
    %220 = arith.addf %219, %8 : vector<8x256xf32>
    %221 = vector.extract_strided_slice %220 {offsets = [0, 0], sizes = [8, 64], strides = [1, 1]} : vector<8x256xf32> to vector<8x64xf32>
    %222 = vector.extract_strided_slice %220 {offsets = [0, 64], sizes = [8, 64], strides = [1, 1]} : vector<8x256xf32> to vector<8x64xf32>
    %223 = vector.extract_strided_slice %220 {offsets = [0, 128], sizes = [8, 64], strides = [1, 1]} : vector<8x256xf32> to vector<8x64xf32>
    %224 = vector.extract_strided_slice %220 {offsets = [0, 192], sizes = [8, 64], strides = [1, 1]} : vector<8x256xf32> to vector<8x64xf32>
    %225 = arith.mulf %222, %211 : vector<8x64xf32>
    %226 = arith.mulf %221, %223 : vector<8x64xf32>
    %227 = arith.addf %225, %226 : vector<8x64xf32>
    %228 = math.tanh %227 : vector<8x64xf32>
    %229 = arith.mulf %224, %228 : vector<8x64xf32>
    %230 = vector.extract_strided_slice %229 {offsets = [0, 32], sizes = [8, 32], strides = [1, 1]} : vector<8x64xf32> to vector<8x32xf32>
    %c8_93 = arith.constant 8 : index
    %c0_94 = arith.constant 0 : index
    %231 = vector.load %arg9[%c8_93, %c0_94] : memref<64x256xf32, #tpu.memory_space<vmem>>, vector<8x256xf32>
    %c48_95 = arith.constant 48 : index
    %c0_96 = arith.constant 0 : index
    %232 = vector.load %arg9[%c48_95, %c0_96] : memref<64x256xf32, #tpu.memory_space<vmem>>, vector<8x256xf32>
    %233 = arith.select %13, %231, %232 : vector<8x256xi1>, vector<8x256xf32>
    %cst_97 = arith.constant dense<0.000000e+00> : vector<8x256xf32>
    %234 = tpu.matmul %229, %209, %cst_97 {dimension_numbers = #tpu.dot_dimension_numbers<[1], [0], [0], [1], [0, 0, 1, 1], [], []>} : vector<8x64xf32>, vector<64x256xf32>, vector<8x256xf32> -> vector<8x256xf32>
    %235 = arith.addf %233, %234 : vector<8x256xf32>
    %236 = arith.mulf %5, %235 : vector<8x256xf32>
    %237 = math.tanh %236 : vector<8x256xf32>
    %238 = arith.mulf %5, %237 : vector<8x256xf32>
    %239 = arith.addf %238, %8 : vector<8x256xf32>
    %240 = vector.extract_strided_slice %239 {offsets = [0, 0], sizes = [8, 64], strides = [1, 1]} : vector<8x256xf32> to vector<8x64xf32>
    %241 = vector.extract_strided_slice %239 {offsets = [0, 64], sizes = [8, 64], strides = [1, 1]} : vector<8x256xf32> to vector<8x64xf32>
    %242 = vector.extract_strided_slice %239 {offsets = [0, 128], sizes = [8, 64], strides = [1, 1]} : vector<8x256xf32> to vector<8x64xf32>
    %243 = vector.extract_strided_slice %239 {offsets = [0, 192], sizes = [8, 64], strides = [1, 1]} : vector<8x256xf32> to vector<8x64xf32>
    %244 = arith.mulf %241, %227 : vector<8x64xf32>
    %245 = arith.mulf %240, %242 : vector<8x64xf32>
    %246 = arith.addf %244, %245 : vector<8x64xf32>
    %247 = math.tanh %246 : vector<8x64xf32>
    %248 = arith.mulf %243, %247 : vector<8x64xf32>
    %c16_98 = arith.constant 16 : index
    %c0_99 = arith.constant 0 : index
    %249 = vector.load %arg9[%c16_98, %c0_99] : memref<64x256xf32, #tpu.memory_space<vmem>>, vector<8x256xf32>
    %c40_100 = arith.constant 40 : index
    %c0_101 = arith.constant 0 : index
    %250 = vector.load %arg9[%c40_100, %c0_101] : memref<64x256xf32, #tpu.memory_space<vmem>>, vector<8x256xf32>
    %251 = arith.select %13, %249, %250 : vector<8x256xi1>, vector<8x256xf32>
    %cst_102 = arith.constant dense<0.000000e+00> : vector<8x256xf32>
    %252 = tpu.matmul %248, %209, %cst_102 {dimension_numbers = #tpu.dot_dimension_numbers<[1], [0], [0], [1], [0, 0, 1, 1], [], []>} : vector<8x64xf32>, vector<64x256xf32>, vector<8x256xf32> -> vector<8x256xf32>
    %253 = arith.addf %251, %252 : vector<8x256xf32>
    %254 = arith.mulf %5, %253 : vector<8x256xf32>
    %255 = math.tanh %254 : vector<8x256xf32>
    %256 = arith.mulf %5, %255 : vector<8x256xf32>
    %257 = arith.addf %256, %8 : vector<8x256xf32>
    %258 = vector.extract_strided_slice %257 {offsets = [0, 0], sizes = [8, 64], strides = [1, 1]} : vector<8x256xf32> to vector<8x64xf32>
    %259 = vector.extract_strided_slice %257 {offsets = [0, 64], sizes = [8, 64], strides = [1, 1]} : vector<8x256xf32> to vector<8x64xf32>
    %260 = vector.extract_strided_slice %257 {offsets = [0, 128], sizes = [8, 64], strides = [1, 1]} : vector<8x256xf32> to vector<8x64xf32>
    %261 = vector.extract_strided_slice %257 {offsets = [0, 192], sizes = [8, 64], strides = [1, 1]} : vector<8x256xf32> to vector<8x64xf32>
    %262 = arith.mulf %259, %246 : vector<8x64xf32>
    %263 = arith.mulf %258, %260 : vector<8x64xf32>
    %264 = arith.addf %262, %263 : vector<8x64xf32>
    %265 = math.tanh %264 : vector<8x64xf32>
    %266 = arith.mulf %261, %265 : vector<8x64xf32>
    %c24_103 = arith.constant 24 : index
    %c0_104 = arith.constant 0 : index
    %267 = vector.load %arg9[%c24_103, %c0_104] : memref<64x256xf32, #tpu.memory_space<vmem>>, vector<8x256xf32>
    %c32_105 = arith.constant 32 : index
    %c0_106 = arith.constant 0 : index
    %268 = vector.load %arg9[%c32_105, %c0_106] : memref<64x256xf32, #tpu.memory_space<vmem>>, vector<8x256xf32>
    %269 = arith.select %13, %267, %268 : vector<8x256xi1>, vector<8x256xf32>
    %cst_107 = arith.constant dense<0.000000e+00> : vector<8x256xf32>
    %270 = tpu.matmul %266, %209, %cst_107 {dimension_numbers = #tpu.dot_dimension_numbers<[1], [0], [0], [1], [0, 0, 1, 1], [], []>} : vector<8x64xf32>, vector<64x256xf32>, vector<8x256xf32> -> vector<8x256xf32>
    %271 = arith.addf %269, %270 : vector<8x256xf32>
    %272 = arith.mulf %5, %271 : vector<8x256xf32>
    %273 = math.tanh %272 : vector<8x256xf32>
    %274 = arith.mulf %5, %273 : vector<8x256xf32>
    %275 = arith.addf %274, %8 : vector<8x256xf32>
    %276 = vector.extract_strided_slice %275 {offsets = [0, 0], sizes = [8, 64], strides = [1, 1]} : vector<8x256xf32> to vector<8x64xf32>
    %277 = vector.extract_strided_slice %275 {offsets = [0, 64], sizes = [8, 64], strides = [1, 1]} : vector<8x256xf32> to vector<8x64xf32>
    %278 = vector.extract_strided_slice %275 {offsets = [0, 128], sizes = [8, 64], strides = [1, 1]} : vector<8x256xf32> to vector<8x64xf32>
    %279 = vector.extract_strided_slice %275 {offsets = [0, 192], sizes = [8, 64], strides = [1, 1]} : vector<8x256xf32> to vector<8x64xf32>
    %280 = arith.mulf %277, %264 : vector<8x64xf32>
    %281 = arith.mulf %276, %278 : vector<8x64xf32>
    %282 = arith.addf %280, %281 : vector<8x64xf32>
    %283 = math.tanh %282 : vector<8x64xf32>
    %284 = arith.mulf %279, %283 : vector<8x64xf32>
    %c32_108 = arith.constant 32 : index
    %c0_109 = arith.constant 0 : index
    %285 = vector.load %arg9[%c32_108, %c0_109] : memref<64x256xf32, #tpu.memory_space<vmem>>, vector<8x256xf32>
    %c24_110 = arith.constant 24 : index
    %c0_111 = arith.constant 0 : index
    %286 = vector.load %arg9[%c24_110, %c0_111] : memref<64x256xf32, #tpu.memory_space<vmem>>, vector<8x256xf32>
    %287 = arith.select %13, %285, %286 : vector<8x256xi1>, vector<8x256xf32>
    %cst_112 = arith.constant dense<0.000000e+00> : vector<8x256xf32>
    %288 = tpu.matmul %284, %209, %cst_112 {dimension_numbers = #tpu.dot_dimension_numbers<[1], [0], [0], [1], [0, 0, 1, 1], [], []>} : vector<8x64xf32>, vector<64x256xf32>, vector<8x256xf32> -> vector<8x256xf32>
    %289 = arith.addf %287, %288 : vector<8x256xf32>
    %290 = arith.mulf %5, %289 : vector<8x256xf32>
    %291 = math.tanh %290 : vector<8x256xf32>
    %292 = arith.mulf %5, %291 : vector<8x256xf32>
    %293 = arith.addf %292, %8 : vector<8x256xf32>
    %294 = vector.extract_strided_slice %293 {offsets = [0, 0], sizes = [8, 64], strides = [1, 1]} : vector<8x256xf32> to vector<8x64xf32>
    %295 = vector.extract_strided_slice %293 {offsets = [0, 64], sizes = [8, 64], strides = [1, 1]} : vector<8x256xf32> to vector<8x64xf32>
    %296 = vector.extract_strided_slice %293 {offsets = [0, 128], sizes = [8, 64], strides = [1, 1]} : vector<8x256xf32> to vector<8x64xf32>
    %297 = vector.extract_strided_slice %293 {offsets = [0, 192], sizes = [8, 64], strides = [1, 1]} : vector<8x256xf32> to vector<8x64xf32>
    %298 = arith.mulf %295, %282 : vector<8x64xf32>
    %299 = arith.mulf %294, %296 : vector<8x64xf32>
    %300 = arith.addf %298, %299 : vector<8x64xf32>
    %301 = math.tanh %300 : vector<8x64xf32>
    %302 = arith.mulf %297, %301 : vector<8x64xf32>
    %c40_113 = arith.constant 40 : index
    %c0_114 = arith.constant 0 : index
    %303 = vector.load %arg9[%c40_113, %c0_114] : memref<64x256xf32, #tpu.memory_space<vmem>>, vector<8x256xf32>
    %c16_115 = arith.constant 16 : index
    %c0_116 = arith.constant 0 : index
    %304 = vector.load %arg9[%c16_115, %c0_116] : memref<64x256xf32, #tpu.memory_space<vmem>>, vector<8x256xf32>
    %305 = arith.select %13, %303, %304 : vector<8x256xi1>, vector<8x256xf32>
    %cst_117 = arith.constant dense<0.000000e+00> : vector<8x256xf32>
    %306 = tpu.matmul %302, %209, %cst_117 {dimension_numbers = #tpu.dot_dimension_numbers<[1], [0], [0], [1], [0, 0, 1, 1], [], []>} : vector<8x64xf32>, vector<64x256xf32>, vector<8x256xf32> -> vector<8x256xf32>
    %307 = arith.addf %305, %306 : vector<8x256xf32>
    %308 = arith.mulf %5, %307 : vector<8x256xf32>
    %309 = math.tanh %308 : vector<8x256xf32>
    %310 = arith.mulf %5, %309 : vector<8x256xf32>
    %311 = arith.addf %310, %8 : vector<8x256xf32>
    %312 = vector.extract_strided_slice %311 {offsets = [0, 0], sizes = [8, 64], strides = [1, 1]} : vector<8x256xf32> to vector<8x64xf32>
    %313 = vector.extract_strided_slice %311 {offsets = [0, 64], sizes = [8, 64], strides = [1, 1]} : vector<8x256xf32> to vector<8x64xf32>
    %314 = vector.extract_strided_slice %311 {offsets = [0, 128], sizes = [8, 64], strides = [1, 1]} : vector<8x256xf32> to vector<8x64xf32>
    %315 = vector.extract_strided_slice %311 {offsets = [0, 192], sizes = [8, 64], strides = [1, 1]} : vector<8x256xf32> to vector<8x64xf32>
    %316 = arith.mulf %313, %300 : vector<8x64xf32>
    %317 = arith.mulf %312, %314 : vector<8x64xf32>
    %318 = arith.addf %316, %317 : vector<8x64xf32>
    %319 = math.tanh %318 : vector<8x64xf32>
    %320 = arith.mulf %315, %319 : vector<8x64xf32>
    %c48_118 = arith.constant 48 : index
    %c0_119 = arith.constant 0 : index
    %321 = vector.load %arg9[%c48_118, %c0_119] : memref<64x256xf32, #tpu.memory_space<vmem>>, vector<8x256xf32>
    %c8_120 = arith.constant 8 : index
    %c0_121 = arith.constant 0 : index
    %322 = vector.load %arg9[%c8_120, %c0_121] : memref<64x256xf32, #tpu.memory_space<vmem>>, vector<8x256xf32>
    %323 = arith.select %13, %321, %322 : vector<8x256xi1>, vector<8x256xf32>
    %cst_122 = arith.constant dense<0.000000e+00> : vector<8x256xf32>
    %324 = tpu.matmul %320, %209, %cst_122 {dimension_numbers = #tpu.dot_dimension_numbers<[1], [0], [0], [1], [0, 0, 1, 1], [], []>} : vector<8x64xf32>, vector<64x256xf32>, vector<8x256xf32> -> vector<8x256xf32>
    %325 = arith.addf %323, %324 : vector<8x256xf32>
    %326 = arith.mulf %5, %325 : vector<8x256xf32>
    %327 = math.tanh %326 : vector<8x256xf32>
    %328 = arith.mulf %5, %327 : vector<8x256xf32>
    %329 = arith.addf %328, %8 : vector<8x256xf32>
    %330 = vector.extract_strided_slice %329 {offsets = [0, 0], sizes = [8, 64], strides = [1, 1]} : vector<8x256xf32> to vector<8x64xf32>
    %331 = vector.extract_strided_slice %329 {offsets = [0, 64], sizes = [8, 64], strides = [1, 1]} : vector<8x256xf32> to vector<8x64xf32>
    %332 = vector.extract_strided_slice %329 {offsets = [0, 128], sizes = [8, 64], strides = [1, 1]} : vector<8x256xf32> to vector<8x64xf32>
    %333 = vector.extract_strided_slice %329 {offsets = [0, 192], sizes = [8, 64], strides = [1, 1]} : vector<8x256xf32> to vector<8x64xf32>
    %334 = arith.mulf %331, %318 : vector<8x64xf32>
    %335 = arith.mulf %330, %332 : vector<8x64xf32>
    %336 = arith.addf %334, %335 : vector<8x64xf32>
    %337 = math.tanh %336 : vector<8x64xf32>
    %338 = arith.mulf %333, %337 : vector<8x64xf32>
    %c56_123 = arith.constant 56 : index
    %c0_124 = arith.constant 0 : index
    %339 = vector.load %arg9[%c56_123, %c0_124] : memref<64x256xf32, #tpu.memory_space<vmem>>, vector<8x256xf32>
    %c0_125 = arith.constant 0 : index
    %c0_126 = arith.constant 0 : index
    %340 = vector.load %arg9[%c0_125, %c0_126] : memref<64x256xf32, #tpu.memory_space<vmem>>, vector<8x256xf32>
    %341 = arith.select %13, %339, %340 : vector<8x256xi1>, vector<8x256xf32>
    %cst_127 = arith.constant dense<0.000000e+00> : vector<8x256xf32>
    %342 = tpu.matmul %338, %209, %cst_127 {dimension_numbers = #tpu.dot_dimension_numbers<[1], [0], [0], [1], [0, 0, 1, 1], [], []>} : vector<8x64xf32>, vector<64x256xf32>, vector<8x256xf32> -> vector<8x256xf32>
    %343 = arith.addf %341, %342 : vector<8x256xf32>
    %344 = arith.mulf %5, %343 : vector<8x256xf32>
    %345 = math.tanh %344 : vector<8x256xf32>
    %346 = arith.mulf %5, %345 : vector<8x256xf32>
    %347 = arith.addf %346, %8 : vector<8x256xf32>
    %348 = vector.extract_strided_slice %347 {offsets = [0, 0], sizes = [8, 64], strides = [1, 1]} : vector<8x256xf32> to vector<8x64xf32>
    %349 = vector.extract_strided_slice %347 {offsets = [0, 64], sizes = [8, 64], strides = [1, 1]} : vector<8x256xf32> to vector<8x64xf32>
    %350 = vector.extract_strided_slice %347 {offsets = [0, 128], sizes = [8, 64], strides = [1, 1]} : vector<8x256xf32> to vector<8x64xf32>
    %351 = vector.extract_strided_slice %347 {offsets = [0, 192], sizes = [8, 64], strides = [1, 1]} : vector<8x256xf32> to vector<8x64xf32>
    %352 = arith.mulf %349, %336 : vector<8x64xf32>
    %353 = arith.mulf %348, %350 : vector<8x64xf32>
    %354 = arith.addf %352, %353 : vector<8x64xf32>
    %355 = math.tanh %354 : vector<8x64xf32>
    %356 = arith.mulf %351, %355 : vector<8x64xf32>
    %357 = vector.extract_strided_slice %356 {offsets = [0, 0], sizes = [8, 32], strides = [1, 1]} : vector<8x64xf32> to vector<8x32xf32>
    %358 = tpu.concatenate %357, %230 in 1 : vector<8x32xf32>, vector<8x32xf32> -> vector<8x64xf32>
    %c0_128 = arith.constant 0 : index
    %c0_129 = arith.constant 0 : index
    %359 = vector.load %arg6[%c0_128, %c0_129] : memref<64x128xf32, #tpu.memory_space<vmem>>, vector<64x128xf32>
    %cst_130 = arith.constant dense<0.000000e+00> : vector<8x128xf32>
    %360 = tpu.matmul %358, %359, %cst_130 {dimension_numbers = #tpu.dot_dimension_numbers<[1], [0], [0], [1], [0, 0, 1, 1], [], []>} : vector<8x64xf32>, vector<64x128xf32>, vector<8x128xf32> -> vector<8x128xf32>
    %361 = vector.broadcast %14 : vector<1x128xf32> to vector<8x128xf32>
    %362 = arith.addf %360, %361 : vector<8x128xf32>
    %cst_131 = arith.constant 0.000000e+00 : f32
    %363 = vector.broadcast %cst_131 : f32 to vector<8x128xf32>
    %364 = arith.maximumf %362, %363 : vector<8x128xf32>
    %c0_132 = arith.constant 0 : index
    %c0_133 = arith.constant 0 : index
    %365 = vector.load %arg7[%c0_132, %c0_133] : memref<128x64xf32, #tpu.memory_space<vmem>>, vector<128x64xf32>
    %cst_134 = arith.constant dense<0.000000e+00> : vector<8x64xf32>
    %366 = tpu.matmul %364, %365, %cst_134 {dimension_numbers = #tpu.dot_dimension_numbers<[1], [0], [0], [1], [0, 0, 1, 1], [], []>} : vector<8x128xf32>, vector<128x64xf32>, vector<8x64xf32> -> vector<8x64xf32>
    %367 = vector.broadcast %15 : vector<1x64xf32> to vector<8x64xf32>
    %368 = arith.addf %366, %367 : vector<8x64xf32>
    %cst_135 = arith.constant 0.000000e+00 : f32
    %369 = vector.broadcast %cst_135 : f32 to vector<8x64xf32>
    %370 = arith.maximumf %368, %369 : vector<8x64xf32>
    %371 = vector.broadcast %16 : vector<1x64xf32> to vector<8x64xf32>
    %372 = arith.mulf %370, %371 : vector<8x64xf32>
    %cst_136 = arith.constant dense<0.000000e+00> : vector<8xf32>
    %373 = vector.multi_reduction <add>, %372, %cst_136 [1] : vector<8x64xf32> to vector<8xf32>
    %374 = vector.shape_cast %373 : vector<8xf32> to vector<8x1xf32>
    %375 = vector.broadcast %17 : vector<1x1xf32> to vector<8x1xf32>
    %376 = arith.addf %374, %375 : vector<8x1xf32>
    %cst_137 = arith.constant 5.000000e-01 : f32
    %377 = vector.broadcast %cst_137 : f32 to vector<8x1xf32>
    %378 = arith.mulf %377, %376 : vector<8x1xf32>
    %379 = math.tanh %378 : vector<8x1xf32>
    %cst_138 = arith.constant 1.000000e+00 : f32
    %380 = vector.broadcast %cst_138 : f32 to vector<8x1xf32>
    %381 = arith.addf %379, %380 : vector<8x1xf32>
    %cst_139 = arith.constant 5.000000e-01 : f32
    %382 = vector.broadcast %cst_139 : f32 to vector<8x1xf32>
    %383 = arith.mulf %382, %381 : vector<8x1xf32>
    %c0_140 = arith.constant 0 : index
    %c0_141 = arith.constant 0 : index
    %384 = vector.load %arg8[%c0_140, %c0_141] : memref<8x1xf32, #tpu.memory_space<vmem>>, vector<8x1xf32>
    tpu.vector_store %arg8[%c0_140, %c0_141], %383 {strides = array<i32>} : memref<8x1xf32, #tpu.memory_space<vmem>>, vector<8x1xf32>,
    return
  }
}

</mosaic_0001>

<llo_original>
// kernel: tpu_custom_call.1
$region0: #{tpu_custom_call.1}
  #allocation0 [shape = 'u32[]', space=smem, size = 0x4, offset = 0x4, fixed_abs, tag = 'smem constant byte address 0x4 - core index']
  #allocation1 [shape = 'u32[144,128]{1,0:T(1,128)}', space=vmem, size = 0x12000, scoped, tag = 'internal scratch']
  #allocation2 [shape = 'f32[64,256]{1,0:T(8,128)}', space=vmem, size = 0x10000, scoped, tag = 'scratch operand']
  #allocation3 [shape = 'f32[64,64]{1,0:T(8,128)}', space=vmem, size = 0x8000, scoped, tag = 'scratch operand']
  %s0 = inlined_call_operand.vmem [shape: f32[64,16], index: 0, kind: input, shape index: {}]
  %s1 = inlined_call_operand.hbm [shape: f32[16,256], index: 1, kind: input, shape index: {}]
  %s2 = inlined_call_operand.vmem [shape: f32[64,256], index: 2, kind: input, shape index: {}]
  %s3 = inlined_call_operand.vmem [shape: f32[64,256], index: 3, kind: input, shape index: {}]
  %s4 = inlined_call_operand.hbm [shape: f32[64,256], index: 4, kind: input, shape index: {}]
  %s5 = inlined_call_operand.vmem [shape: f32[8,256], index: 5, kind: input, shape index: {}]
  %s6 = inlined_call_operand.hbm [shape: f32[64,128], index: 6, kind: input, shape index: {}]
  %s7 = inlined_call_operand.vmem [shape: f32[128,64], index: 7, kind: input, shape index: {}]
  %s8 = inlined_call_operand.vmem [shape: f32[8,1], index: 8, kind: output, shape index: {}]
  %s9 = sld [smem:[#allocation0]]
  $region54: #{tpu_custom_call.1} parent=0
    _
  %s11 = ssub.s32 1, %s9
  %s12 = scalar_select 0, %s11, %s9
  $region1: #{tpu_custom_call.1} parent=0
    #allocation4 [shape = 'u8[16384]{0}', space=vmem, size = 0x4000, scoped, tag = 'input window, operand 1, single buffered']
    #allocation5 [shape = 's32[1]{0}', space=sflag, size = 0x4, scoped, tag = 'scoped memory for tpu_custom_call.1']
    #allocation6 [shape = 'u8[65536]{0}', space=vmem, size = 0x10000, scoped, tag = 'input window, operand 4, single buffered']
    #allocation7 [shape = 's32[1]{0}', space=sflag, size = 0x4, scoped, tag = 'scoped memory for tpu_custom_call.1']
    #allocation8 [shape = 'u8[32768]{0}', space=vmem, size = 0x8000, scoped, tag = 'input window, operand 6, single buffered']
    %13 = vsyncpa [#allocation5], 0
    %14 = vsyncpa [#allocation7], 0
    // Predicated region
    $region2: #{tpu_custom_call.1} parent=1 // pred_check
      _
    $region3: #{tpu_custom_call.1} parent=1 // pred_check_branch
      %16 = sbr.rel (0) target = $region5
    $region4: #{tpu_custom_call.1} parent=1 // pred_region
      _
    $region5: #{tpu_custom_call.1} parent=1 // pred_fallthru
      _
    // Predicated region
    $region6: #{tpu_custom_call.1} parent=1 // pred_check
      _
    $region7: #{tpu_custom_call.1} parent=1 // pred_check_branch
      %18 = sbr.rel (0) target = $region9
    $region8: #{tpu_custom_call.1} parent=1 // pred_region
      %s20 = ssub.s32 512, 512
      %21 = vsyncadd [#allocation5], %s20
      %s22 = sshll.u32 [#allocation4], 4
      %s23 = int_to_ptr.vmem [resolvable:$true] %s22
      %28 = dma.hbm_to_vmem [thread:$0]  %s1, 512, %s23, [#allocation5], 256, 256, 16
    $region9: #{tpu_custom_call.1} parent=1 // pred_fallthru
      _
    // Predicated region
    $region10: #{tpu_custom_call.1} parent=1 // pred_check
      _
    $region11: #{tpu_custom_call.1} parent=1 // pred_check_branch
      %30 = sbr.rel (0) target = $region13
    $region12: #{tpu_custom_call.1} parent=1 // pred_region
      _
    $region13: #{tpu_custom_call.1} parent=1 // pred_fallthru
      _
    // Predicated region
    $region14: #{tpu_custom_call.1} parent=1 // pred_check
      _
    $region15: #{tpu_custom_call.1} parent=1 // pred_check_branch
      %32 = sbr.rel (0) target = $region17
    $region16: #{tpu_custom_call.1} parent=1 // pred_region
      _
    $region17: #{tpu_custom_call.1} parent=1 // pred_fallthru
      _
    // Predicated region
    $region18: #{tpu_custom_call.1} parent=1 // pred_check
      _
    $region19: #{tpu_custom_call.1} parent=1 // pred_check_branch
      %34 = sbr.rel (0) target = $region21
    $region20: #{tpu_custom_call.1} parent=1 // pred_region
      %s36 = ssub.s32 2048, 2048
      %37 = vsyncadd [#allocation7], %s36
      %s38 = sshll.u32 [#allocation6], 4
      %s39 = int_to_ptr.vmem [resolvable:$true] %s38
      %44 = dma.hbm_to_vmem [thread:$0]  %s4, 2048, %s39, [#allocation7], 256, 256, 16
    $region21: #{tpu_custom_call.1} parent=1 // pred_fallthru
      _
    // Predicated region
    $region22: #{tpu_custom_call.1} parent=1 // pred_check
      _
    $region23: #{tpu_custom_call.1} parent=1 // pred_check_branch
      %46 = sbr.rel (0) target = $region25
    $region24: #{tpu_custom_call.1} parent=1 // pred_region
      _
    $region25: #{tpu_custom_call.1} parent=1 // pred_fallthru
      _
    // Predicated region
    $region26: #{tpu_custom_call.1} parent=1 // pred_check
      _
    $region27: #{tpu_custom_call.1} parent=1 // pred_check_branch
      %48 = sbr.rel (0) target = $region29
    $region28: #{tpu_custom_call.1} parent=1 // pred_region
      %s50 = ssub.s32 1024, 1024
      %51 = vsyncadd [#allocation7], %s50
      %s52 = sshll.u32 [#allocation8], 4
      %s53 = int_to_ptr.vmem [resolvable:$true] %s52
      %58 = dma.hbm_to_vmem [thread:$0]  %s6, 1024, %s53, [#allocation7], 128, 128, 8
    $region29: #{tpu_custom_call.1} parent=1 // pred_fallthru
      _
    // Predicated region
    $region30: #{tpu_custom_call.1} parent=1 // pred_check
      _
    $region31: #{tpu_custom_call.1} parent=1 // pred_check_branch
      %60 = sbr.rel (0) target = $region33
    $region32: #{tpu_custom_call.1} parent=1 // pred_region
      _
    $region33: #{tpu_custom_call.1} parent=1 // pred_fallthru
      _
    // Predicated region
    $region34: #{tpu_custom_call.1} parent=1 // pred_check
      _
    $region35: #{tpu_custom_call.1} parent=1 // pred_check_branch
      %62 = sbr.rel (0) target = $region37
    $region36: #{tpu_custom_call.1} parent=1 // pred_region
      %63 = dma.done [#allocation5], 512
    $region37: #{tpu_custom_call.1} parent=1 // pred_fallthru
      _
    // Predicated region
    $region38: #{tpu_custom_call.1} parent=1 // pred_check
      _
    $region39: #{tpu_custom_call.1} parent=1 // pred_check_branch
      %65 = sbr.rel (0) target = $region41
    $region40: #{tpu_custom_call.1} parent=1 // pred_region
      %66 = dma.done [#allocation7], 2048
    $region41: #{tpu_custom_call.1} parent=1 // pred_fallthru
      _
    // Predicated region
    $region42: #{tpu_custom_call.1} parent=1 // pred_check
      _
    $region43: #{tpu_custom_call.1} parent=1 // pred_check_branch
      %68 = sbr.rel (0) target = $region45
    $region44: #{tpu_custom_call.1} parent=1 // pred_region
      %69 = dma.done [#allocation7], 1024
    $region45: #{tpu_custom_call.1} parent=1 // pred_fallthru
      _
    %v70 = vld [vmem:[%s5] sm:$0xff]
    %v71 = vld [vmem:[%s5 + $0x8] sm:$0xff]
    %v72 = vlaneseq
    %v73 = vshrl.u32 %v72, 7
    %v74 = vsub.s32 2, %v73
    %v75 = vrot.slane %v70, %v74
    %v76 = vlaneseq
    %v77 = vshrl.u32 %v76, 7
    %v78 = vsub.s32 2, %v77
    %v79 = vrot.slane %v71, %v78
    %v80 = vlaneseq
    %v81 = vshrl.u32 %v80, 7
    %v82 = vsub.s32 3, %v81
    %v83 = vrot.slane %v70, %v82
    %v84 = vlaneseq
    %v85 = vshrl.u32 %v84, 7
    %v86 = vsub.s32 3, %v85
    %v87 = vrot.slane %v71, %v86
    %v88 = vlaneseq
    %v89 = vshrl.u32 %v88, 7
    %v90 = vsub.s32 4, %v89
    %v91 = vrot.slane %v70, %v90
    %v92 = vlaneseq
    %v93 = vshrl.u32 %v92, 7
    %v94 = vsub.s32 4, %v93
    %v95 = vrot.slane %v71, %v94
    %vm96 = vcmp.gt.f32.partialorder %v91, 0.5
    %vm97 = vcmp.gt.f32.partialorder %v95, 0.5
    %v98 = vld [vmem:[%s0] sm:$0xff]
    %v99 = vld [vmem:[%s0 + $0x8] sm:$0xff]
    %v100 = vld [vmem:[%s0 + $0x10] sm:$0xff]
    %v101 = vld [vmem:[%s0 + $0x18] sm:$0xff]
    %v102 = vld [vmem:[%s0 + $0x20] sm:$0xff]
    %v103 = vld [vmem:[%s0 + $0x28] sm:$0xff]
    %v104 = vld [vmem:[%s0 + $0x30] sm:$0xff]
    %v105 = vld [vmem:[%s0 + $0x38] sm:$0xff]
    %v106 = vld [vmem:[#allocation4] sm:$0xff]
    %v107 = vld [vmem:[#allocation4 + $0x8] sm:$0xff]
    %v108 = vld [vmem:[#allocation4 + $0x10] sm:$0xff]
    %v109 = vld [vmem:[#allocation4 + $0x18] sm:$0xff]
    %v110 = vlaneseq
    %v111 = vshrl.u32 %v110, 7
    %v112 = vsub.s32 0, %v111
    %v113 = vrot.slane %v70, %v112
    %v114 = vlaneseq
    %v115 = vshrl.u32 %v114, 7
    %v116 = vsub.s32 0, %v115
    %v117 = vrot.slane %v71, %v116
    %vm118 = vcmask 130048
    %v120 = vsel %vm118, %v98, 0
    %v123 = vsel %vm118, %v99, 0
    %v126 = vsel %vm118, %v100, 0
    %v129 = vsel %vm118, %v101, 0
    %v132 = vsel %vm118, %v102, 0
    %v135 = vsel %vm118, %v103, 0
    %v138 = vsel %vm118, %v104, 0
    %v141 = vsel %vm118, %v105, 0
    %143 = vmatprep.subr.mxu0 %v107
    %144 = vmatpush1.msra.mxu0 %v106
    %145 = vmatprep.subr.mxu0 %v109
    %146 = vmatpush1.msra.mxu0 %v108
    %147 = vmatprep.subr.mxu0 0.0
    %148 = vmatpush1.msra.mxu0 0.0
    %149 = vmatprep.subr.mxu0 0.0
    %150 = vmatpush1.msra.mxu0 0.0
    %151 = vmatprep.subr.mxu0 0.0
    %152 = vmatpush1.msra.mxu0 0.0
    %153 = vmatprep.subr.mxu0 0.0
    %154 = vmatpush1.msra.mxu0 0.0
    %155 = vmatprep.subr.mxu0 0.0
    %156 = vmatpush1.msra.mxu0 0.0
    %157 = vmatprep.subr.mxu0 0.0
    %158 = vmatpush1.msra.mxu0 0.0
    %159 = vmatprep.subr.mxu0 0.0
    %160 = vmatpush1.msra.mxu0 0.0
    %161 = vmatprep.subr.mxu0 0.0
    %162 = vmatpush1.msra.mxu0 0.0
    %163 = vmatprep.subr.mxu0 0.0
    %164 = vmatpush1.msra.mxu0 0.0
    %165 = vmatprep.subr.mxu0 0.0
    %166 = vmatpush1.msra.mxu0 0.0
    %167 = vmatprep.subr.mxu0 0.0
    %168 = vmatpush1.msra.mxu0 0.0
    %169 = vmatprep.subr.mxu0 0.0
    %170 = vmatpush1.msra.mxu0 0.0
    %171 = vmatprep.subr.mxu0 0.0
    %172 = vmatpush1.msra.mxu0 0.0
    %173 = vmatprep.subr.mxu0 0.0
    %174 = vmatpush1.msra.mxu0 0.0
    %175 = vmatprep.subr.mxu0 0.0
    %176 = vmatpush1.msra.mxu0 0.0
    %177 = vmatprep.subr.mxu0 0.0
    %178 = vmatpush1.msra.mxu0 0.0
    %179 = vmatprep.subr.mxu0 0.0
    %180 = vmatpush1.msra.mxu0 0.0
    %181 = vmatprep.subr.mxu0 0.0
    %182 = vmatpush1.msra.mxu0 0.0
    %183 = vmatprep.subr.mxu0 0.0
    %184 = vmatpush1.msra.mxu0 0.0
    %185 = vmatprep.subr.mxu0 0.0
    %186 = vmatpush1.msra.mxu0 0.0
    %187 = vmatprep.subr.mxu0 0.0
    %188 = vmatpush1.msra.mxu0 0.0
    %189 = vmatprep.subr.mxu0 0.0
    %190 = vmatpush1.msra.mxu0 0.0
    %191 = vmatprep.subr.mxu0 0.0
    %192 = vmatpush1.msra.mxu0 0.0
    %193 = vmatprep.subr.mxu0 0.0
    %194 = vmatpush1.msra.mxu0 0.0
    %195 = vmatprep.subr.mxu0 0.0
    %196 = vmatpush1.msra.mxu0 0.0
    %197 = vmatprep.subr.mxu0 0.0
    %198 = vmatpush1.msra.mxu0 0.0
    %199 = vmatprep.subr.mxu0 0.0
    %200 = vmatpush1.msra.mxu0 0.0
    %201 = vmatprep.subr.mxu0 0.0
    %202 = vmatpush1.msra.mxu0 0.0
    %203 = vmatprep.subr.mxu0 0.0
    %204 = vmatpush1.msra.mxu0 0.0
    %205 = vmatprep.subr.mxu0 0.0
    %206 = vmatpush1.msra.mxu0 0.0
    %207 = vmatprep.mubr.f32.mxu0 0.0
    %208 = vmatmul.mubr.f32.gmra.mrb[0].mxu0 %v120
    %v209 = vpop.f32.mrb[0].mxu0
    %v210 = vadd.f32 %v113, %v209
    %v211 = vpop.f32.mrb[0].mxu0
    %v212 = vadd.f32 %v117, %v211
    %213 = vmatprep.mubr.f32.mxu0 0.0
    %214 = vmatmul.mubr.f32.gmra.mrb[0].mxu0 %v123
    %v215 = vpop.f32.mrb[0].mxu0
    %v216 = vadd.f32 %v113, %v215
    %v217 = vpop.f32.mrb[0].mxu0
    %v218 = vadd.f32 %v117, %v217
    %219 = vmatprep.mubr.f32.mxu0 0.0
    %220 = vmatmul.mubr.f32.gmra.mrb[0].mxu0 %v126
    %v221 = vpop.f32.mrb[0].mxu0
    %v222 = vadd.f32 %v113, %v221
    %v223 = vpop.f32.mrb[0].mxu0
    %v224 = vadd.f32 %v117, %v223
    %225 = vmatprep.mubr.f32.mxu0 0.0
    %226 = vmatmul.mubr.f32.gmra.mrb[0].mxu0 %v129
    %v227 = vpop.f32.mrb[0].mxu0
    %v228 = vadd.f32 %v113, %v227
    %v229 = vpop.f32.mrb[0].mxu0
    %v230 = vadd.f32 %v117, %v229
    %231 = vmatprep.mubr.f32.mxu0 0.0
    %232 = vmatmul.mubr.f32.gmra.mrb[0].mxu0 %v132
    %v233 = vpop.f32.mrb[0].mxu0
    %v234 = vadd.f32 %v113, %v233
    %v235 = vpop.f32.mrb[0].mxu0
    %v236 = vadd.f32 %v117, %v235
    %237 = vmatprep.mubr.f32.mxu0 0.0
    %238 = vmatmul.mubr.f32.gmra.mrb[0].mxu0 %v135
    %v239 = vpop.f32.mrb[0].mxu0
    %v240 = vadd.f32 %v113, %v239
    %v241 = vpop.f32.mrb[0].mxu0
    %v242 = vadd.f32 %v117, %v241
    %243 = vmatprep.mubr.f32.mxu0 0.0
    %244 = vmatmul.mubr.f32.gmra.mrb[0].mxu0 %v138
    %v245 = vpop.f32.mrb[0].mxu0
    %v246 = vadd.f32 %v113, %v245
    %v247 = vpop.f32.mrb[0].mxu0
    %v248 = vadd.f32 %v117, %v247
    %249 = vmatprep.mubr.f32.mxu0 0.0
    %250 = vmatmul.mubr.f32.gmra.mrb[0].mxu0 %v141
    %v251 = vpop.f32.mrb[0].mxu0
    %v252 = vadd.f32 %v113, %v251
    %v253 = vpop.f32.mrb[0].mxu0
    %v254 = vadd.f32 %v117, %v253
    %255 = vdwg.mxu0
    %256 = vst [vmem:[#allocation2] sm:$0xff] %v210
    %257 = vst [vmem:[#allocation2 + $0x8] sm:$0xff] %v212
    %258 = vst [vmem:[#allocation2 + $0x10] sm:$0xff] %v216
    %259 = vst [vmem:[#allocation2 + $0x18] sm:$0xff] %v218
    %260 = vst [vmem:[#allocation2 + $0x20] sm:$0xff] %v222
    %261 = vst [vmem:[#allocation2 + $0x28] sm:$0xff] %v224
    %262 = vst [vmem:[#allocation2 + $0x30] sm:$0xff] %v228
    %263 = vst [vmem:[#allocation2 + $0x38] sm:$0xff] %v230
    %264 = vst [vmem:[#allocation2 + $0x40] sm:$0xff] %v234
    %265 = vst [vmem:[#allocation2 + $0x48] sm:$0xff] %v236
    %266 = vst [vmem:[#allocation2 + $0x50] sm:$0xff] %v240
    %267 = vst [vmem:[#allocation2 + $0x58] sm:$0xff] %v242
    %268 = vst [vmem:[#allocation2 + $0x60] sm:$0xff] %v246
    %269 = vst [vmem:[#allocation2 + $0x68] sm:$0xff] %v248
    %270 = vst [vmem:[#allocation2 + $0x70] sm:$0xff] %v252
    %271 = vst [vmem:[#allocation2 + $0x78] sm:$0xff] %v254
    %v272 = vld [vmem:[%s2] sm:$0xff]
    %v273 = vld [vmem:[%s2 + $0x8] sm:$0xff]
    %v274 = vld [vmem:[%s2 + $0x10] sm:$0xff]
    %v275 = vld [vmem:[%s2 + $0x18] sm:$0xff]
    %v276 = vld [vmem:[%s2 + $0x20] sm:$0xff]
    %v277 = vld [vmem:[%s2 + $0x28] sm:$0xff]
    %v278 = vld [vmem:[%s2 + $0x30] sm:$0xff]
    %v279 = vld [vmem:[%s2 + $0x38] sm:$0xff]
    %v280 = vld [vmem:[%s2 + $0x40] sm:$0xff]
    %v281 = vld [vmem:[%s2 + $0x48] sm:$0xff]
    %v282 = vld [vmem:[%s2 + $0x50] sm:$0xff]
    %v283 = vld [vmem:[%s2 + $0x58] sm:$0xff]
    %v284 = vld [vmem:[%s2 + $0x60] sm:$0xff]
    %v285 = vld [vmem:[%s2 + $0x68] sm:$0xff]
    %v286 = vld [vmem:[%s2 + $0x70] sm:$0xff]
    %v287 = vld [vmem:[%s2 + $0x78] sm:$0xff]
    %v288 = vld [vmem:[#allocation2] sm:$0xff]
    %v289 = vld [vmem:[#allocation2 + $0x8] sm:$0xff]
    %v290 = vld [vmem:[#allocation2 + $0x70] sm:$0xff]
    %v291 = vld [vmem:[#allocation2 + $0x78] sm:$0xff]
    %v292 = vsel %vm96, %v288, %v290
    %v293 = vsel %vm97, %v289, %v291
    %vm294 = vcmask 523264
    %v296 = vsel %vm294, 0.0, 0
    %298 = vmatprep.subr.mxu0 %v273
    %299 = vmatpush1.msra.mxu0 %v272
    %300 = vmatprep.subr.mxu0 %v275
    %301 = vmatpush1.msra.mxu0 %v274
    %302 = vmatprep.subr.mxu0 %v277
    %303 = vmatpush1.msra.mxu0 %v276
    %304 = vmatprep.subr.mxu0 %v279
    %305 = vmatpush1.msra.mxu0 %v278
    %306 = vmatprep.subr.mxu0 %v281
    %307 = vmatpush1.msra.mxu0 %v280
    %308 = vmatprep.subr.mxu0 %v283
    %309 = vmatpush1.msra.mxu0 %v282
    %310 = vmatprep.subr.mxu0 %v285
    %311 = vmatpush1.msra.mxu0 %v284
    %312 = vmatprep.subr.mxu0 %v287
    %313 = vmatpush1.msra.mxu0 %v286
    %314 = vmatprep.subr.mxu0 0.0
    %315 = vmatpush1.msra.mxu0 0.0
    %316 = vmatprep.subr.mxu0 0.0
    %317 = vmatpush1.msra.mxu0 0.0
    %318 = vmatprep.subr.mxu0 0.0
    %319 = vmatpush1.msra.mxu0 0.0
    %320 = vmatprep.subr.mxu0 0.0
    %321 = vmatpush1.msra.mxu0 0.0
    %322 = vmatprep.subr.mxu0 0.0
    %323 = vmatpush1.msra.mxu0 0.0
    %324 = vmatprep.subr.mxu0 0.0
    %325 = vmatpush1.msra.mxu0 0.0
    %326 = vmatprep.subr.mxu0 0.0
    %327 = vmatpush1.msra.mxu0 0.0
    %328 = vmatprep.subr.mxu0 0.0
    %329 = vmatpush1.msra.mxu0 0.0
    %330 = vmatprep.subr.mxu0 0.0
    %331 = vmatpush1.msra.mxu0 0.0
    %332 = vmatprep.subr.mxu0 0.0
    %333 = vmatpush1.msra.mxu0 0.0
    %334 = vmatprep.subr.mxu0 0.0
    %335 = vmatpush1.msra.mxu0 0.0
    %336 = vmatprep.subr.mxu0 0.0
    %337 = vmatpush1.msra.mxu0 0.0
    %338 = vmatprep.subr.mxu0 0.0
    %339 = vmatpush1.msra.mxu0 0.0
    %340 = vmatprep.subr.mxu0 0.0
    %341 = vmatpush1.msra.mxu0 0.0
    %342 = vmatprep.subr.mxu0 0.0
    %343 = vmatpush1.msra.mxu0 0.0
    %344 = vmatprep.subr.mxu0 0.0
    %345 = vmatpush1.msra.mxu0 0.0
    %346 = vmatprep.subr.mxu0 0.0
    %347 = vmatpush1.msra.mxu0 0.0
    %348 = vmatprep.subr.mxu0 0.0
    %349 = vmatpush1.msra.mxu0 0.0
    %350 = vmatprep.subr.mxu0 0.0
    %351 = vmatpush1.msra.mxu0 0.0
    %352 = vmatprep.subr.mxu0 0.0
    %353 = vmatpush1.msra.mxu0 0.0
    %354 = vmatprep.subr.mxu0 0.0
    %355 = vmatpush1.msra.mxu0 0.0
    %356 = vmatprep.subr.mxu0 0.0
    %357 = vmatpush1.msra.mxu0 0.0
    %358 = vmatprep.subr.mxu0 0.0
    %359 = vmatpush1.msra.mxu0 0.0
    %360 = vmatprep.subr.mxu0 0.0
    %361 = vmatpush1.msra.mxu0 0.0
    %362 = vmatprep.mubr.f32.mxu0 0.0
    %363 = vmatmul.mubr.f32.gmra.mrb[0].mxu0 %v296
    %v364 = vpop.f32.mrb[0].mxu0
    %v365 = vadd.f32 0.0, %v364
    %v366 = vpop.f32.mrb[0].mxu0
    %v367 = vadd.f32 0.0, %v366
    %368 = vdwg.mxu0
    %v369 = vadd.f32 %v292, %v365
    %v370 = vadd.f32 %v293, %v367
    %v371 = vmul.f32 %v75, %v369
    %v372 = vmul.f32 %v79, %v370
    %v373 = vtanh.pop %v371
    %v374 = vtanh.pop %v372
    %v375 = vmul.f32 %v75, %v373
    %v376 = vmul.f32 %v79, %v374
    %v377 = vadd.f32 %v375, %v83
    %v378 = vadd.f32 %v376, %v87
    %v379 = vmul.f32 %v377, 0.0
    %v380 = vmul.f32 %v377, %v378
    %382 = vrot.lane.b32.xlu0 %v380, 64
    %v383 = vpop.permute.xlu0 %382
    %v385 = vadd.f32 %v379, %v383
    %v386 = vtanh.pop %v385
    %v387 = vmul.f32 %v378, %v386
    %389 = vrot.lane.b32.xlu0 %v387, 64
    %v390 = vpop.permute.xlu0 %389
    %vm392 = vcmask 261120
    %393 = vst.msk [vmem:[#allocation3] sm:$0xff] %vm392, %v390
    %vm394 = vcmask 523520
    %395 = vst.msk [vmem:[#allocation3 + $0x38] sm:$0xff] %vm394, %v390
    %v396 = vld [vmem:[#allocation2 + $0x10] sm:$0xff]
    %v397 = vld [vmem:[#allocation2 + $0x18] sm:$0xff]
    %v398 = vld [vmem:[#allocation2 + $0x60] sm:$0xff]
    %v399 = vld [vmem:[#allocation2 + $0x68] sm:$0xff]
    %v400 = vsel %vm96, %v396, %v398
    %v401 = vsel %vm97, %v397, %v399
    %v402 = vsel %vm294, %v390, 0
    %404 = vmatprep.subr.mxu0 %v273
    %405 = vmatpush1.msra.mxu0 %v272
    %406 = vmatprep.subr.mxu0 %v275
    %407 = vmatpush1.msra.mxu0 %v274
    %408 = vmatprep.subr.mxu0 %v277
    %409 = vmatpush1.msra.mxu0 %v276
    %410 = vmatprep.subr.mxu0 %v279
    %411 = vmatpush1.msra.mxu0 %v278
    %412 = vmatprep.subr.mxu0 %v281
    %413 = vmatpush1.msra.mxu0 %v280
    %414 = vmatprep.subr.mxu0 %v283
    %415 = vmatpush1.msra.mxu0 %v282
    %416 = vmatprep.subr.mxu0 %v285
    %417 = vmatpush1.msra.mxu0 %v284
    %418 = vmatprep.subr.mxu0 %v287
    %419 = vmatpush1.msra.mxu0 %v286
    %420 = vmatprep.subr.mxu0 0.0
    %421 = vmatpush1.msra.mxu0 0.0
    %422 = vmatprep.subr.mxu0 0.0
    %423 = vmatpush1.msra.mxu0 0.0
    %424 = vmatprep.subr.mxu0 0.0
    %425 = vmatpush1.msra.mxu0 0.0
    %426 = vmatprep.subr.mxu0 0.0
    %427 = vmatpush1.msra.mxu0 0.0
    %428 = vmatprep.subr.mxu0 0.0
    %429 = vmatpush1.msra.mxu0 0.0
    %430 = vmatprep.subr.mxu0 0.0
    %431 = vmatpush1.msra.mxu0 0.0
    %432 = vmatprep.subr.mxu0 0.0
    %433 = vmatpush1.msra.mxu0 0.0
    %434 = vmatprep.subr.mxu0 0.0
    %435 = vmatpush1.msra.mxu0 0.0
    %436 = vmatprep.subr.mxu0 0.0
    %437 = vmatpush1.msra.mxu0 0.0
    %438 = vmatprep.subr.mxu0 0.0
    %439 = vmatpush1.msra.mxu0 0.0
    %440 = vmatprep.subr.mxu0 0.0
    %441 = vmatpush1.msra.mxu0 0.0
    %442 = vmatprep.subr.mxu0 0.0
    %443 = vmatpush1.msra.mxu0 0.0
    %444 = vmatprep.subr.mxu0 0.0
    %445 = vmatpush1.msra.mxu0 0.0
    %446 = vmatprep.subr.mxu0 0.0
    %447 = vmatpush1.msra.mxu0 0.0
    %448 = vmatprep.subr.mxu0 0.0
    %449 = vmatpush1.msra.mxu0 0.0
    %450 = vmatprep.subr.mxu0 0.0
    %451 = vmatpush1.msra.mxu0 0.0
    %452 = vmatprep.subr.mxu0 0.0
    %453 = vmatpush1.msra.mxu0 0.0
    %454 = vmatprep.subr.mxu0 0.0
    %455 = vmatpush1.msra.mxu0 0.0
    %456 = vmatprep.subr.mxu0 0.0
    %457 = vmatpush1.msra.mxu0 0.0
    %458 = vmatprep.subr.mxu0 0.0
    %459 = vmatpush1.msra.mxu0 0.0
    %460 = vmatprep.subr.mxu0 0.0
    %461 = vmatpush1.msra.mxu0 0.0
    %462 = vmatprep.subr.mxu0 0.0
    %463 = vmatpush1.msra.mxu0 0.0
    %464 = vmatprep.subr.mxu0 0.0
    %465 = vmatpush1.msra.mxu0 0.0
    %466 = vmatprep.subr.mxu0 0.0
    %467 = vmatpush1.msra.mxu0 0.0
    %468 = vmatprep.mubr.f32.mxu0 0.0
    %469 = vmatmul.mubr.f32.gmra.mrb[0].mxu0 %v402
    %v470 = vpop.f32.mrb[0].mxu0
    %v471 = vadd.f32 0.0, %v470
    %v472 = vpop.f32.mrb[0].mxu0
    %v473 = vadd.f32 0.0, %v472
    %474 = vdwg.mxu0
    %v475 = vadd.f32 %v400, %v471
    %v476 = vadd.f32 %v401, %v473
    %v477 = vmul.f32 %v75, %v475
    %v478 = vmul.f32 %v79, %v476
    %v479 = vtanh.pop %v477
    %v480 = vtanh.pop %v478
    %v481 = vmul.f32 %v75, %v479
    %v482 = vmul.f32 %v79, %v480
    %v483 = vadd.f32 %v481, %v83
    %v484 = vadd.f32 %v482, %v87
    %v485 = vmul.f32 %v483, %v385
    %v486 = vmul.f32 %v483, %v484
    %488 = vrot.lane.b32.xlu0 %v486, 64
    %v489 = vpop.permute.xlu0 %488
    %v491 = vadd.f32 %v485, %v489
    %v492 = vtanh.pop %v491
    %v493 = vmul.f32 %v484, %v492
    %495 = vrot.lane.b32.xlu0 %v493, 64
    %v496 = vpop.permute.xlu0 %495
    %498 = vst.msk [vmem:[#allocation3 + $0x8] sm:$0xff] %vm392, %v496
    %499 = vst.msk [vmem:[#allocation3 + $0x30] sm:$0xff] %vm394, %v496
    %v500 = vld [vmem:[#allocation2 + $0x20] sm:$0xff]
    %v501 = vld [vmem:[#allocation2 + $0x28] sm:$0xff]
    %v502 = vld [vmem:[#allocation2 + $0x50] sm:$0xff]
    %v503 = vld [vmem:[#allocation2 + $0x58] sm:$0xff]
    %v504 = vsel %vm96, %v500, %v502
    %v505 = vsel %vm97, %v501, %v503
    %v506 = vsel %vm294, %v496, 0
    %508 = vmatprep.subr.mxu0 %v273
    %509 = vmatpush1.msra.mxu0 %v272
    %510 = vmatprep.subr.mxu0 %v275
    %511 = vmatpush1.msra.mxu0 %v274
    %512 = vmatprep.subr.mxu0 %v277
    %513 = vmatpush1.msra.mxu0 %v276
    %514 = vmatprep.subr.mxu0 %v279
    %515 = vmatpush1.msra.mxu0 %v278
    %516 = vmatprep.subr.mxu0 %v281
    %517 = vmatpush1.msra.mxu0 %v280
    %518 = vmatprep.subr.mxu0 %v283
    %519 = vmatpush1.msra.mxu0 %v282
    %520 = vmatprep.subr.mxu0 %v285
    %521 = vmatpush1.msra.mxu0 %v284
    %522 = vmatprep.subr.mxu0 %v287
    %523 = vmatpush1.msra.mxu0 %v286
    %524 = vmatprep.subr.mxu0 0.0
    %525 = vmatpush1.msra.mxu0 0.0
    %526 = vmatprep.subr.mxu0 0.0
    %527 = vmatpush1.msra.mxu0 0.0
    %528 = vmatprep.subr.mxu0 0.0
    %529 = vmatpush1.msra.mxu0 0.0
    %530 = vmatprep.subr.mxu0 0.0
    %531 = vmatpush1.msra.mxu0 0.0
    %532 = vmatprep.subr.mxu0 0.0
    %533 = vmatpush1.msra.mxu0 0.0
    %534 = vmatprep.subr.mxu0 0.0
    %535 = vmatpush1.msra.mxu0 0.0
    %536 = vmatprep.subr.mxu0 0.0
    %537 = vmatpush1.msra.mxu0 0.0
    %538 = vmatprep.subr.mxu0 0.0
    %539 = vmatpush1.msra.mxu0 0.0
    %540 = vmatprep.subr.mxu0 0.0
    %541 = vmatpush1.msra.mxu0 0.0
    %542 = vmatprep.subr.mxu0 0.0
    %543 = vmatpush1.msra.mxu0 0.0
    %544 = vmatprep.subr.mxu0 0.0
    %545 = vmatpush1.msra.mxu0 0.0
    %546 = vmatprep.subr.mxu0 0.0
    %547 = vmatpush1.msra.mxu0 0.0
    %548 = vmatprep.subr.mxu0 0.0
    %549 = vmatpush1.msra.mxu0 0.0
    %550 = vmatprep.subr.mxu0 0.0
    %551 = vmatpush1.msra.mxu0 0.0
    %552 = vmatprep.subr.mxu0 0.0
    %553 = vmatpush1.msra.mxu0 0.0
    %554 = vmatprep.subr.mxu0 0.0
    %555 = vmatpush1.msra.mxu0 0.0
    %556 = vmatprep.subr.mxu0 0.0
    %557 = vmatpush1.msra.mxu0 0.0
    %558 = vmatprep.subr.mxu0 0.0
    %559 = vmatpush1.msra.mxu0 0.0
    %560 = vmatprep.subr.mxu0 0.0
    %561 = vmatpush1.msra.mxu0 0.0
    %562 = vmatprep.subr.mxu0 0.0
    %563 = vmatpush1.msra.mxu0 0.0
    %564 = vmatprep.subr.mxu0 0.0
    %565 = vmatpush1.msra.mxu0 0.0
    %566 = vmatprep.subr.mxu0 0.0
    %567 = vmatpush1.msra.mxu0 0.0
    %568 = vmatprep.subr.mxu0 0.0
    %569 = vmatpush1.msra.mxu0 0.0
    %570 = vmatprep.subr.mxu0 0.0
    %571 = vmatpush1.msra.mxu0 0.0
    %572 = vmatprep.mubr.f32.mxu0 0.0
    %573 = vmatmul.mubr.f32.gmra.mrb[0].mxu0 %v506
    %v574 = vpop.f32.mrb[0].mxu0
    %v575 = vadd.f32 0.0, %v574
    %v576 = vpop.f32.mrb[0].mxu0
    %v577 = vadd.f32 0.0, %v576
    %578 = vdwg.mxu0
    %v579 = vadd.f32 %v504, %v575
    %v580 = vadd.f32 %v505, %v577
    %v581 = vmul.f32 %v75, %v579
    %v582 = vmul.f32 %v79, %v580
    %v583 = vtanh.pop %v581
    %v584 = vtanh.pop %v582
    %v585 = vmul.f32 %v75, %v583
    %v586 = vmul.f32 %v79, %v584
    %v587 = vadd.f32 %v585, %v83
    %v588 = vadd.f32 %v586, %v87
    %v589 = vmul.f32 %v587, %v491
    %v590 = vmul.f32 %v587, %v588
    %592 = vrot.lane.b32.xlu0 %v590, 64
    %v593 = vpop.permute.xlu0 %592
    %v595 = vadd.f32 %v589, %v593
    %v596 = vtanh.pop %v595
    %v597 = vmul.f32 %v588, %v596
    %599 = vrot.lane.b32.xlu0 %v597, 64
    %v600 = vpop.permute.xlu0 %599
    %602 = vst.msk [vmem:[#allocation3 + $0x10] sm:$0xff] %vm392, %v600
    %603 = vst.msk [vmem:[#allocation3 + $0x28] sm:$0xff] %vm394, %v600
    %v604 = vld [vmem:[#allocation2 + $0x30] sm:$0xff]
    %v605 = vld [vmem:[#allocation2 + $0x38] sm:$0xff]
    %v606 = vld [vmem:[#allocation2 + $0x40] sm:$0xff]
    %v607 = vld [vmem:[#allocation2 + $0x48] sm:$0xff]
    %v608 = vsel %vm96, %v604, %v606
    %v609 = vsel %vm97, %v605, %v607
    %v610 = vsel %vm294, %v600, 0
    %612 = vmatprep.subr.mxu0 %v273
    %613 = vmatpush1.msra.mxu0 %v272
    %614 = vmatprep.subr.mxu0 %v275
    %615 = vmatpush1.msra.mxu0 %v274
    %616 = vmatprep.subr.mxu0 %v277
    %617 = vmatpush1.msra.mxu0 %v276
    %618 = vmatprep.subr.mxu0 %v279
    %619 = vmatpush1.msra.mxu0 %v278
    %620 = vmatprep.subr.mxu0 %v281
    %621 = vmatpush1.msra.mxu0 %v280
    %622 = vmatprep.subr.mxu0 %v283
    %623 = vmatpush1.msra.mxu0 %v282
    %624 = vmatprep.subr.mxu0 %v285
    %625 = vmatpush1.msra.mxu0 %v284
    %626 = vmatprep.subr.mxu0 %v287
    %627 = vmatpush1.msra.mxu0 %v286
    %628 = vmatprep.subr.mxu0 0.0
    %629 = vmatpush1.msra.mxu0 0.0
    %630 = vmatprep.subr.mxu0 0.0
    %631 = vmatpush1.msra.mxu0 0.0
    %632 = vmatprep.subr.mxu0 0.0
    %633 = vmatpush1.msra.mxu0 0.0
    %634 = vmatprep.subr.mxu0 0.0
    %635 = vmatpush1.msra.mxu0 0.0
    %636 = vmatprep.subr.mxu0 0.0
    %637 = vmatpush1.msra.mxu0 0.0
    %638 = vmatprep.subr.mxu0 0.0
    %639 = vmatpush1.msra.mxu0 0.0
    %640 = vmatprep.subr.mxu0 0.0
    %641 = vmatpush1.msra.mxu0 0.0
    %642 = vmatprep.subr.mxu0 0.0
    %643 = vmatpush1.msra.mxu0 0.0
    %644 = vmatprep.subr.mxu0 0.0
    %645 = vmatpush1.msra.mxu0 0.0
    %646 = vmatprep.subr.mxu0 0.0
    %647 = vmatpush1.msra.mxu0 0.0
    %648 = vmatprep.subr.mxu0 0.0
    %649 = vmatpush1.msra.mxu0 0.0
    %650 = vmatprep.subr.mxu0 0.0
    %651 = vmatpush1.msra.mxu0 0.0
    %652 = vmatprep.subr.mxu0 0.0
    %653 = vmatpush1.msra.mxu0 0.0
    %654 = vmatprep.subr.mxu0 0.0
    %655 = vmatpush1.msra.mxu0 0.0
    %656 = vmatprep.subr.mxu0 0.0
    %657 = vmatpush1.msra.mxu0 0.0
    %658 = vmatprep.subr.mxu0 0.0
    %659 = vmatpush1.msra.mxu0 0.0
    %660 = vmatprep.subr.mxu0 0.0
    %661 = vmatpush1.msra.mxu0 0.0
    %662 = vmatprep.subr.mxu0 0.0
    %663 = vmatpush1.msra.mxu0 0.0
    %664 = vmatprep.subr.mxu0 0.0
    %665 = vmatpush1.msra.mxu0 0.0
    %666 = vmatprep.subr.mxu0 0.0
    %667 = vmatpush1.msra.mxu0 0.0
    %668 = vmatprep.subr.mxu0 0.0
    %669 = vmatpush1.msra.mxu0 0.0
    %670 = vmatprep.subr.mxu0 0.0
    %671 = vmatpush1.msra.mxu0 0.0
    %672 = vmatprep.subr.mxu0 0.0
    %673 = vmatpush1.msra.mxu0 0.0
    %674 = vmatprep.subr.mxu0 0.0
    %675 = vmatpush1.msra.mxu0 0.0
    %676 = vmatprep.mubr.f32.mxu0 0.0
    %677 = vmatmul.mubr.f32.gmra.mrb[0].mxu0 %v610
    %v678 = vpop.f32.mrb[0].mxu0
    %v679 = vadd.f32 0.0, %v678
    %v680 = vpop.f32.mrb[0].mxu0
    %v681 = vadd.f32 0.0, %v680
    %682 = vdwg.mxu0
    %v683 = vadd.f32 %v608, %v679
    %v684 = vadd.f32 %v609, %v681
    %v685 = vmul.f32 %v75, %v683
    %v686 = vmul.f32 %v79, %v684
    %v687 = vtanh.pop %v685
    %v688 = vtanh.pop %v686
    %v689 = vmul.f32 %v75, %v687
    %v690 = vmul.f32 %v79, %v688
    %v691 = vadd.f32 %v689, %v83
    %v692 = vadd.f32 %v690, %v87
    %v693 = vmul.f32 %v691, %v595
    %v694 = vmul.f32 %v691, %v692
    %696 = vrot.lane.b32.xlu0 %v694, 64
    %v697 = vpop.permute.xlu0 %696
    %v699 = vadd.f32 %v693, %v697
    %v700 = vtanh.pop %v699
    %v701 = vmul.f32 %v692, %v700
    %703 = vrot.lane.b32.xlu0 %v701, 64
    %v704 = vpop.permute.xlu0 %703
    %706 = vst.msk [vmem:[#allocation3 + $0x18] sm:$0xff] %vm392, %v704
    %707 = vst.msk [vmem:[#allocation3 + $0x20] sm:$0xff] %vm394, %v704
    %v708 = vld [vmem:[#allocation2 + $0x40] sm:$0xff]
    %v709 = vld [vmem:[#allocation2 + $0x48] sm:$0xff]
    %v710 = vld [vmem:[#allocation2 + $0x30] sm:$0xff]
    %v711 = vld [vmem:[#allocation2 + $0x38] sm:$0xff]
    %v712 = vsel %vm96, %v708, %v710
    %v713 = vsel %vm97, %v709, %v711
    %v714 = vsel %vm294, %v704, 0
    %716 = vmatprep.subr.mxu0 %v273
    %717 = vmatpush1.msra.mxu0 %v272
    %718 = vmatprep.subr.mxu0 %v275
    %719 = vmatpush1.msra.mxu0 %v274
    %720 = vmatprep.subr.mxu0 %v277
    %721 = vmatpush1.msra.mxu0 %v276
    %722 = vmatprep.subr.mxu0 %v279
    %723 = vmatpush1.msra.mxu0 %v278
    %724 = vmatprep.subr.mxu0 %v281
    %725 = vmatpush1.msra.mxu0 %v280
    %726 = vmatprep.subr.mxu0 %v283
    %727 = vmatpush1.msra.mxu0 %v282
    %728 = vmatprep.subr.mxu0 %v285
    %729 = vmatpush1.msra.mxu0 %v284
    %730 = vmatprep.subr.mxu0 %v287
    %731 = vmatpush1.msra.mxu0 %v286
    %732 = vmatprep.subr.mxu0 0.0
    %733 = vmatpush1.msra.mxu0 0.0
    %734 = vmatprep.subr.mxu0 0.0
    %735 = vmatpush1.msra.mxu0 0.0
    %736 = vmatprep.subr.mxu0 0.0
    %737 = vmatpush1.msra.mxu0 0.0
    %738 = vmatprep.subr.mxu0 0.0
    %739 = vmatpush1.msra.mxu0 0.0
    %740 = vmatprep.subr.mxu0 0.0
    %741 = vmatpush1.msra.mxu0 0.0
    %742 = vmatprep.subr.mxu0 0.0
    %743 = vmatpush1.msra.mxu0 0.0
    %744 = vmatprep.subr.mxu0 0.0
    %745 = vmatpush1.msra.mxu0 0.0
    %746 = vmatprep.subr.mxu0 0.0
    %747 = vmatpush1.msra.mxu0 0.0
    %748 = vmatprep.subr.mxu0 0.0
    %749 = vmatpush1.msra.mxu0 0.0
    %750 = vmatprep.subr.mxu0 0.0
    %751 = vmatpush1.msra.mxu0 0.0
    %752 = vmatprep.subr.mxu0 0.0
    %753 = vmatpush1.msra.mxu0 0.0
    %754 = vmatprep.subr.mxu0 0.0
    %755 = vmatpush1.msra.mxu0 0.0
    %756 = vmatprep.subr.mxu0 0.0
    %757 = vmatpush1.msra.mxu0 0.0
    %758 = vmatprep.subr.mxu0 0.0
    %759 = vmatpush1.msra.mxu0 0.0
    %760 = vmatprep.subr.mxu0 0.0
    %761 = vmatpush1.msra.mxu0 0.0
    %762 = vmatprep.subr.mxu0 0.0
    %763 = vmatpush1.msra.mxu0 0.0
    %764 = vmatprep.subr.mxu0 0.0
    %765 = vmatpush1.msra.mxu0 0.0
    %766 = vmatprep.subr.mxu0 0.0
    %767 = vmatpush1.msra.mxu0 0.0
    %768 = vmatprep.subr.mxu0 0.0
    %769 = vmatpush1.msra.mxu0 0.0
    %770 = vmatprep.subr.mxu0 0.0
    %771 = vmatpush1.msra.mxu0 0.0
    %772 = vmatprep.subr.mxu0 0.0
    %773 = vmatpush1.msra.mxu0 0.0
    %774 = vmatprep.subr.mxu0 0.0
    %775 = vmatpush1.msra.mxu0 0.0
    %776 = vmatprep.subr.mxu0 0.0
    %777 = vmatpush1.msra.mxu0 0.0
    %778 = vmatprep.subr.mxu0 0.0
    %779 = vmatpush1.msra.mxu0 0.0
    %780 = vmatprep.mubr.f32.mxu0 0.0
    %781 = vmatmul.mubr.f32.gmra.mrb[0].mxu0 %v714
    %v782 = vpop.f32.mrb[0].mxu0
    %v783 = vadd.f32 0.0, %v782
    %v784 = vpop.f32.mrb[0].mxu0
    %v785 = vadd.f32 0.0, %v784
    %786 = vdwg.mxu0
    %v787 = vadd.f32 %v712, %v783
    %v788 = vadd.f32 %v713, %v785
    %v789 = vmul.f32 %v75, %v787
    %v790 = vmul.f32 %v79, %v788
    %v791 = vtanh.pop %v789
    %v792 = vtanh.pop %v790
    %v793 = vmul.f32 %v75, %v791
    %v794 = vmul.f32 %v79, %v792
    %v795 = vadd.f32 %v793, %v83
    %v796 = vadd.f32 %v794, %v87
    %v797 = vmul.f32 %v795, %v699
    %v798 = vmul.f32 %v795, %v796
    %800 = vrot.lane.b32.xlu0 %v798, 64
    %v801 = vpop.permute.xlu0 %800
    %v803 = vadd.f32 %v797, %v801
    %v804 = vtanh.pop %v803
    %v805 = vmul.f32 %v796, %v804
    %807 = vrot.lane.b32.xlu0 %v805, 64
    %v808 = vpop.permute.xlu0 %807
    %810 = vst.msk [vmem:[#allocation3 + $0x20] sm:$0xff] %vm392, %v808
    %811 = vst.msk [vmem:[#allocation3 + $0x18] sm:$0xff] %vm394, %v808
    %v812 = vld [vmem:[#allocation2 + $0x50] sm:$0xff]
    %v813 = vld [vmem:[#allocation2 + $0x58] sm:$0xff]
    %v814 = vld [vmem:[#allocation2 + $0x20] sm:$0xff]
    %v815 = vld [vmem:[#allocation2 + $0x28] sm:$0xff]
    %v816 = vsel %vm96, %v812, %v814
    %v817 = vsel %vm97, %v813, %v815
    %v818 = vsel %vm294, %v808, 0
    %820 = vmatprep.subr.mxu0 %v273
    %821 = vmatpush1.msra.mxu0 %v272
    %822 = vmatprep.subr.mxu0 %v275
    %823 = vmatpush1.msra.mxu0 %v274
    %824 = vmatprep.subr.mxu0 %v277
    %825 = vmatpush1.msra.mxu0 %v276
    %826 = vmatprep.subr.mxu0 %v279
    %827 = vmatpush1.msra.mxu0 %v278
    %828 = vmatprep.subr.mxu0 %v281
    %829 = vmatpush1.msra.mxu0 %v280
    %830 = vmatprep.subr.mxu0 %v283
    %831 = vmatpush1.msra.mxu0 %v282
    %832 = vmatprep.subr.mxu0 %v285
    %833 = vmatpush1.msra.mxu0 %v284
    %834 = vmatprep.subr.mxu0 %v287
    %835 = vmatpush1.msra.mxu0 %v286
    %836 = vmatprep.subr.mxu0 0.0
    %837 = vmatpush1.msra.mxu0 0.0
    %838 = vmatprep.subr.mxu0 0.0
    %839 = vmatpush1.msra.mxu0 0.0
    %840 = vmatprep.subr.mxu0 0.0
    %841 = vmatpush1.msra.mxu0 0.0
    %842 = vmatprep.subr.mxu0 0.0
    %843 = vmatpush1.msra.mxu0 0.0
    %844 = vmatprep.subr.mxu0 0.0
    %845 = vmatpush1.msra.mxu0 0.0
    %846 = vmatprep.subr.mxu0 0.0
    %847 = vmatpush1.msra.mxu0 0.0
    %848 = vmatprep.subr.mxu0 0.0
    %849 = vmatpush1.msra.mxu0 0.0
    %850 = vmatprep.subr.mxu0 0.0
    %851 = vmatpush1.msra.mxu0 0.0
    %852 = vmatprep.subr.mxu0 0.0
    %853 = vmatpush1.msra.mxu0 0.0
    %854 = vmatprep.subr.mxu0 0.0
    %855 = vmatpush1.msra.mxu0 0.0
    %856 = vmatprep.subr.mxu0 0.0
    %857 = vmatpush1.msra.mxu0 0.0
    %858 = vmatprep.subr.mxu0 0.0
    %859 = vmatpush1.msra.mxu0 0.0
    %860 = vmatprep.subr.mxu0 0.0
    %861 = vmatpush1.msra.mxu0 0.0
    %862 = vmatprep.subr.mxu0 0.0
    %863 = vmatpush1.msra.mxu0 0.0
    %864 = vmatprep.subr.mxu0 0.0
    %865 = vmatpush1.msra.mxu0 0.0
    %866 = vmatprep.subr.mxu0 0.0
    %867 = vmatpush1.msra.mxu0 0.0
    %868 = vmatprep.subr.mxu0 0.0
    %869 = vmatpush1.msra.mxu0 0.0
    %870 = vmatprep.subr.mxu0 0.0
    %871 = vmatpush1.msra.mxu0 0.0
    %872 = vmatprep.subr.mxu0 0.0
    %873 = vmatpush1.msra.mxu0 0.0
    %874 = vmatprep.subr.mxu0 0.0
    %875 = vmatpush1.msra.mxu0 0.0
    %876 = vmatprep.subr.mxu0 0.0
    %877 = vmatpush1.msra.mxu0 0.0
    %878 = vmatprep.subr.mxu0 0.0
    %879 = vmatpush1.msra.mxu0 0.0
    %880 = vmatprep.subr.mxu0 0.0
    %881 = vmatpush1.msra.mxu0 0.0
    %882 = vmatprep.subr.mxu0 0.0
    %883 = vmatpush1.msra.mxu0 0.0
    %884 = vmatprep.mubr.f32.mxu0 0.0
    %885 = vmatmul.mubr.f32.gmra.mrb[0].mxu0 %v818
    %v886 = vpop.f32.mrb[0].mxu0
    %v887 = vadd.f32 0.0, %v886
    %v888 = vpop.f32.mrb[0].mxu0
    %v889 = vadd.f32 0.0, %v888
    %890 = vdwg.mxu0
    %v891 = vadd.f32 %v816, %v887
    %v892 = vadd.f32 %v817, %v889
    %v893 = vmul.f32 %v75, %v891
    %v894 = vmul.f32 %v79, %v892
    %v895 = vtanh.pop %v893
    %v896 = vtanh.pop %v894
    %v897 = vmul.f32 %v75, %v895
    %v898 = vmul.f32 %v79, %v896
    %v899 = vadd.f32 %v897, %v83
    %v900 = vadd.f32 %v898, %v87
    %v901 = vmul.f32 %v899, %v803
    %v902 = vmul.f32 %v899, %v900
    %904 = vrot.lane.b32.xlu0 %v902, 64
    %v905 = vpop.permute.xlu0 %904
    %v907 = vadd.f32 %v901, %v905
    %v908 = vtanh.pop %v907
    %v909 = vmul.f32 %v900, %v908
    %911 = vrot.lane.b32.xlu0 %v909, 64
    %v912 = vpop.permute.xlu0 %911
    %914 = vst.msk [vmem:[#allocation3 + $0x28] sm:$0xff] %vm392, %v912
    %915 = vst.msk [vmem:[#allocation3 + $0x10] sm:$0xff] %vm394, %v912
    %v916 = vld [vmem:[#allocation2 + $0x60] sm:$0xff]
    %v917 = vld [vmem:[#allocation2 + $0x68] sm:$0xff]
    %v918 = vld [vmem:[#allocation2 + $0x10] sm:$0xff]
    %v919 = vld [vmem:[#allocation2 + $0x18] sm:$0xff]
    %v920 = vsel %vm96, %v916, %v918
    %v921 = vsel %vm97, %v917, %v919
    %v922 = vsel %vm294, %v912, 0
    %924 = vmatprep.subr.mxu0 %v273
    %925 = vmatpush1.msra.mxu0 %v272
    %926 = vmatprep.subr.mxu0 %v275
    %927 = vmatpush1.msra.mxu0 %v274
    %928 = vmatprep.subr.mxu0 %v277
    %929 = vmatpush1.msra.mxu0 %v276
    %930 = vmatprep.subr.mxu0 %v279
    %931 = vmatpush1.msra.mxu0 %v278
    %932 = vmatprep.subr.mxu0 %v281
    %933 = vmatpush1.msra.mxu0 %v280
    %934 = vmatprep.subr.mxu0 %v283
    %935 = vmatpush1.msra.mxu0 %v282
    %936 = vmatprep.subr.mxu0 %v285
    %937 = vmatpush1.msra.mxu0 %v284
    %938 = vmatprep.subr.mxu0 %v287
    %939 = vmatpush1.msra.mxu0 %v286
    %940 = vmatprep.subr.mxu0 0.0
    %941 = vmatpush1.msra.mxu0 0.0
    %942 = vmatprep.subr.mxu0 0.0
    %943 = vmatpush1.msra.mxu0 0.0
    %944 = vmatprep.subr.mxu0 0.0
    %945 = vmatpush1.msra.mxu0 0.0
    %946 = vmatprep.subr.mxu0 0.0
    %947 = vmatpush1.msra.mxu0 0.0
    %948 = vmatprep.subr.mxu0 0.0
    %949 = vmatpush1.msra.mxu0 0.0
    %950 = vmatprep.subr.mxu0 0.0
    %951 = vmatpush1.msra.mxu0 0.0
    %952 = vmatprep.subr.mxu0 0.0
    %953 = vmatpush1.msra.mxu0 0.0
    %954 = vmatprep.subr.mxu0 0.0
    %955 = vmatpush1.msra.mxu0 0.0
    %956 = vmatprep.subr.mxu0 0.0
    %957 = vmatpush1.msra.mxu0 0.0
    %958 = vmatprep.subr.mxu0 0.0
    %959 = vmatpush1.msra.mxu0 0.0
    %960 = vmatprep.subr.mxu0 0.0
    %961 = vmatpush1.msra.mxu0 0.0
    %962 = vmatprep.subr.mxu0 0.0
    %963 = vmatpush1.msra.mxu0 0.0
    %964 = vmatprep.subr.mxu0 0.0
    %965 = vmatpush1.msra.mxu0 0.0
    %966 = vmatprep.subr.mxu0 0.0
    %967 = vmatpush1.msra.mxu0 0.0
    %968 = vmatprep.subr.mxu0 0.0
    %969 = vmatpush1.msra.mxu0 0.0
    %970 = vmatprep.subr.mxu0 0.0
    %971 = vmatpush1.msra.mxu0 0.0
    %972 = vmatprep.subr.mxu0 0.0
    %973 = vmatpush1.msra.mxu0 0.0
    %974 = vmatprep.subr.mxu0 0.0
    %975 = vmatpush1.msra.mxu0 0.0
    %976 = vmatprep.subr.mxu0 0.0
    %977 = vmatpush1.msra.mxu0 0.0
    %978 = vmatprep.subr.mxu0 0.0
    %979 = vmatpush1.msra.mxu0 0.0
    %980 = vmatprep.subr.mxu0 0.0
    %981 = vmatpush1.msra.mxu0 0.0
    %982 = vmatprep.subr.mxu0 0.0
    %983 = vmatpush1.msra.mxu0 0.0
    %984 = vmatprep.subr.mxu0 0.0
    %985 = vmatpush1.msra.mxu0 0.0
    %986 = vmatprep.subr.mxu0 0.0
    %987 = vmatpush1.msra.mxu0 0.0
    %988 = vmatprep.mubr.f32.mxu0 0.0
    %989 = vmatmul.mubr.f32.gmra.mrb[0].mxu0 %v922
    %v990 = vpop.f32.mrb[0].mxu0
    %v991 = vadd.f32 0.0, %v990
    %v992 = vpop.f32.mrb[0].mxu0
    %v993 = vadd.f32 0.0, %v992
    %994 = vdwg.mxu0
    %v995 = vadd.f32 %v920, %v991
    %v996 = vadd.f32 %v921, %v993
    %v997 = vmul.f32 %v75, %v995
    %v998 = vmul.f32 %v79, %v996
    %v999 = vtanh.pop %v997
    %v1000 = vtanh.pop %v998
    %v1001 = vmul.f32 %v75, %v999
    %v1002 = vmul.f32 %v79, %v1000
    %v1003 = vadd.f32 %v1001, %v83
    %v1004 = vadd.f32 %v1002, %v87
    %v1005 = vmul.f32 %v1003, %v907
    %v1006 = vmul.f32 %v1003, %v1004
    %1008 = vrot.lane.b32.xlu0 %v1006, 64
    %v1009 = vpop.permute.xlu0 %1008
    %v1011 = vadd.f32 %v1005, %v1009
    %v1012 = vtanh.pop %v1011
    %v1013 = vmul.f32 %v1004, %v1012
    %1015 = vrot.lane.b32.xlu0 %v1013, 64
    %v1016 = vpop.permute.xlu0 %1015
    %1018 = vst.msk [vmem:[#allocation3 + $0x30] sm:$0xff] %vm392, %v1016
    %1019 = vst.msk [vmem:[#allocation3 + $0x8] sm:$0xff] %vm394, %v1016
    %v1020 = vld [vmem:[#allocation2 + $0x70] sm:$0xff]
    %v1021 = vld [vmem:[#allocation2 + $0x78] sm:$0xff]
    %v1022 = vld [vmem:[#allocation2] sm:$0xff]
    %v1023 = vld [vmem:[#allocation2 + $0x8] sm:$0xff]
    %v1024 = vsel %vm96, %v1020, %v1022
    %v1025 = vsel %vm97, %v1021, %v1023
    %v1026 = vsel %vm294, %v1016, 0
    %1028 = vmatprep.subr.mxu0 %v273
    %1029 = vmatpush1.msra.mxu0 %v272
    %1030 = vmatprep.subr.mxu0 %v275
    %1031 = vmatpush1.msra.mxu0 %v274
    %1032 = vmatprep.subr.mxu0 %v277
    %1033 = vmatpush1.msra.mxu0 %v276
    %1034 = vmatprep.subr.mxu0 %v279
    %1035 = vmatpush1.msra.mxu0 %v278
    %1036 = vmatprep.subr.mxu0 %v281
    %1037 = vmatpush1.msra.mxu0 %v280
    %1038 = vmatprep.subr.mxu0 %v283
    %1039 = vmatpush1.msra.mxu0 %v282
    %1040 = vmatprep.subr.mxu0 %v285
    %1041 = vmatpush1.msra.mxu0 %v284
    %1042 = vmatprep.subr.mxu0 %v287
    %1043 = vmatpush1.msra.mxu0 %v286
    %1044 = vmatprep.subr.mxu0 0.0
    %1045 = vmatpush1.msra.mxu0 0.0
    %1046 = vmatprep.subr.mxu0 0.0
    %1047 = vmatpush1.msra.mxu0 0.0
    %1048 = vmatprep.subr.mxu0 0.0
    %1049 = vmatpush1.msra.mxu0 0.0
    %1050 = vmatprep.subr.mxu0 0.0
    %1051 = vmatpush1.msra.mxu0 0.0
    %1052 = vmatprep.subr.mxu0 0.0
    %1053 = vmatpush1.msra.mxu0 0.0
    %1054 = vmatprep.subr.mxu0 0.0
    %1055 = vmatpush1.msra.mxu0 0.0
    %1056 = vmatprep.subr.mxu0 0.0
    %1057 = vmatpush1.msra.mxu0 0.0
    %1058 = vmatprep.subr.mxu0 0.0
    %1059 = vmatpush1.msra.mxu0 0.0
    %1060 = vmatprep.subr.mxu0 0.0
    %1061 = vmatpush1.msra.mxu0 0.0
    %1062 = vmatprep.subr.mxu0 0.0
    %1063 = vmatpush1.msra.mxu0 0.0
    %1064 = vmatprep.subr.mxu0 0.0
    %1065 = vmatpush1.msra.mxu0 0.0
    %1066 = vmatprep.subr.mxu0 0.0
    %1067 = vmatpush1.msra.mxu0 0.0
    %1068 = vmatprep.subr.mxu0 0.0
    %1069 = vmatpush1.msra.mxu0 0.0
    %1070 = vmatprep.subr.mxu0 0.0
    %1071 = vmatpush1.msra.mxu0 0.0
    %1072 = vmatprep.subr.mxu0 0.0
    %1073 = vmatpush1.msra.mxu0 0.0
    %1074 = vmatprep.subr.mxu0 0.0
    %1075 = vmatpush1.msra.mxu0 0.0
    %1076 = vmatprep.subr.mxu0 0.0
    %1077 = vmatpush1.msra.mxu0 0.0
    %1078 = vmatprep.subr.mxu0 0.0
    %1079 = vmatpush1.msra.mxu0 0.0
    %1080 = vmatprep.subr.mxu0 0.0
    %1081 = vmatpush1.msra.mxu0 0.0
    %1082 = vmatprep.subr.mxu0 0.0
    %1083 = vmatpush1.msra.mxu0 0.0
    %1084 = vmatprep.subr.mxu0 0.0
    %1085 = vmatpush1.msra.mxu0 0.0
    %1086 = vmatprep.subr.mxu0 0.0
    %1087 = vmatpush1.msra.mxu0 0.0
    %1088 = vmatprep.subr.mxu0 0.0
    %1089 = vmatpush1.msra.mxu0 0.0
    %1090 = vmatprep.subr.mxu0 0.0
    %1091 = vmatpush1.msra.mxu0 0.0
    %1092 = vmatprep.mubr.f32.mxu0 0.0
    %1093 = vmatmul.mubr.f32.gmra.mrb[0].mxu0 %v1026
    %v1094 = vpop.f32.mrb[0].mxu0
    %v1095 = vadd.f32 0.0, %v1094
    %v1096 = vpop.f32.mrb[0].mxu0
    %v1097 = vadd.f32 0.0, %v1096
    %1098 = vdwg.mxu0
    %v1099 = vadd.f32 %v1024, %v1095
    %v1100 = vadd.f32 %v1025, %v1097
    %v1101 = vmul.f32 %v75, %v1099
    %v1102 = vmul.f32 %v79, %v1100
    %v1103 = vtanh.pop %v1101
    %v1104 = vtanh.pop %v1102
    %v1105 = vmul.f32 %v75, %v1103
    %v1106 = vmul.f32 %v79, %v1104
    %v1107 = vadd.f32 %v1105, %v83
    %v1108 = vadd.f32 %v1106, %v87
    %v1109 = vmul.f32 %v1107, %v1011
    %v1110 = vmul.f32 %v1107, %v1108
    %1112 = vrot.lane.b32.xlu0 %v1110, 64
    %v1113 = vpop.permute.xlu0 %1112
    %v1115 = vadd.f32 %v1109, %v1113
    %v1116 = vtanh.pop %v1115
    %v1117 = vmul.f32 %v1108, %v1116
    %1119 = vrot.lane.b32.xlu0 %v1117, 64
    %v1120 = vpop.permute.xlu0 %1119
    %1122 = vst.msk [vmem:[#allocation3 + $0x38] sm:$0xff] %vm392, %v1120
    %1123 = vst.msk [vmem:[#allocation3] sm:$0xff] %vm394, %v1120
    %v1124 = vld [vmem:[#allocation3] sm:$0xff]
    %v1125 = vld [vmem:[#allocation3 + $0x8] sm:$0xff]
    %v1126 = vld [vmem:[#allocation3 + $0x10] sm:$0xff]
    %v1127 = vld [vmem:[#allocation3 + $0x18] sm:$0xff]
    %v1128 = vld [vmem:[#allocation3 + $0x20] sm:$0xff]
    %v1129 = vld [vmem:[#allocation3 + $0x28] sm:$0xff]
    %v1130 = vld [vmem:[#allocation3 + $0x30] sm:$0xff]
    %v1131 = vld [vmem:[#allocation3 + $0x38] sm:$0xff]
    %v1132 = vld [vmem:[%s3] sm:$0xff]
    %v1133 = vld [vmem:[%s3 + $0x8] sm:$0xff]
    %v1134 = vld [vmem:[%s3 + $0x10] sm:$0xff]
    %v1135 = vld [vmem:[%s3 + $0x18] sm:$0xff]
    %v1136 = vld [vmem:[%s3 + $0x20] sm:$0xff]
    %v1137 = vld [vmem:[%s3 + $0x28] sm:$0xff]
    %v1138 = vld [vmem:[%s3 + $0x30] sm:$0xff]
    %v1139 = vld [vmem:[%s3 + $0x38] sm:$0xff]
    %v1140 = vld [vmem:[%s3 + $0x40] sm:$0xff]
    %v1141 = vld [vmem:[%s3 + $0x48] sm:$0xff]
    %v1142 = vld [vmem:[%s3 + $0x50] sm:$0xff]
    %v1143 = vld [vmem:[%s3 + $0x58] sm:$0xff]
    %v1144 = vld [vmem:[%s3 + $0x60] sm:$0xff]
    %v1145 = vld [vmem:[%s3 + $0x68] sm:$0xff]
    %v1146 = vld [vmem:[%s3 + $0x70] sm:$0xff]
    %v1147 = vld [vmem:[%s3 + $0x78] sm:$0xff]
    %v1148 = vlaneseq
    %v1149 = vshrl.u32 %v1148, 7
    %v1150 = vsub.s32 1, %v1149
    %v1151 = vrot.slane %v70, %v1150
    %v1152 = vlaneseq
    %v1153 = vshrl.u32 %v1152, 7
    %v1154 = vsub.s32 1, %v1153
    %v1155 = vrot.slane %v71, %v1154
    %v1157 = vsel %vm294, %v1124, 0
    %v1160 = vsel %vm294, %v1125, 0
    %v1163 = vsel %vm294, %v1126, 0
    %v1166 = vsel %vm294, %v1127, 0
    %v1169 = vsel %vm294, %v1128, 0
    %v1172 = vsel %vm294, %v1129, 0
    %v1175 = vsel %vm294, %v1130, 0
    %v1178 = vsel %vm294, %v1131, 0
    %1180 = vmatprep.subr.mxu0 %v1133
    %1181 = vmatpush1.msra.mxu0 %v1132
    %1182 = vmatprep.subr.mxu0 %v1135
    %1183 = vmatpush1.msra.mxu0 %v1134
    %1184 = vmatprep.subr.mxu0 %v1137
    %1185 = vmatpush1.msra.mxu0 %v1136
    %1186 = vmatprep.subr.mxu0 %v1139
    %1187 = vmatpush1.msra.mxu0 %v1138
    %1188 = vmatprep.subr.mxu0 %v1141
    %1189 = vmatpush1.msra.mxu0 %v1140
    %1190 = vmatprep.subr.mxu0 %v1143
    %1191 = vmatpush1.msra.mxu0 %v1142
    %1192 = vmatprep.subr.mxu0 %v1145
    %1193 = vmatpush1.msra.mxu0 %v1144
    %1194 = vmatprep.subr.mxu0 %v1147
    %1195 = vmatpush1.msra.mxu0 %v1146
    %1196 = vmatprep.subr.mxu0 0.0
    %1197 = vmatpush1.msra.mxu0 0.0
    %1198 = vmatprep.subr.mxu0 0.0
    %1199 = vmatpush1.msra.mxu0 0.0
    %1200 = vmatprep.subr.mxu0 0.0
    %1201 = vmatpush1.msra.mxu0 0.0
    %1202 = vmatprep.subr.mxu0 0.0
    %1203 = vmatpush1.msra.mxu0 0.0
    %1204 = vmatprep.subr.mxu0 0.0
    %1205 = vmatpush1.msra.mxu0 0.0
    %1206 = vmatprep.subr.mxu0 0.0
    %1207 = vmatpush1.msra.mxu0 0.0
    %1208 = vmatprep.subr.mxu0 0.0
    %1209 = vmatpush1.msra.mxu0 0.0
    %1210 = vmatprep.subr.mxu0 0.0
    %1211 = vmatpush1.msra.mxu0 0.0
    %1212 = vmatprep.subr.mxu0 0.0
    %1213 = vmatpush1.msra.mxu0 0.0
    %1214 = vmatprep.subr.mxu0 0.0
    %1215 = vmatpush1.msra.mxu0 0.0
    %1216 = vmatprep.subr.mxu0 0.0
    %1217 = vmatpush1.msra.mxu0 0.0
    %1218 = vmatprep.subr.mxu0 0.0
    %1219 = vmatpush1.msra.mxu0 0.0
    %1220 = vmatprep.subr.mxu0 0.0
    %1221 = vmatpush1.msra.mxu0 0.0
    %1222 = vmatprep.subr.mxu0 0.0
    %1223 = vmatpush1.msra.mxu0 0.0
    %1224 = vmatprep.subr.mxu0 0.0
    %1225 = vmatpush1.msra.mxu0 0.0
    %1226 = vmatprep.subr.mxu0 0.0
    %1227 = vmatpush1.msra.mxu0 0.0
    %1228 = vmatprep.subr.mxu0 0.0
    %1229 = vmatpush1.msra.mxu0 0.0
    %1230 = vmatprep.subr.mxu0 0.0
    %1231 = vmatpush1.msra.mxu0 0.0
    %1232 = vmatprep.subr.mxu0 0.0
    %1233 = vmatpush1.msra.mxu0 0.0
    %1234 = vmatprep.subr.mxu0 0.0
    %1235 = vmatpush1.msra.mxu0 0.0
    %1236 = vmatprep.subr.mxu0 0.0
    %1237 = vmatpush1.msra.mxu0 0.0
    %1238 = vmatprep.subr.mxu0 0.0
    %1239 = vmatpush1.msra.mxu0 0.0
    %1240 = vmatprep.subr.mxu0 0.0
    %1241 = vmatpush1.msra.mxu0 0.0
    %1242 = vmatprep.subr.mxu0 0.0
    %1243 = vmatpush1.msra.mxu0 0.0
    %1244 = vmatprep.mubr.f32.mxu0 0.0
    %1245 = vmatmul.mubr.f32.gmra.mrb[0].mxu0 %v1157
    %v1246 = vpop.f32.mrb[0].mxu0
    %v1247 = vadd.f32 %v1151, %v1246
    %v1248 = vpop.f32.mrb[0].mxu0
    %v1249 = vadd.f32 %v1155, %v1248
    %1250 = vmatprep.mubr.f32.mxu0 0.0
    %1251 = vmatmul.mubr.f32.gmra.mrb[0].mxu0 %v1160
    %v1252 = vpop.f32.mrb[0].mxu0
    %v1253 = vadd.f32 %v1151, %v1252
    %v1254 = vpop.f32.mrb[0].mxu0
    %v1255 = vadd.f32 %v1155, %v1254
    %1256 = vmatprep.mubr.f32.mxu0 0.0
    %1257 = vmatmul.mubr.f32.gmra.mrb[0].mxu0 %v1163
    %v1258 = vpop.f32.mrb[0].mxu0
    %v1259 = vadd.f32 %v1151, %v1258
    %v1260 = vpop.f32.mrb[0].mxu0
    %v1261 = vadd.f32 %v1155, %v1260
    %1262 = vmatprep.mubr.f32.mxu0 0.0
    %1263 = vmatmul.mubr.f32.gmra.mrb[0].mxu0 %v1166
    %v1264 = vpop.f32.mrb[0].mxu0
    %v1265 = vadd.f32 %v1151, %v1264
    %v1266 = vpop.f32.mrb[0].mxu0
    %v1267 = vadd.f32 %v1155, %v1266
    %1268 = vmatprep.mubr.f32.mxu0 0.0
    %1269 = vmatmul.mubr.f32.gmra.mrb[0].mxu0 %v1169
    %v1270 = vpop.f32.mrb[0].mxu0
    %v1271 = vadd.f32 %v1151, %v1270
    %v1272 = vpop.f32.mrb[0].mxu0
    %v1273 = vadd.f32 %v1155, %v1272
    %1274 = vmatprep.mubr.f32.mxu0 0.0
    %1275 = vmatmul.mubr.f32.gmra.mrb[0].mxu0 %v1172
    %v1276 = vpop.f32.mrb[0].mxu0
    %v1277 = vadd.f32 %v1151, %v1276
    %v1278 = vpop.f32.mrb[0].mxu0
    %v1279 = vadd.f32 %v1155, %v1278
    %1280 = vmatprep.mubr.f32.mxu0 0.0
    %1281 = vmatmul.mubr.f32.gmra.mrb[0].mxu0 %v1175
    %v1282 = vpop.f32.mrb[0].mxu0
    %v1283 = vadd.f32 %v1151, %v1282
    %v1284 = vpop.f32.mrb[0].mxu0
    %v1285 = vadd.f32 %v1155, %v1284
    %1286 = vmatprep.mubr.f32.mxu0 0.0
    %1287 = vmatmul.mubr.f32.gmra.mrb[0].mxu0 %v1178
    %v1288 = vpop.f32.mrb[0].mxu0
    %v1289 = vadd.f32 %v1151, %v1288
    %v1290 = vpop.f32.mrb[0].mxu0
    %v1291 = vadd.f32 %v1155, %v1290
    %1292 = vdwg.mxu0
    %1293 = vst [vmem:[#allocation2] sm:$0xff] %v1247
    %1294 = vst [vmem:[#allocation2 + $0x8] sm:$0xff] %v1249
    %1295 = vst [vmem:[#allocation2 + $0x10] sm:$0xff] %v1253
    %1296 = vst [vmem:[#allocation2 + $0x18] sm:$0xff] %v1255
    %1297 = vst [vmem:[#allocation2 + $0x20] sm:$0xff] %v1259
    %1298 = vst [vmem:[#allocation2 + $0x28] sm:$0xff] %v1261
    %1299 = vst [vmem:[#allocation2 + $0x30] sm:$0xff] %v1265
    %1300 = vst [vmem:[#allocation2 + $0x38] sm:$0xff] %v1267
    %1301 = vst [vmem:[#allocation2 + $0x40] sm:$0xff] %v1271
    %1302 = vst [vmem:[#allocation2 + $0x48] sm:$0xff] %v1273
    %1303 = vst [vmem:[#allocation2 + $0x50] sm:$0xff] %v1277
    %1304 = vst [vmem:[#allocation2 + $0x58] sm:$0xff] %v1279
    %1305 = vst [vmem:[#allocation2 + $0x60] sm:$0xff] %v1283
    %1306 = vst [vmem:[#allocation2 + $0x68] sm:$0xff] %v1285
    %1307 = vst [vmem:[#allocation2 + $0x70] sm:$0xff] %v1289
    %1308 = vst [vmem:[#allocation2 + $0x78] sm:$0xff] %v1291
    %v1309 = vld [vmem:[#allocation6] sm:$0xff]
    %v1310 = vld [vmem:[#allocation6 + $0x8] sm:$0xff]
    %v1311 = vld [vmem:[#allocation6 + $0x10] sm:$0xff]
    %v1312 = vld [vmem:[#allocation6 + $0x18] sm:$0xff]
    %v1313 = vld [vmem:[#allocation6 + $0x20] sm:$0xff]
    %v1314 = vld [vmem:[#allocation6 + $0x28] sm:$0xff]
    %v1315 = vld [vmem:[#allocation6 + $0x30] sm:$0xff]
    %v1316 = vld [vmem:[#allocation6 + $0x38] sm:$0xff]
    %v1317 = vld [vmem:[#allocation6 + $0x40] sm:$0xff]
    %v1318 = vld [vmem:[#allocation6 + $0x48] sm:$0xff]
    %v1319 = vld [vmem:[#allocation6 + $0x50] sm:$0xff]
    %v1320 = vld [vmem:[#allocation6 + $0x58] sm:$0xff]
    %v1321 = vld [vmem:[#allocation6 + $0x60] sm:$0xff]
    %v1322 = vld [vmem:[#allocation6 + $0x68] sm:$0xff]
    %v1323 = vld [vmem:[#allocation6 + $0x70] sm:$0xff]
    %v1324 = vld [vmem:[#allocation6 + $0x78] sm:$0xff]
    %v1325 = vld [vmem:[#allocation2] sm:$0xff]
    %v1326 = vld [vmem:[#allocation2 + $0x8] sm:$0xff]
    %v1327 = vld [vmem:[#allocation2 + $0x70] sm:$0xff]
    %v1328 = vld [vmem:[#allocation2 + $0x78] sm:$0xff]
    %v1329 = vsel %vm96, %v1325, %v1327
    %v1330 = vsel %vm97, %v1326, %v1328
    %1331 = vmatprep.subr.mxu0 %v1310
    %1332 = vmatpush1.msra.mxu0 %v1309
    %1333 = vmatprep.subr.mxu0 %v1312
    %1334 = vmatpush1.msra.mxu0 %v1311
    %1335 = vmatprep.subr.mxu0 %v1314
    %1336 = vmatpush1.msra.mxu0 %v1313
    %1337 = vmatprep.subr.mxu0 %v1316
    %1338 = vmatpush1.msra.mxu0 %v1315
    %1339 = vmatprep.subr.mxu0 %v1318
    %1340 = vmatpush1.msra.mxu0 %v1317
    %1341 = vmatprep.subr.mxu0 %v1320
    %1342 = vmatpush1.msra.mxu0 %v1319
    %1343 = vmatprep.subr.mxu0 %v1322
    %1344 = vmatpush1.msra.mxu0 %v1321
    %1345 = vmatprep.subr.mxu0 %v1324
    %1346 = vmatpush1.msra.mxu0 %v1323
    %1347 = vmatprep.subr.mxu0 0.0
    %1348 = vmatpush1.msra.mxu0 0.0
    %1349 = vmatprep.subr.mxu0 0.0
    %1350 = vmatpush1.msra.mxu0 0.0
    %1351 = vmatprep.subr.mxu0 0.0
    %1352 = vmatpush1.msra.mxu0 0.0
    %1353 = vmatprep.subr.mxu0 0.0
    %1354 = vmatpush1.msra.mxu0 0.0
    %1355 = vmatprep.subr.mxu0 0.0
    %1356 = vmatpush1.msra.mxu0 0.0
    %1357 = vmatprep.subr.mxu0 0.0
    %1358 = vmatpush1.msra.mxu0 0.0
    %1359 = vmatprep.subr.mxu0 0.0
    %1360 = vmatpush1.msra.mxu0 0.0
    %1361 = vmatprep.subr.mxu0 0.0
    %1362 = vmatpush1.msra.mxu0 0.0
    %1363 = vmatprep.subr.mxu0 0.0
    %1364 = vmatpush1.msra.mxu0 0.0
    %1365 = vmatprep.subr.mxu0 0.0
    %1366 = vmatpush1.msra.mxu0 0.0
    %1367 = vmatprep.subr.mxu0 0.0
    %1368 = vmatpush1.msra.mxu0 0.0
    %1369 = vmatprep.subr.mxu0 0.0
    %1370 = vmatpush1.msra.mxu0 0.0
    %1371 = vmatprep.subr.mxu0 0.0
    %1372 = vmatpush1.msra.mxu0 0.0
    %1373 = vmatprep.subr.mxu0 0.0
    %1374 = vmatpush1.msra.mxu0 0.0
    %1375 = vmatprep.subr.mxu0 0.0
    %1376 = vmatpush1.msra.mxu0 0.0
    %1377 = vmatprep.subr.mxu0 0.0
    %1378 = vmatpush1.msra.mxu0 0.0
    %1379 = vmatprep.subr.mxu0 0.0
    %1380 = vmatpush1.msra.mxu0 0.0
    %1381 = vmatprep.subr.mxu0 0.0
    %1382 = vmatpush1.msra.mxu0 0.0
    %1383 = vmatprep.subr.mxu0 0.0
    %1384 = vmatpush1.msra.mxu0 0.0
    %1385 = vmatprep.subr.mxu0 0.0
    %1386 = vmatpush1.msra.mxu0 0.0
    %1387 = vmatprep.subr.mxu0 0.0
    %1388 = vmatpush1.msra.mxu0 0.0
    %1389 = vmatprep.subr.mxu0 0.0
    %1390 = vmatpush1.msra.mxu0 0.0
    %1391 = vmatprep.subr.mxu0 0.0
    %1392 = vmatpush1.msra.mxu0 0.0
    %1393 = vmatprep.subr.mxu0 0.0
    %1394 = vmatpush1.msra.mxu0 0.0
    %1395 = vmatprep.mubr.f32.mxu0 0.0
    %1396 = vmatmul.mubr.f32.gmra.mrb[0].mxu0 %v296
    %v1397 = vpop.f32.mrb[0].mxu0
    %v1398 = vadd.f32 0.0, %v1397
    %v1399 = vpop.f32.mrb[0].mxu0
    %v1400 = vadd.f32 0.0, %v1399
    %1401 = vdwg.mxu0
    %v1402 = vadd.f32 %v1329, %v1398
    %v1403 = vadd.f32 %v1330, %v1400
    %v1404 = vmul.f32 %v75, %v1402
    %v1405 = vmul.f32 %v79, %v1403
    %v1406 = vtanh.pop %v1404
    %v1407 = vtanh.pop %v1405
    %v1408 = vmul.f32 %v75, %v1406
    %v1409 = vmul.f32 %v79, %v1407
    %v1410 = vadd.f32 %v1408, %v83
    %v1411 = vadd.f32 %v1409, %v87
    %v1412 = vmul.f32 %v1410, 0.0
    %v1413 = vmul.f32 %v1410, %v1411
    %1415 = vrot.lane.b32.xlu0 %v1413, 64
    %v1416 = vpop.permute.xlu0 %1415
    %v1418 = vadd.f32 %v1412, %v1416
    %v1419 = vtanh.pop %v1418
    %v1420 = vmul.f32 %v1411, %v1419
    %v1421 = vld [vmem:[#allocation2 + $0x10] sm:$0xff]
    %v1422 = vld [vmem:[#allocation2 + $0x18] sm:$0xff]
    %v1423 = vld [vmem:[#allocation2 + $0x60] sm:$0xff]
    %v1424 = vld [vmem:[#allocation2 + $0x68] sm:$0xff]
    %v1425 = vsel %vm96, %v1421, %v1423
    %v1426 = vsel %vm97, %v1422, %v1424
    %1428 = vrot.lane.b32.xlu0 %v1420, 64
    %v1429 = vpop.permute.xlu0 %1428
    %v1430 = vsel %vm294, %v1429, 0
    %1432 = vmatprep.subr.mxu0 %v1310
    %1433 = vmatpush1.msra.mxu0 %v1309
    %1434 = vmatprep.subr.mxu0 %v1312
    %1435 = vmatpush1.msra.mxu0 %v1311
    %1436 = vmatprep.subr.mxu0 %v1314
    %1437 = vmatpush1.msra.mxu0 %v1313
    %1438 = vmatprep.subr.mxu0 %v1316
    %1439 = vmatpush1.msra.mxu0 %v1315
    %1440 = vmatprep.subr.mxu0 %v1318
    %1441 = vmatpush1.msra.mxu0 %v1317
    %1442 = vmatprep.subr.mxu0 %v1320
    %1443 = vmatpush1.msra.mxu0 %v1319
    %1444 = vmatprep.subr.mxu0 %v1322
    %1445 = vmatpush1.msra.mxu0 %v1321
    %1446 = vmatprep.subr.mxu0 %v1324
    %1447 = vmatpush1.msra.mxu0 %v1323
    %1448 = vmatprep.subr.mxu0 0.0
    %1449 = vmatpush1.msra.mxu0 0.0
    %1450 = vmatprep.subr.mxu0 0.0
    %1451 = vmatpush1.msra.mxu0 0.0
    %1452 = vmatprep.subr.mxu0 0.0
    %1453 = vmatpush1.msra.mxu0 0.0
    %1454 = vmatprep.subr.mxu0 0.0
    %1455 = vmatpush1.msra.mxu0 0.0
    %1456 = vmatprep.subr.mxu0 0.0
    %1457 = vmatpush1.msra.mxu0 0.0
    %1458 = vmatprep.subr.mxu0 0.0
    %1459 = vmatpush1.msra.mxu0 0.0
    %1460 = vmatprep.subr.mxu0 0.0
    %1461 = vmatpush1.msra.mxu0 0.0
    %1462 = vmatprep.subr.mxu0 0.0
    %1463 = vmatpush1.msra.mxu0 0.0
    %1464 = vmatprep.subr.mxu0 0.0
    %1465 = vmatpush1.msra.mxu0 0.0
    %1466 = vmatprep.subr.mxu0 0.0
    %1467 = vmatpush1.msra.mxu0 0.0
    %1468 = vmatprep.subr.mxu0 0.0
    %1469 = vmatpush1.msra.mxu0 0.0
    %1470 = vmatprep.subr.mxu0 0.0
    %1471 = vmatpush1.msra.mxu0 0.0
    %1472 = vmatprep.subr.mxu0 0.0
    %1473 = vmatpush1.msra.mxu0 0.0
    %1474 = vmatprep.subr.mxu0 0.0
    %1475 = vmatpush1.msra.mxu0 0.0
    %1476 = vmatprep.subr.mxu0 0.0
    %1477 = vmatpush1.msra.mxu0 0.0
    %1478 = vmatprep.subr.mxu0 0.0
    %1479 = vmatpush1.msra.mxu0 0.0
    %1480 = vmatprep.subr.mxu0 0.0
    %1481 = vmatpush1.msra.mxu0 0.0
    %1482 = vmatprep.subr.mxu0 0.0
    %1483 = vmatpush1.msra.mxu0 0.0
    %1484 = vmatprep.subr.mxu0 0.0
    %1485 = vmatpush1.msra.mxu0 0.0
    %1486 = vmatprep.subr.mxu0 0.0
    %1487 = vmatpush1.msra.mxu0 0.0
    %1488 = vmatprep.subr.mxu0 0.0
    %1489 = vmatpush1.msra.mxu0 0.0
    %1490 = vmatprep.subr.mxu0 0.0
    %1491 = vmatpush1.msra.mxu0 0.0
    %1492 = vmatprep.subr.mxu0 0.0
    %1493 = vmatpush1.msra.mxu0 0.0
    %1494 = vmatprep.subr.mxu0 0.0
    %1495 = vmatpush1.msra.mxu0 0.0
    %1496 = vmatprep.mubr.f32.mxu0 0.0
    %1497 = vmatmul.mubr.f32.gmra.mrb[0].mxu0 %v1430
    %v1498 = vpop.f32.mrb[0].mxu0
    %v1499 = vadd.f32 0.0, %v1498
    %v1500 = vpop.f32.mrb[0].mxu0
    %v1501 = vadd.f32 0.0, %v1500
    %1502 = vdwg.mxu0
    %v1503 = vadd.f32 %v1425, %v1499
    %v1504 = vadd.f32 %v1426, %v1501
    %v1505 = vmul.f32 %v75, %v1503
    %v1506 = vmul.f32 %v79, %v1504
    %v1507 = vtanh.pop %v1505
    %v1508 = vtanh.pop %v1506
    %v1509 = vmul.f32 %v75, %v1507
    %v1510 = vmul.f32 %v79, %v1508
    %v1511 = vadd.f32 %v1509, %v83
    %v1512 = vadd.f32 %v1510, %v87
    %v1513 = vmul.f32 %v1511, %v1418
    %v1514 = vmul.f32 %v1511, %v1512
    %1516 = vrot.lane.b32.xlu0 %v1514, 64
    %v1517 = vpop.permute.xlu0 %1516
    %v1519 = vadd.f32 %v1513, %v1517
    %v1520 = vtanh.pop %v1519
    %v1521 = vmul.f32 %v1512, %v1520
    %v1522 = vld [vmem:[#allocation2 + $0x20] sm:$0xff]
    %v1523 = vld [vmem:[#allocation2 + $0x28] sm:$0xff]
    %v1524 = vld [vmem:[#allocation2 + $0x50] sm:$0xff]
    %v1525 = vld [vmem:[#allocation2 + $0x58] sm:$0xff]
    %v1526 = vsel %vm96, %v1522, %v1524
    %v1527 = vsel %vm97, %v1523, %v1525
    %1529 = vrot.lane.b32.xlu0 %v1521, 64
    %v1530 = vpop.permute.xlu0 %1529
    %v1531 = vsel %vm294, %v1530, 0
    %1533 = vmatprep.subr.mxu0 %v1310
    %1534 = vmatpush1.msra.mxu0 %v1309
    %1535 = vmatprep.subr.mxu0 %v1312
    %1536 = vmatpush1.msra.mxu0 %v1311
    %1537 = vmatprep.subr.mxu0 %v1314
    %1538 = vmatpush1.msra.mxu0 %v1313
    %1539 = vmatprep.subr.mxu0 %v1316
    %1540 = vmatpush1.msra.mxu0 %v1315
    %1541 = vmatprep.subr.mxu0 %v1318
    %1542 = vmatpush1.msra.mxu0 %v1317
    %1543 = vmatprep.subr.mxu0 %v1320
    %1544 = vmatpush1.msra.mxu0 %v1319
    %1545 = vmatprep.subr.mxu0 %v1322
    %1546 = vmatpush1.msra.mxu0 %v1321
    %1547 = vmatprep.subr.mxu0 %v1324
    %1548 = vmatpush1.msra.mxu0 %v1323
    %1549 = vmatprep.subr.mxu0 0.0
    %1550 = vmatpush1.msra.mxu0 0.0
    %1551 = vmatprep.subr.mxu0 0.0
    %1552 = vmatpush1.msra.mxu0 0.0
    %1553 = vmatprep.subr.mxu0 0.0
    %1554 = vmatpush1.msra.mxu0 0.0
    %1555 = vmatprep.subr.mxu0 0.0
    %1556 = vmatpush1.msra.mxu0 0.0
    %1557 = vmatprep.subr.mxu0 0.0
    %1558 = vmatpush1.msra.mxu0 0.0
    %1559 = vmatprep.subr.mxu0 0.0
    %1560 = vmatpush1.msra.mxu0 0.0
    %1561 = vmatprep.subr.mxu0 0.0
    %1562 = vmatpush1.msra.mxu0 0.0
    %1563 = vmatprep.subr.mxu0 0.0
    %1564 = vmatpush1.msra.mxu0 0.0
    %1565 = vmatprep.subr.mxu0 0.0
    %1566 = vmatpush1.msra.mxu0 0.0
    %1567 = vmatprep.subr.mxu0 0.0
    %1568 = vmatpush1.msra.mxu0 0.0
    %1569 = vmatprep.subr.mxu0 0.0
    %1570 = vmatpush1.msra.mxu0 0.0
    %1571 = vmatprep.subr.mxu0 0.0
    %1572 = vmatpush1.msra.mxu0 0.0
    %1573 = vmatprep.subr.mxu0 0.0
    %1574 = vmatpush1.msra.mxu0 0.0
    %1575 = vmatprep.subr.mxu0 0.0
    %1576 = vmatpush1.msra.mxu0 0.0
    %1577 = vmatprep.subr.mxu0 0.0
    %1578 = vmatpush1.msra.mxu0 0.0
    %1579 = vmatprep.subr.mxu0 0.0
    %1580 = vmatpush1.msra.mxu0 0.0
    %1581 = vmatprep.subr.mxu0 0.0
    %1582 = vmatpush1.msra.mxu0 0.0
    %1583 = vmatprep.subr.mxu0 0.0
    %1584 = vmatpush1.msra.mxu0 0.0
    %1585 = vmatprep.subr.mxu0 0.0
    %1586 = vmatpush1.msra.mxu0 0.0
    %1587 = vmatprep.subr.mxu0 0.0
    %1588 = vmatpush1.msra.mxu0 0.0
    %1589 = vmatprep.subr.mxu0 0.0
    %1590 = vmatpush1.msra.mxu0 0.0
    %1591 = vmatprep.subr.mxu0 0.0
    %1592 = vmatpush1.msra.mxu0 0.0
    %1593 = vmatprep.subr.mxu0 0.0
    %1594 = vmatpush1.msra.mxu0 0.0
    %1595 = vmatprep.subr.mxu0 0.0
    %1596 = vmatpush1.msra.mxu0 0.0
    %1597 = vmatprep.mubr.f32.mxu0 0.0
    %1598 = vmatmul.mubr.f32.gmra.mrb[0].mxu0 %v1531
    %v1599 = vpop.f32.mrb[0].mxu0
    %v1600 = vadd.f32 0.0, %v1599
    %v1601 = vpop.f32.mrb[0].mxu0
    %v1602 = vadd.f32 0.0, %v1601
    %1603 = vdwg.mxu0
    %v1604 = vadd.f32 %v1526, %v1600
    %v1605 = vadd.f32 %v1527, %v1602
    %v1606 = vmul.f32 %v75, %v1604
    %v1607 = vmul.f32 %v79, %v1605
    %v1608 = vtanh.pop %v1606
    %v1609 = vtanh.pop %v1607
    %v1610 = vmul.f32 %v75, %v1608
    %v1611 = vmul.f32 %v79, %v1609
    %v1612 = vadd.f32 %v1610, %v83
    %v1613 = vadd.f32 %v1611, %v87
    %v1614 = vmul.f32 %v1612, %v1519
    %v1615 = vmul.f32 %v1612, %v1613
    %1617 = vrot.lane.b32.xlu0 %v1615, 64
    %v1618 = vpop.permute.xlu0 %1617
    %v1620 = vadd.f32 %v1614, %v1618
    %v1621 = vtanh.pop %v1620
    %v1622 = vmul.f32 %v1613, %v1621
    %v1623 = vld [vmem:[#allocation2 + $0x30] sm:$0xff]
    %v1624 = vld [vmem:[#allocation2 + $0x38] sm:$0xff]
    %v1625 = vld [vmem:[#allocation2 + $0x40] sm:$0xff]
    %v1626 = vld [vmem:[#allocation2 + $0x48] sm:$0xff]
    %v1627 = vsel %vm96, %v1623, %v1625
    %v1628 = vsel %vm97, %v1624, %v1626
    %1630 = vrot.lane.b32.xlu0 %v1622, 64
    %v1631 = vpop.permute.xlu0 %1630
    %v1632 = vsel %vm294, %v1631, 0
    %1634 = vmatprep.subr.mxu0 %v1310
    %1635 = vmatpush1.msra.mxu0 %v1309
    %1636 = vmatprep.subr.mxu0 %v1312
    %1637 = vmatpush1.msra.mxu0 %v1311
    %1638 = vmatprep.subr.mxu0 %v1314
    %1639 = vmatpush1.msra.mxu0 %v1313
    %1640 = vmatprep.subr.mxu0 %v1316
    %1641 = vmatpush1.msra.mxu0 %v1315
    %1642 = vmatprep.subr.mxu0 %v1318
    %1643 = vmatpush1.msra.mxu0 %v1317
    %1644 = vmatprep.subr.mxu0 %v1320
    %1645 = vmatpush1.msra.mxu0 %v1319
    %1646 = vmatprep.subr.mxu0 %v1322
    %1647 = vmatpush1.msra.mxu0 %v1321
    %1648 = vmatprep.subr.mxu0 %v1324
    %1649 = vmatpush1.msra.mxu0 %v1323
    %1650 = vmatprep.subr.mxu0 0.0
    %1651 = vmatpush1.msra.mxu0 0.0
    %1652 = vmatprep.subr.mxu0 0.0
    %1653 = vmatpush1.msra.mxu0 0.0
    %1654 = vmatprep.subr.mxu0 0.0
    %1655 = vmatpush1.msra.mxu0 0.0
    %1656 = vmatprep.subr.mxu0 0.0
    %1657 = vmatpush1.msra.mxu0 0.0
    %1658 = vmatprep.subr.mxu0 0.0
    %1659 = vmatpush1.msra.mxu0 0.0
    %1660 = vmatprep.subr.mxu0 0.0
    %1661 = vmatpush1.msra.mxu0 0.0
    %1662 = vmatprep.subr.mxu0 0.0
    %1663 = vmatpush1.msra.mxu0 0.0
    %1664 = vmatprep.subr.mxu0 0.0
    %1665 = vmatpush1.msra.mxu0 0.0
    %1666 = vmatprep.subr.mxu0 0.0
    %1667 = vmatpush1.msra.mxu0 0.0
    %1668 = vmatprep.subr.mxu0 0.0
    %1669 = vmatpush1.msra.mxu0 0.0
    %1670 = vmatprep.subr.mxu0 0.0
    %1671 = vmatpush1.msra.mxu0 0.0
    %1672 = vmatprep.subr.mxu0 0.0
    %1673 = vmatpush1.msra.mxu0 0.0
    %1674 = vmatprep.subr.mxu0 0.0
    %1675 = vmatpush1.msra.mxu0 0.0
    %1676 = vmatprep.subr.mxu0 0.0
    %1677 = vmatpush1.msra.mxu0 0.0
    %1678 = vmatprep.subr.mxu0 0.0
    %1679 = vmatpush1.msra.mxu0 0.0
    %1680 = vmatprep.subr.mxu0 0.0
    %1681 = vmatpush1.msra.mxu0 0.0
    %1682 = vmatprep.subr.mxu0 0.0
    %1683 = vmatpush1.msra.mxu0 0.0
    %1684 = vmatprep.subr.mxu0 0.0
    %1685 = vmatpush1.msra.mxu0 0.0
    %1686 = vmatprep.subr.mxu0 0.0
    %1687 = vmatpush1.msra.mxu0 0.0
    %1688 = vmatprep.subr.mxu0 0.0
    %1689 = vmatpush1.msra.mxu0 0.0
    %1690 = vmatprep.subr.mxu0 0.0
    %1691 = vmatpush1.msra.mxu0 0.0
    %1692 = vmatprep.subr.mxu0 0.0
    %1693 = vmatpush1.msra.mxu0 0.0
    %1694 = vmatprep.subr.mxu0 0.0
    %1695 = vmatpush1.msra.mxu0 0.0
    %1696 = vmatprep.subr.mxu0 0.0
    %1697 = vmatpush1.msra.mxu0 0.0
    %1698 = vmatprep.mubr.f32.mxu0 0.0
    %1699 = vmatmul.mubr.f32.gmra.mrb[0].mxu0 %v1632
    %v1700 = vpop.f32.mrb[0].mxu0
    %v1701 = vadd.f32 0.0, %v1700
    %v1702 = vpop.f32.mrb[0].mxu0
    %v1703 = vadd.f32 0.0, %v1702
    %1704 = vdwg.mxu0
    %v1705 = vadd.f32 %v1627, %v1701
    %v1706 = vadd.f32 %v1628, %v1703
    %v1707 = vmul.f32 %v75, %v1705
    %v1708 = vmul.f32 %v79, %v1706
    %v1709 = vtanh.pop %v1707
    %v1710 = vtanh.pop %v1708
    %v1711 = vmul.f32 %v75, %v1709
    %v1712 = vmul.f32 %v79, %v1710
    %v1713 = vadd.f32 %v1711, %v83
    %v1714 = vadd.f32 %v1712, %v87
    %v1715 = vmul.f32 %v1713, %v1620
    %v1716 = vmul.f32 %v1713, %v1714
    %1718 = vrot.lane.b32.xlu0 %v1716, 64
    %v1719 = vpop.permute.xlu0 %1718
    %v1721 = vadd.f32 %v1715, %v1719
    %v1722 = vtanh.pop %v1721
    %v1723 = vmul.f32 %v1714, %v1722
    %v1724 = vsel %vm96, %v1625, %v1623
    %v1725 = vsel %vm97, %v1626, %v1624
    %1727 = vrot.lane.b32.xlu0 %v1723, 64
    %v1728 = vpop.permute.xlu0 %1727
    %v1729 = vsel %vm294, %v1728, 0
    %1731 = vmatprep.subr.mxu0 %v1310
    %1732 = vmatpush1.msra.mxu0 %v1309
    %1733 = vmatprep.subr.mxu0 %v1312
    %1734 = vmatpush1.msra.mxu0 %v1311
    %1735 = vmatprep.subr.mxu0 %v1314
    %1736 = vmatpush1.msra.mxu0 %v1313
    %1737 = vmatprep.subr.mxu0 %v1316
    %1738 = vmatpush1.msra.mxu0 %v1315
    %1739 = vmatprep.subr.mxu0 %v1318
    %1740 = vmatpush1.msra.mxu0 %v1317
    %1741 = vmatprep.subr.mxu0 %v1320
    %1742 = vmatpush1.msra.mxu0 %v1319
    %1743 = vmatprep.subr.mxu0 %v1322
    %1744 = vmatpush1.msra.mxu0 %v1321
    %1745 = vmatprep.subr.mxu0 %v1324
    %1746 = vmatpush1.msra.mxu0 %v1323
    %1747 = vmatprep.subr.mxu0 0.0
    %1748 = vmatpush1.msra.mxu0 0.0
    %1749 = vmatprep.subr.mxu0 0.0
    %1750 = vmatpush1.msra.mxu0 0.0
    %1751 = vmatprep.subr.mxu0 0.0
    %1752 = vmatpush1.msra.mxu0 0.0
    %1753 = vmatprep.subr.mxu0 0.0
    %1754 = vmatpush1.msra.mxu0 0.0
    %1755 = vmatprep.subr.mxu0 0.0
    %1756 = vmatpush1.msra.mxu0 0.0
    %1757 = vmatprep.subr.mxu0 0.0
    %1758 = vmatpush1.msra.mxu0 0.0
    %1759 = vmatprep.subr.mxu0 0.0
    %1760 = vmatpush1.msra.mxu0 0.0
    %1761 = vmatprep.subr.mxu0 0.0
    %1762 = vmatpush1.msra.mxu0 0.0
    %1763 = vmatprep.subr.mxu0 0.0
    %1764 = vmatpush1.msra.mxu0 0.0
    %1765 = vmatprep.subr.mxu0 0.0
    %1766 = vmatpush1.msra.mxu0 0.0
    %1767 = vmatprep.subr.mxu0 0.0
    %1768 = vmatpush1.msra.mxu0 0.0
    %1769 = vmatprep.subr.mxu0 0.0
    %1770 = vmatpush1.msra.mxu0 0.0
    %1771 = vmatprep.subr.mxu0 0.0
    %1772 = vmatpush1.msra.mxu0 0.0
    %1773 = vmatprep.subr.mxu0 0.0
    %1774 = vmatpush1.msra.mxu0 0.0
    %1775 = vmatprep.subr.mxu0 0.0
    %1776 = vmatpush1.msra.mxu0 0.0
    %1777 = vmatprep.subr.mxu0 0.0
    %1778 = vmatpush1.msra.mxu0 0.0
    %1779 = vmatprep.subr.mxu0 0.0
    %1780 = vmatpush1.msra.mxu0 0.0
    %1781 = vmatprep.subr.mxu0 0.0
    %1782 = vmatpush1.msra.mxu0 0.0
    %1783 = vmatprep.subr.mxu0 0.0
    %1784 = vmatpush1.msra.mxu0 0.0
    %1785 = vmatprep.subr.mxu0 0.0
    %1786 = vmatpush1.msra.mxu0 0.0
    %1787 = vmatprep.subr.mxu0 0.0
    %1788 = vmatpush1.msra.mxu0 0.0
    %1789 = vmatprep.subr.mxu0 0.0
    %1790 = vmatpush1.msra.mxu0 0.0
    %1791 = vmatprep.subr.mxu0 0.0
    %1792 = vmatpush1.msra.mxu0 0.0
    %1793 = vmatprep.subr.mxu0 0.0
    %1794 = vmatpush1.msra.mxu0 0.0
    %1795 = vmatprep.mubr.f32.mxu0 0.0
    %1796 = vmatmul.mubr.f32.gmra.mrb[0].mxu0 %v1729
    %v1797 = vpop.f32.mrb[0].mxu0
    %v1798 = vadd.f32 0.0, %v1797
    %v1799 = vpop.f32.mrb[0].mxu0
    %v1800 = vadd.f32 0.0, %v1799
    %1801 = vdwg.mxu0
    %v1802 = vadd.f32 %v1724, %v1798
    %v1803 = vadd.f32 %v1725, %v1800
    %v1804 = vmul.f32 %v75, %v1802
    %v1805 = vmul.f32 %v79, %v1803
    %v1806 = vtanh.pop %v1804
    %v1807 = vtanh.pop %v1805
    %v1808 = vmul.f32 %v75, %v1806
    %v1809 = vmul.f32 %v79, %v1807
    %v1810 = vadd.f32 %v1808, %v83
    %v1811 = vadd.f32 %v1809, %v87
    %v1812 = vmul.f32 %v1810, %v1721
    %v1813 = vmul.f32 %v1810, %v1811
    %1815 = vrot.lane.b32.xlu0 %v1813, 64
    %v1816 = vpop.permute.xlu0 %1815
    %v1818 = vadd.f32 %v1812, %v1816
    %v1819 = vtanh.pop %v1818
    %v1820 = vmul.f32 %v1811, %v1819
    %v1821 = vsel %vm96, %v1524, %v1522
    %v1822 = vsel %vm97, %v1525, %v1523
    %1824 = vrot.lane.b32.xlu0 %v1820, 64
    %v1825 = vpop.permute.xlu0 %1824
    %v1826 = vsel %vm294, %v1825, 0
    %1828 = vmatprep.subr.mxu0 %v1310
    %1829 = vmatpush1.msra.mxu0 %v1309
    %1830 = vmatprep.subr.mxu0 %v1312
    %1831 = vmatpush1.msra.mxu0 %v1311
    %1832 = vmatprep.subr.mxu0 %v1314
    %1833 = vmatpush1.msra.mxu0 %v1313
    %1834 = vmatprep.subr.mxu0 %v1316
    %1835 = vmatpush1.msra.mxu0 %v1315
    %1836 = vmatprep.subr.mxu0 %v1318
    %1837 = vmatpush1.msra.mxu0 %v1317
    %1838 = vmatprep.subr.mxu0 %v1320
    %1839 = vmatpush1.msra.mxu0 %v1319
    %1840 = vmatprep.subr.mxu0 %v1322
    %1841 = vmatpush1.msra.mxu0 %v1321
    %1842 = vmatprep.subr.mxu0 %v1324
    %1843 = vmatpush1.msra.mxu0 %v1323
    %1844 = vmatprep.subr.mxu0 0.0
    %1845 = vmatpush1.msra.mxu0 0.0
    %1846 = vmatprep.subr.mxu0 0.0
    %1847 = vmatpush1.msra.mxu0 0.0
    %1848 = vmatprep.subr.mxu0 0.0
    %1849 = vmatpush1.msra.mxu0 0.0
    %1850 = vmatprep.subr.mxu0 0.0
    %1851 = vmatpush1.msra.mxu0 0.0
    %1852 = vmatprep.subr.mxu0 0.0
    %1853 = vmatpush1.msra.mxu0 0.0
    %1854 = vmatprep.subr.mxu0 0.0
    %1855 = vmatpush1.msra.mxu0 0.0
    %1856 = vmatprep.subr.mxu0 0.0
    %1857 = vmatpush1.msra.mxu0 0.0
    %1858 = vmatprep.subr.mxu0 0.0
    %1859 = vmatpush1.msra.mxu0 0.0
    %1860 = vmatprep.subr.mxu0 0.0
    %1861 = vmatpush1.msra.mxu0 0.0
    %1862 = vmatprep.subr.mxu0 0.0
    %1863 = vmatpush1.msra.mxu0 0.0
    %1864 = vmatprep.subr.mxu0 0.0
    %1865 = vmatpush1.msra.mxu0 0.0
    %1866 = vmatprep.subr.mxu0 0.0
    %1867 = vmatpush1.msra.mxu0 0.0
    %1868 = vmatprep.subr.mxu0 0.0
    %1869 = vmatpush1.msra.mxu0 0.0
    %1870 = vmatprep.subr.mxu0 0.0
    %1871 = vmatpush1.msra.mxu0 0.0
    %1872 = vmatprep.subr.mxu0 0.0
    %1873 = vmatpush1.msra.mxu0 0.0
    %1874 = vmatprep.subr.mxu0 0.0
    %1875 = vmatpush1.msra.mxu0 0.0
    %1876 = vmatprep.subr.mxu0 0.0
    %1877 = vmatpush1.msra.mxu0 0.0
    %1878 = vmatprep.subr.mxu0 0.0
    %1879 = vmatpush1.msra.mxu0 0.0
    %1880 = vmatprep.subr.mxu0 0.0
    %1881 = vmatpush1.msra.mxu0 0.0
    %1882 = vmatprep.subr.mxu0 0.0
    %1883 = vmatpush1.msra.mxu0 0.0
    %1884 = vmatprep.subr.mxu0 0.0
    %1885 = vmatpush1.msra.mxu0 0.0
    %1886 = vmatprep.subr.mxu0 0.0
    %1887 = vmatpush1.msra.mxu0 0.0
    %1888 = vmatprep.subr.mxu0 0.0
    %1889 = vmatpush1.msra.mxu0 0.0
    %1890 = vmatprep.subr.mxu0 0.0
    %1891 = vmatpush1.msra.mxu0 0.0
    %1892 = vmatprep.mubr.f32.mxu0 0.0
    %1893 = vmatmul.mubr.f32.gmra.mrb[0].mxu0 %v1826
    %v1894 = vpop.f32.mrb[0].mxu0
    %v1895 = vadd.f32 0.0, %v1894
    %v1896 = vpop.f32.mrb[0].mxu0
    %v1897 = vadd.f32 0.0, %v1896
    %1898 = vdwg.mxu0
    %v1899 = vadd.f32 %v1821, %v1895
    %v1900 = vadd.f32 %v1822, %v1897
    %v1901 = vmul.f32 %v75, %v1899
    %v1902 = vmul.f32 %v79, %v1900
    %v1903 = vtanh.pop %v1901
    %v1904 = vtanh.pop %v1902
    %v1905 = vmul.f32 %v75, %v1903
    %v1906 = vmul.f32 %v79, %v1904
    %v1907 = vadd.f32 %v1905, %v83
    %v1908 = vadd.f32 %v1906, %v87
    %v1909 = vmul.f32 %v1907, %v1818
    %v1910 = vmul.f32 %v1907, %v1908
    %1912 = vrot.lane.b32.xlu0 %v1910, 64
    %v1913 = vpop.permute.xlu0 %1912
    %v1915 = vadd.f32 %v1909, %v1913
    %v1916 = vtanh.pop %v1915
    %v1917 = vmul.f32 %v1908, %v1916
    %v1918 = vsel %vm96, %v1423, %v1421
    %v1919 = vsel %vm97, %v1424, %v1422
    %1921 = vrot.lane.b32.xlu0 %v1917, 64
    %v1922 = vpop.permute.xlu0 %1921
    %v1923 = vsel %vm294, %v1922, 0
    %1925 = vmatprep.subr.mxu0 %v1310
    %1926 = vmatpush1.msra.mxu0 %v1309
    %1927 = vmatprep.subr.mxu0 %v1312
    %1928 = vmatpush1.msra.mxu0 %v1311
    %1929 = vmatprep.subr.mxu0 %v1314
    %1930 = vmatpush1.msra.mxu0 %v1313
    %1931 = vmatprep.subr.mxu0 %v1316
    %1932 = vmatpush1.msra.mxu0 %v1315
    %1933 = vmatprep.subr.mxu0 %v1318
    %1934 = vmatpush1.msra.mxu0 %v1317
    %1935 = vmatprep.subr.mxu0 %v1320
    %1936 = vmatpush1.msra.mxu0 %v1319
    %1937 = vmatprep.subr.mxu0 %v1322
    %1938 = vmatpush1.msra.mxu0 %v1321
    %1939 = vmatprep.subr.mxu0 %v1324
    %1940 = vmatpush1.msra.mxu0 %v1323
    %1941 = vmatprep.subr.mxu0 0.0
    %1942 = vmatpush1.msra.mxu0 0.0
    %1943 = vmatprep.subr.mxu0 0.0
    %1944 = vmatpush1.msra.mxu0 0.0
    %1945 = vmatprep.subr.mxu0 0.0
    %1946 = vmatpush1.msra.mxu0 0.0
    %1947 = vmatprep.subr.mxu0 0.0
    %1948 = vmatpush1.msra.mxu0 0.0
    %1949 = vmatprep.subr.mxu0 0.0
    %1950 = vmatpush1.msra.mxu0 0.0
    %1951 = vmatprep.subr.mxu0 0.0
    %1952 = vmatpush1.msra.mxu0 0.0
    %1953 = vmatprep.subr.mxu0 0.0
    %1954 = vmatpush1.msra.mxu0 0.0
    %1955 = vmatprep.subr.mxu0 0.0
    %1956 = vmatpush1.msra.mxu0 0.0
    %1957 = vmatprep.subr.mxu0 0.0
    %1958 = vmatpush1.msra.mxu0 0.0
    %1959 = vmatprep.subr.mxu0 0.0
    %1960 = vmatpush1.msra.mxu0 0.0
    %1961 = vmatprep.subr.mxu0 0.0
    %1962 = vmatpush1.msra.mxu0 0.0
    %1963 = vmatprep.subr.mxu0 0.0
    %1964 = vmatpush1.msra.mxu0 0.0
    %1965 = vmatprep.subr.mxu0 0.0
    %1966 = vmatpush1.msra.mxu0 0.0
    %1967 = vmatprep.subr.mxu0 0.0
    %1968 = vmatpush1.msra.mxu0 0.0
    %1969 = vmatprep.subr.mxu0 0.0
    %1970 = vmatpush1.msra.mxu0 0.0
    %1971 = vmatprep.subr.mxu0 0.0
    %1972 = vmatpush1.msra.mxu0 0.0
    %1973 = vmatprep.subr.mxu0 0.0
    %1974 = vmatpush1.msra.mxu0 0.0
    %1975 = vmatprep.subr.mxu0 0.0
    %1976 = vmatpush1.msra.mxu0 0.0
    %1977 = vmatprep.subr.mxu0 0.0
    %1978 = vmatpush1.msra.mxu0 0.0
    %1979 = vmatprep.subr.mxu0 0.0
    %1980 = vmatpush1.msra.mxu0 0.0
    %1981 = vmatprep.subr.mxu0 0.0
    %1982 = vmatpush1.msra.mxu0 0.0
    %1983 = vmatprep.subr.mxu0 0.0
    %1984 = vmatpush1.msra.mxu0 0.0
    %1985 = vmatprep.subr.mxu0 0.0
    %1986 = vmatpush1.msra.mxu0 0.0
    %1987 = vmatprep.subr.mxu0 0.0
    %1988 = vmatpush1.msra.mxu0 0.0
    %1989 = vmatprep.mubr.f32.mxu0 0.0
    %1990 = vmatmul.mubr.f32.gmra.mrb[0].mxu0 %v1923
    %v1991 = vpop.f32.mrb[0].mxu0
    %v1992 = vadd.f32 0.0, %v1991
    %v1993 = vpop.f32.mrb[0].mxu0
    %v1994 = vadd.f32 0.0, %v1993
    %1995 = vdwg.mxu0
    %v1996 = vadd.f32 %v1918, %v1992
    %v1997 = vadd.f32 %v1919, %v1994
    %v1998 = vmul.f32 %v75, %v1996
    %v1999 = vmul.f32 %v79, %v1997
    %v2000 = vtanh.pop %v1998
    %v2001 = vtanh.pop %v1999
    %v2002 = vmul.f32 %v75, %v2000
    %v2003 = vmul.f32 %v79, %v2001
    %v2004 = vadd.f32 %v2002, %v83
    %v2005 = vadd.f32 %v2003, %v87
    %v2006 = vmul.f32 %v2004, %v1915
    %v2007 = vmul.f32 %v2004, %v2005
    %2009 = vrot.lane.b32.xlu0 %v2007, 64
    %v2010 = vpop.permute.xlu0 %2009
    %v2012 = vadd.f32 %v2006, %v2010
    %v2013 = vtanh.pop %v2012
    %v2014 = vmul.f32 %v2005, %v2013
    %v2015 = vsel %vm96, %v1327, %v1325
    %v2016 = vsel %vm97, %v1328, %v1326
    %2018 = vrot.lane.b32.xlu0 %v2014, 64
    %v2019 = vpop.permute.xlu0 %2018
    %v2020 = vsel %vm294, %v2019, 0
    %2022 = vmatprep.subr.mxu0 %v1310
    %2023 = vmatpush1.msra.mxu0 %v1309
    %2024 = vmatprep.subr.mxu0 %v1312
    %2025 = vmatpush1.msra.mxu0 %v1311
    %2026 = vmatprep.subr.mxu0 %v1314
    %2027 = vmatpush1.msra.mxu0 %v1313
    %2028 = vmatprep.subr.mxu0 %v1316
    %2029 = vmatpush1.msra.mxu0 %v1315
    %2030 = vmatprep.subr.mxu0 %v1318
    %2031 = vmatpush1.msra.mxu0 %v1317
    %2032 = vmatprep.subr.mxu0 %v1320
    %2033 = vmatpush1.msra.mxu0 %v1319
    %2034 = vmatprep.subr.mxu0 %v1322
    %2035 = vmatpush1.msra.mxu0 %v1321
    %2036 = vmatprep.subr.mxu0 %v1324
    %2037 = vmatpush1.msra.mxu0 %v1323
    %2038 = vmatprep.subr.mxu0 0.0
    %2039 = vmatpush1.msra.mxu0 0.0
    %2040 = vmatprep.subr.mxu0 0.0
    %2041 = vmatpush1.msra.mxu0 0.0
    %2042 = vmatprep.subr.mxu0 0.0
    %2043 = vmatpush1.msra.mxu0 0.0
    %2044 = vmatprep.subr.mxu0 0.0
    %2045 = vmatpush1.msra.mxu0 0.0
    %2046 = vmatprep.subr.mxu0 0.0
    %2047 = vmatpush1.msra.mxu0 0.0
    %2048 = vmatprep.subr.mxu0 0.0
    %2049 = vmatpush1.msra.mxu0 0.0
    %2050 = vmatprep.subr.mxu0 0.0
    %2051 = vmatpush1.msra.mxu0 0.0
    %2052 = vmatprep.subr.mxu0 0.0
    %2053 = vmatpush1.msra.mxu0 0.0
    %2054 = vmatprep.subr.mxu0 0.0
    %2055 = vmatpush1.msra.mxu0 0.0
    %2056 = vmatprep.subr.mxu0 0.0
    %2057 = vmatpush1.msra.mxu0 0.0
    %2058 = vmatprep.subr.mxu0 0.0
    %2059 = vmatpush1.msra.mxu0 0.0
    %2060 = vmatprep.subr.mxu0 0.0
    %2061 = vmatpush1.msra.mxu0 0.0
    %2062 = vmatprep.subr.mxu0 0.0
    %2063 = vmatpush1.msra.mxu0 0.0
    %2064 = vmatprep.subr.mxu0 0.0
    %2065 = vmatpush1.msra.mxu0 0.0
    %2066 = vmatprep.subr.mxu0 0.0
    %2067 = vmatpush1.msra.mxu0 0.0
    %2068 = vmatprep.subr.mxu0 0.0
    %2069 = vmatpush1.msra.mxu0 0.0
    %2070 = vmatprep.subr.mxu0 0.0
    %2071 = vmatpush1.msra.mxu0 0.0
    %2072 = vmatprep.subr.mxu0 0.0
    %2073 = vmatpush1.msra.mxu0 0.0
    %2074 = vmatprep.subr.mxu0 0.0
    %2075 = vmatpush1.msra.mxu0 0.0
    %2076 = vmatprep.subr.mxu0 0.0
    %2077 = vmatpush1.msra.mxu0 0.0
    %2078 = vmatprep.subr.mxu0 0.0
    %2079 = vmatpush1.msra.mxu0 0.0
    %2080 = vmatprep.subr.mxu0 0.0
    %2081 = vmatpush1.msra.mxu0 0.0
    %2082 = vmatprep.subr.mxu0 0.0
    %2083 = vmatpush1.msra.mxu0 0.0
    %2084 = vmatprep.subr.mxu0 0.0
    %2085 = vmatpush1.msra.mxu0 0.0
    %2086 = vmatprep.mubr.f32.mxu0 0.0
    %2087 = vmatmul.mubr.f32.gmra.mrb[0].mxu0 %v2020
    %v2088 = vpop.f32.mrb[0].mxu0
    %v2089 = vadd.f32 0.0, %v2088
    %v2090 = vpop.f32.mrb[0].mxu0
    %v2091 = vadd.f32 0.0, %v2090
    %2092 = vdwg.mxu0
    %v2093 = vadd.f32 %v2015, %v2089
    %v2094 = vadd.f32 %v2016, %v2091
    %v2095 = vmul.f32 %v75, %v2093
    %v2096 = vmul.f32 %v79, %v2094
    %v2097 = vtanh.pop %v2095
    %v2098 = vtanh.pop %v2096
    %v2099 = vmul.f32 %v75, %v2097
    %v2100 = vmul.f32 %v79, %v2098
    %v2101 = vadd.f32 %v2099, %v83
    %v2102 = vadd.f32 %v2100, %v87
    %v2103 = vmul.f32 %v2101, %v2012
    %v2104 = vmul.f32 %v2101, %v2102
    %2106 = vrot.lane.b32.xlu0 %v2104, 64
    %v2107 = vpop.permute.xlu0 %2106
    %v2109 = vadd.f32 %v2103, %v2107
    %v2110 = vtanh.pop %v2109
    %v2111 = vmul.f32 %v2102, %v2110
    %2113 = vrot.lane.b32.xlu0 %v2111, 64
    %v2114 = vpop.permute.xlu0 %2113
    %v2117 = vsel %vm392, %v2114, %v1429
    %v2118 = vld [vmem:[#allocation8] sm:$0xff]
    %v2119 = vld [vmem:[#allocation8 + $0x8] sm:$0xff]
    %v2120 = vld [vmem:[#allocation8 + $0x10] sm:$0xff]
    %v2121 = vld [vmem:[#allocation8 + $0x18] sm:$0xff]
    %v2122 = vld [vmem:[#allocation8 + $0x20] sm:$0xff]
    %v2123 = vld [vmem:[#allocation8 + $0x28] sm:$0xff]
    %v2124 = vld [vmem:[#allocation8 + $0x30] sm:$0xff]
    %v2125 = vld [vmem:[#allocation8 + $0x38] sm:$0xff]
    %v2126 = vlaneseq
    %v2127 = vshrl.u32 %v2126, 7
    %v2128 = vsub.s32 5, %v2127
    %v2129 = vrot.slane %v70, %v2128
    %v2131 = vsel %vm294, %v2117, 0
    %2133 = vmatprep.subr.mxu0 0.0
    %2134 = vmatpush1.msra.mxu0 %v2118
    %2135 = vmatprep.subr.mxu0 0.0
    %2136 = vmatpush1.msra.mxu0 %v2119
    %2137 = vmatprep.subr.mxu0 0.0
    %2138 = vmatpush1.msra.mxu0 %v2120
    %2139 = vmatprep.subr.mxu0 0.0
    %2140 = vmatpush1.msra.mxu0 %v2121
    %2141 = vmatprep.subr.mxu0 0.0
    %2142 = vmatpush1.msra.mxu0 %v2122
    %2143 = vmatprep.subr.mxu0 0.0
    %2144 = vmatpush1.msra.mxu0 %v2123
    %2145 = vmatprep.subr.mxu0 0.0
    %2146 = vmatpush1.msra.mxu0 %v2124
    %2147 = vmatprep.subr.mxu0 0.0
    %2148 = vmatpush1.msra.mxu0 %v2125
    %2149 = vmatprep.subr.mxu0 0.0
    %2150 = vmatpush1.msra.mxu0 0.0
    %2151 = vmatprep.subr.mxu0 0.0
    %2152 = vmatpush1.msra.mxu0 0.0
    %2153 = vmatprep.subr.mxu0 0.0
    %2154 = vmatpush1.msra.mxu0 0.0
    %2155 = vmatprep.subr.mxu0 0.0
    %2156 = vmatpush1.msra.mxu0 0.0
    %2157 = vmatprep.subr.mxu0 0.0
    %2158 = vmatpush1.msra.mxu0 0.0
    %2159 = vmatprep.subr.mxu0 0.0
    %2160 = vmatpush1.msra.mxu0 0.0
    %2161 = vmatprep.subr.mxu0 0.0
    %2162 = vmatpush1.msra.mxu0 0.0
    %2163 = vmatprep.subr.mxu0 0.0
    %2164 = vmatpush1.msra.mxu0 0.0
    %2165 = vmatprep.subr.mxu0 0.0
    %2166 = vmatpush1.msra.mxu0 0.0
    %2167 = vmatprep.subr.mxu0 0.0
    %2168 = vmatpush1.msra.mxu0 0.0
    %2169 = vmatprep.subr.mxu0 0.0
    %2170 = vmatpush1.msra.mxu0 0.0
    %2171 = vmatprep.subr.mxu0 0.0
    %2172 = vmatpush1.msra.mxu0 0.0
    %2173 = vmatprep.subr.mxu0 0.0
    %2174 = vmatpush1.msra.mxu0 0.0
    %2175 = vmatprep.subr.mxu0 0.0
    %2176 = vmatpush1.msra.mxu0 0.0
    %2177 = vmatprep.subr.mxu0 0.0
    %2178 = vmatpush1.msra.mxu0 0.0
    %2179 = vmatprep.subr.mxu0 0.0
    %2180 = vmatpush1.msra.mxu0 0.0
    %2181 = vmatprep.subr.mxu0 0.0
    %2182 = vmatpush1.msra.mxu0 0.0
    %2183 = vmatprep.subr.mxu0 0.0
    %2184 = vmatpush1.msra.mxu0 0.0
    %2185 = vmatprep.subr.mxu0 0.0
    %2186 = vmatpush1.msra.mxu0 0.0
    %2187 = vmatprep.subr.mxu0 0.0
    %2188 = vmatpush1.msra.mxu0 0.0
    %2189 = vmatprep.subr.mxu0 0.0
    %2190 = vmatpush1.msra.mxu0 0.0
    %2191 = vmatprep.subr.mxu0 0.0
    %2192 = vmatpush1.msra.mxu0 0.0
    %2193 = vmatprep.subr.mxu0 0.0
    %2194 = vmatpush1.msra.mxu0 0.0
    %2195 = vmatprep.subr.mxu0 0.0
    %2196 = vmatpush1.msra.mxu0 0.0
    %2197 = vmatprep.mubr.f32.mxu0 0.0
    %2198 = vmatmul.mubr.f32.gmra.mrb[0].mxu0 %v2131
    %v2199 = vpop.f32.mrb[0].mxu0
    %v2200 = vadd.f32 %v2129, %v2199
    %v2201 = vpop.f32.mrb[0].mxu0
    %2202 = vdwg.mxu0
    %v2203 = vmax.f32 %v2200, 0.0
    %v2204 = vld [vmem:[%s7] sm:$0xff]
    %v2205 = vld [vmem:[%s7 + $0x8] sm:$0xff]
    %v2206 = vld [vmem:[%s7 + $0x10] sm:$0xff]
    %v2207 = vld [vmem:[%s7 + $0x18] sm:$0xff]
    %v2208 = vld [vmem:[%s7 + $0x20] sm:$0xff]
    %v2209 = vld [vmem:[%s7 + $0x28] sm:$0xff]
    %v2210 = vld [vmem:[%s7 + $0x30] sm:$0xff]
    %v2211 = vld [vmem:[%s7 + $0x38] sm:$0xff]
    %v2212 = vld [vmem:[%s7 + $0x40] sm:$0xff]
    %v2213 = vld [vmem:[%s7 + $0x48] sm:$0xff]
    %v2214 = vld [vmem:[%s7 + $0x50] sm:$0xff]
    %v2215 = vld [vmem:[%s7 + $0x58] sm:$0xff]
    %v2216 = vld [vmem:[%s7 + $0x60] sm:$0xff]
    %v2217 = vld [vmem:[%s7 + $0x68] sm:$0xff]
    %v2218 = vld [vmem:[%s7 + $0x70] sm:$0xff]
    %v2219 = vld [vmem:[%s7 + $0x78] sm:$0xff]
    %v2220 = vlaneseq
    %v2221 = vshrl.u32 %v2220, 7
    %v2222 = vsub.s32 5, %v2221
    %v2223 = vrot.slane %v71, %v2222
    %2224 = vmatprep.subr.mxu0 0.0
    %2225 = vmatpush1.msra.mxu0 %v2204
    %2226 = vmatprep.subr.mxu0 0.0
    %2227 = vmatpush1.msra.mxu0 %v2205
    %2228 = vmatprep.subr.mxu0 0.0
    %2229 = vmatpush1.msra.mxu0 %v2206
    %2230 = vmatprep.subr.mxu0 0.0
    %2231 = vmatpush1.msra.mxu0 %v2207
    %2232 = vmatprep.subr.mxu0 0.0
    %2233 = vmatpush1.msra.mxu0 %v2208
    %2234 = vmatprep.subr.mxu0 0.0
    %2235 = vmatpush1.msra.mxu0 %v2209
    %2236 = vmatprep.subr.mxu0 0.0
    %2237 = vmatpush1.msra.mxu0 %v2210
    %2238 = vmatprep.subr.mxu0 0.0
    %2239 = vmatpush1.msra.mxu0 %v2211
    %2240 = vmatprep.subr.mxu0 0.0
    %2241 = vmatpush1.msra.mxu0 %v2212
    %2242 = vmatprep.subr.mxu0 0.0
    %2243 = vmatpush1.msra.mxu0 %v2213
    %2244 = vmatprep.subr.mxu0 0.0
    %2245 = vmatpush1.msra.mxu0 %v2214
    %2246 = vmatprep.subr.mxu0 0.0
    %2247 = vmatpush1.msra.mxu0 %v2215
    %2248 = vmatprep.subr.mxu0 0.0
    %2249 = vmatpush1.msra.mxu0 %v2216
    %2250 = vmatprep.subr.mxu0 0.0
    %2251 = vmatpush1.msra.mxu0 %v2217
    %2252 = vmatprep.subr.mxu0 0.0
    %2253 = vmatpush1.msra.mxu0 %v2218
    %2254 = vmatprep.subr.mxu0 0.0
    %2255 = vmatpush1.msra.mxu0 %v2219
    %2256 = vmatprep.subr.mxu0 0.0
    %2257 = vmatpush1.msra.mxu0 0.0
    %2258 = vmatprep.subr.mxu0 0.0
    %2259 = vmatpush1.msra.mxu0 0.0
    %2260 = vmatprep.subr.mxu0 0.0
    %2261 = vmatpush1.msra.mxu0 0.0
    %2262 = vmatprep.subr.mxu0 0.0
    %2263 = vmatpush1.msra.mxu0 0.0
    %2264 = vmatprep.subr.mxu0 0.0
    %2265 = vmatpush1.msra.mxu0 0.0
    %2266 = vmatprep.subr.mxu0 0.0
    %2267 = vmatpush1.msra.mxu0 0.0
    %2268 = vmatprep.subr.mxu0 0.0
    %2269 = vmatpush1.msra.mxu0 0.0
    %2270 = vmatprep.subr.mxu0 0.0
    %2271 = vmatpush1.msra.mxu0 0.0
    %2272 = vmatprep.subr.mxu0 0.0
    %2273 = vmatpush1.msra.mxu0 0.0
    %2274 = vmatprep.subr.mxu0 0.0
    %2275 = vmatpush1.msra.mxu0 0.0
    %2276 = vmatprep.subr.mxu0 0.0
    %2277 = vmatpush1.msra.mxu0 0.0
    %2278 = vmatprep.subr.mxu0 0.0
    %2279 = vmatpush1.msra.mxu0 0.0
    %2280 = vmatprep.subr.mxu0 0.0
    %2281 = vmatpush1.msra.mxu0 0.0
    %2282 = vmatprep.subr.mxu0 0.0
    %2283 = vmatpush1.msra.mxu0 0.0
    %2284 = vmatprep.subr.mxu0 0.0
    %2285 = vmatpush1.msra.mxu0 0.0
    %2286 = vmatprep.subr.mxu0 0.0
    %2287 = vmatpush1.msra.mxu0 0.0
    %2288 = vmatprep.mubr.f32.mxu0 0.0
    %2289 = vmatmul.mubr.f32.gmra.mrb[0].mxu0 %v2203
    %v2290 = vpop.f32.mrb[0].mxu0
    %v2291 = vadd.f32 %v2223, %v2290
    %v2292 = vpop.f32.mrb[0].mxu0
    %2293 = vdwg.mxu0
    %v2294 = vmax.f32 %v2291, 0.0
    %2296 = vrot.lane.b32.xlu0 %v2223, 64
    %v2297 = vpop.permute.xlu0 %2296
    %v2299 = vmul.f32 %v2294, %v2297
    %v2300 = vsel %vm294, %v2299, 0.0
    %2301 = vadd.xlane.f32.xlu0 %v2300
    %v2302 = vpop.xlane.xlu0 %2301
    %v2303 = vlaneseq
    %v2304 = vshrl.u32 %v2303, 7
    %v2305 = vsub.s32 6, %v2304
    %v2306 = vrot.slane %v70, %v2305
    %v2307 = vadd.f32 %v2302, %v2306
    %v2308 = vmul.f32 %v2307, 0.5
    %v2309 = vtanh.pop %v2308
    %v2310 = vadd.f32 %v2309, 1.0
    %v2311 = vmul.f32 %v2310, 0.5
    %vm2312 = vcmask 7168
    %2313 = vst.msk [vmem:[%s8] sm:$0xff] %vm2312, %v2311
    // Predicated region
    $region46: #{tpu_custom_call.1} parent=1 // pred_check
      _
    $region47: #{tpu_custom_call.1} parent=1 // pred_check_branch
      %2315 = sbr.rel (0) target = $region49
    $region48: #{tpu_custom_call.1} parent=1 // pred_region
      _
    $region49: #{tpu_custom_call.1} parent=1 // pred_fallthru
      _
    // Predicated region
    $region50: #{tpu_custom_call.1} parent=1 // pred_check
      _
    $region51: #{tpu_custom_call.1} parent=1 // pred_check_branch
      %2317 = sbr.rel (0) target = $region53
    $region52: #{tpu_custom_call.1} parent=1 // pred_region
      _
    $region53: #{tpu_custom_call.1} parent=1 // pred_fallthru
      _
    %2318 = vsyncpa [#allocation5], 1
    %2319 = vsyncpa [#allocation7], 1

</llo_original>
